<compile_context>
chip_gen: v7x
topology: tpu7x:2x2x1
jax: 0.10.0
libtpu: 0.0.40
codegen_flags: <defaults>
</compile_context>

<pallas_src>
import functools

import jax
import jax.numpy as jnp
import numpy as np
from jax.experimental import pallas as pl
from jax.experimental.pallas import tpu as pltpu

D_IN = 2
N_FREQS = 6
D_PE = D_IN + 2 * D_IN * N_FREQS       # 26
D_HIDDEN = 128
D_OUT = 1
SCALE = 1.0                            # DistanceModel(scale=1)


def _round_up(x, m):
    return ((x + m - 1) // m) * m


def _cdiv(a, b):
    return (a + b - 1) // b


def _make_pe_tables():
    """(26, 2) frequency matrix + (26, 1) phase column so that, feature-major,
        z[k, :]  = freq[k,0]*x0 + freq[k,1]*x1 + phase[k]
        feat[k]  = z[k]        for k < 2    (identity / include_input rows)
        feat[k]  = sin(z[k])   for k >= 2   (sin rows; cos via sin(t + pi/2))
    reproduces the reference concat order [x, sin(2^i x), cos(2^i x)]_{i=0..5}."""
    freq = np.zeros((D_PE, D_IN), np.float32)
    phase = np.zeros((D_PE, 1), np.float32)
    for j in range(D_IN):                      # identity rows
        freq[j, j] = 1.0
    r = D_IN
    for i in range(N_FREQS):
        f = float(2 ** i)
        for j in range(D_IN):                  # sin(f * x_j)
            freq[r, j] = f
            r += 1
        for j in range(D_IN):                  # cos(f * x_j) = sin(f * x_j + pi/2)
            freq[r, j] = f
            phase[r, 0] = np.pi / 2.0
            r += 1
    return freq, phase


_FREQ_NP, _PHASE_NP = _make_pe_tables()


def _softplus_beta100(h, act_dt):
    """torch.nn.Softplus(beta=100) with its threshold=20 bypass.  Math runs in
    `act_dt` (bf16 on the fast path -> EUP bf16 exp/log on v6e/v7x) and the
    result stays in `act_dt`, which is what the next matmul consumes anyway."""
    x = h.astype(act_dt)
    bx = x * 100.0
    soft = jnp.log(1.0 + jnp.exp(jnp.minimum(bx, 20.0))) * 0.01
    return jnp.where(bx > 20.0, x, soft)


def _positional_encoding(pts):
    """Reference NeRF embedder: [x, sin(2^i x), cos(2^i x)]_{i=0..5}."""
    feats = [pts]
    for i in range(N_FREQS):
        f = float(2 ** i)
        feats.append(jnp.sin(pts * f))
        feats.append(jnp.cos(pts * f))
    return jnp.concatenate(feats, axis=-1)     # (..., 26)


# ----------------------------------------------------------------------------
# Kernel (feature-major: every array is (features, tile) with batch on lanes)
# ----------------------------------------------------------------------------
def _distance_mlp_kernel(pts_ref, freq_ref, phase_ref,
                         w0_ref, b0_ref, w1_ref, b1_ref, w2_ref, b2_ref,
                         out_ref, *, act_dtype):
    x = pts_ref[...].astype(jnp.float32)                  # (2, tile), lane-dense
    if SCALE != 1.0:
        x = x * SCALE

    # Fused positional encoding: one lane-dense sin over (26, tile), identity
    # rows selected by a row mask.  Kept in f32 (argument up to ~34 rad).
    freq = freq_ref[...]                                  # (26, 2)
    z = phase_ref[...] + freq[:, 0:1] * x[0:1, :]
    for j in range(1, D_IN):
        z = z + freq[:, j:j + 1] * x[j:j + 1, :]
    row = jax.lax.broadcasted_iota(jnp.int32, (D_PE, 1), 0)
    feat = jnp.where(row < D_IN, z, jnp.sin(z))           # (26, tile)

    mm_dt = w1_ref.dtype
    prec = (jax.lax.Precision.HIGHEST if mm_dt == jnp.float32
            else jax.lax.Precision.DEFAULT)

    # Layer 0: single MXU matmul (128, 26) @ (26, tile), f32 accumulation.
    h = jnp.dot(w0_ref[...], feat.astype(mm_dt),
                preferred_element_type=jnp.float32, precision=prec) + b0_ref[...]
    a = _softplus_beta100(h, act_dtype)                   # (128, tile)

    # Layer 1: (128, 128) @ (128, tile).
    h = jnp.dot(w1_ref[...], a.astype(mm_dt),
                preferred_element_type=jnp.float32, precision=prec) + b1_ref[...]
    a = _softplus_beta100(h, act_dtype)

    # Layer 2: (1, 128) @ (128, tile) -> lane-dense (1, tile) output block.
    o = jnp.dot(w2_ref[...], a.astype(mm_dt),
                preferred_element_type=jnp.float32, precision=prec) + b2_ref[...]
    if SCALE != 1.0:
        o = o / SCALE      # d_out == 1: "first channel / scale" is the whole output
    out_ref[...] = o.astype(out_ref.dtype)


# ----------------------------------------------------------------------------
# Wrapper
# ----------------------------------------------------------------------------
def _choose_tile(n, requested, min_steps=2):
    """Lane-dense tile: multiple of 128, clamped to the padded problem size,
    shrunk so the grid has >= min_steps "parallel" steps whenever possible
    (v7x has 2 TensorCores; both only get work with >= 2 grid steps)."""
    tile = max(128, min(_round_up(int(requested), 128), _round_up(n, 128)))
    if _cdiv(n, tile) < min_steps:
        tile = max(128, _round_up(_cdiv(n, min_steps), 128))
    return tile


@functools.partial(jax.jit, static_argnames=("tile_n", "use_bf16", "bf16_act"))
def distance_model_forward(points, params, tile_n=4096, use_bf16=True, bf16_act=None):
    """points: (N, 2) f32.  params: ((w0,b0),(w1,b1),(w2,b2)), w stored (d_in, d_out).

    use_bf16: bf16 matmul operands (f32 accumulation).
    bf16_act: run the softplus exp/log in bf16 (EUP bf16 path on v6e/v7x;
              set False on v5e, which has no bf16 EUP).  Defaults to use_bf16.
    """
    if bf16_act is None:
        bf16_act = use_bf16
    n = points.shape[0]
    (w0, b0), (w1, b1), (w2, b2) = params

    tile = _choose_tile(n, tile_n)
    n_pad = _round_up(n, tile)

    # Feature-major relayout: (N, 2) -> (2, n_pad).  One small copy (8 B/point)
    # against a compute-bound kernel; padded columns are zeros (finite results,
    # sliced off below).
    pts_t = points.T
    if n_pad != n:
        pts_t = jnp.pad(pts_t, ((0, 0), (0, n_pad - n)))

    mm_dtype = jnp.bfloat16 if use_bf16 else jnp.float32
    act_dtype = jnp.bfloat16 if bf16_act else jnp.float32

    w0_fm = w0.T.astype(mm_dtype)            # (128, 26)
    w1_fm = w1.T.astype(mm_dtype)            # (128, 128)
    w2_fm = w2.T.astype(mm_dtype)            # (1, 128)
    b0_fm = b0.reshape(-1, 1)                # (128, 1) f32
    b1_fm = b1.reshape(-1, 1)                # (128, 1) f32
    b2_fm = b2.reshape(-1, 1)                # (1, 1)   f32

    freq = jnp.asarray(_FREQ_NP)             # (26, 2)
    phase = jnp.asarray(_PHASE_NP)           # (26, 1)

    const = lambda i: (0, 0)                 # VMEM-resident weights / tables

    # ~8 KiB of VMEM temporaries per lane-column (f32/bf16 hidden tiles + I/O
    # double buffers) plus fixed headroom; ~40 MiB at tile 4096, well under
    # v7x's 64 MiB physical VMEM and v5e/v6e's 128 MiB.
    vmem_limit = min(100 * 1024 * 1024, 8 * 1024 * 1024 + 8 * 1024 * tile)

    out_fm = pl.pallas_call(
        functools.partial(_distance_mlp_kernel, act_dtype=act_dtype),
        out_shape=jax.ShapeDtypeStruct((D_OUT, n_pad), jnp.float32),
        grid_spec=pltpu.PrefetchScalarGridSpec(
            num_scalar_prefetch=0,
            grid=(n_pad // tile,),
            in_specs=[
                pl.BlockSpec((D_IN, tile), lambda i: (0, i)),       # points.T tile
                pl.BlockSpec((D_PE, D_IN), const),                  # freq table
                pl.BlockSpec((D_PE, 1), const),                     # phase column
                pl.BlockSpec((D_HIDDEN, D_PE), const),              # w0 (128, 26)
                pl.BlockSpec((D_HIDDEN, 1), const),                 # b0
                pl.BlockSpec((D_HIDDEN, D_HIDDEN), const),          # w1 (128, 128)
                pl.BlockSpec((D_HIDDEN, 1), const),                 # b1
                pl.BlockSpec((D_OUT, D_HIDDEN), const),             # w2 (1, 128)
                pl.BlockSpec((D_OUT, 1), const),                    # b2
            ],
            out_specs=pl.BlockSpec((D_OUT, tile), lambda i: (0, i)),
        ),
        compiler_params=pltpu.CompilerParams(
            dimension_semantics=("parallel",),
            vmem_limit_bytes=vmem_limit,
        ),
    )(pts_t, freq, phase, w0_fm, b0_fm, w1_fm, b1_fm, w2_fm, b2_fm)

    return out_fm[:, :n].T                   # (n, d_out)


# ----------------------------------------------------------------------------
# Reference + init (test harness)
# ----------------------------------------------------------------------------
def reference_forward(points, params):
    """Pure-JAX reference mirroring DistanceModel.forward (full f32)."""
    x = points * SCALE if SCALE != 1.0 else points
    x = _positional_encoding(x)
    (w0, b0), (w1, b1), (w2, b2) = params
    hp = jax.lax.Precision.HIGHEST
    h = _softplus_beta100(jnp.dot(x, w0, precision=hp) + b0, jnp.float32)
    h = _softplus_beta100(jnp.dot(h, w1, precision=hp) + b1, jnp.float32)
    o = jnp.dot(h, w2, precision=hp) + b2
    first = o[:, :1] / SCALE if SCALE != 1.0 else o[:, :1]
    return jnp.concatenate([first, o[:, 1:]], axis=-1)


def init_params(key):
    """Geometric-style init + weight-norm fold, shapes matching the PyTorch module.

    Effective weight W = g * v / ||v||_row (g perturbed from its default ||v||
    so the reparametrization is exercised).  Weights returned as (d_in, d_out)."""
    dims = [D_PE, D_HIDDEN, D_HIDDEN, D_OUT]
    params = []
    for l in range(len(dims) - 1):
        fan_in, fan_out = dims[l], dims[l + 1]
        key, kv, kg = jax.random.split(key, 3)
        if l == len(dims) - 2:   # last layer: SDF geometric init, bias=0.5, outside
            v = (np.sqrt(np.pi) / np.sqrt(fan_in)
                 + 1e-4 * jax.random.normal(kv, (fan_out, fan_in), jnp.float32))
            b = jnp.full((fan_out,), -0.5, jnp.float32)
        else:
            v = jax.random.normal(kv, (fan_out, fan_in), jnp.float32) * (
                np.sqrt(2.0) / np.sqrt(fan_out))
            b = jnp.zeros((fan_out,), jnp.float32)
        vnorm = jnp.linalg.norm(v, axis=1, keepdims=True)
        g = vnorm[:, 0] * (1.0 + 0.1 * jax.random.uniform(
            kg, (fan_out,), jnp.float32, -1.0, 1.0))
        w_eff = g[:, None] * v / vnorm
        params.append((w_eff.T, b))
    return tuple(params)


if __name__ == "__main__":
    key = jax.random.PRNGKey(0)
    kp, kx = jax.random.split(key)
    params = init_params(kp)

    # 1000 is deliberately NOT a tile multiple: exercises padding + a multi-step grid.
    n_points = 1000
    points = jax.random.uniform(kx, (n_points, D_IN), jnp.float32, -1.0, 1.0)

    ref = reference_forward(points, params)

    # f32 matmul/activation path: tight check that the kernel math is exact
    # (tile 256 -> 4 grid steps).
    out_f32 = jax.block_until_ready(
        distance_model_forward(points, params, tile_n=256, use_bf16=False))
    assert out_f32.shape == (n_points, D_OUT), out_f32.shape
    np.testing.assert_allclose(np.asarray(out_f32), np.asarray(ref),
                               atol=1e-4, rtol=1e-4)

    # Default fast path: bf16 matmul operands + bf16 softplus, f32 accumulation
    # (tile auto-clamped to 512 -> 2 grid steps, i.e. both v7x cores busy).
    out_bf16 = jax.block_until_ready(distance_model_forward(points, params))
    assert out_bf16.shape == (n_points, D_OUT), out_bf16.shape
    np.testing.assert_allclose(np.asarray(out_bf16), np.asarray(ref),
                               atol=3e-2, rtol=3e-2)

    print("KERNEL_OK")
</pallas_src>

<mosaic_0001>
module attributes {stable_mosaic.version = 11 : i64} {
  func.func @_distance_mlp_kernel(%arg0: i32, %arg1: memref<2x256xf32, #tpu.memory_space<vmem>>, %arg2: memref<26x2xf32, #tpu.memory_space<vmem>>, %arg3: memref<26x1xf32, #tpu.memory_space<vmem>>, %arg4: memref<128x26xf32, #tpu.memory_space<vmem>>, %arg5: memref<128x1xf32, #tpu.memory_space<vmem>>, %arg6: memref<128x128xf32, #tpu.memory_space<vmem>>, %arg7: memref<128x1xf32, #tpu.memory_space<vmem>>, %arg8: memref<1x128xf32, #tpu.memory_space<vmem>>, %arg9: memref<1x1xf32, #tpu.memory_space<vmem>>, %arg10: memref<1x256xf32, #tpu.memory_space<vmem>>) attributes {dimension_semantics = [#tpu.dimension_semantics<parallel>], iteration_bounds = array<i64: 4>, scalar_prefetch = 0 : i64, scratch_operands = 0 : i64, tpu.core_type = #tpu.core_type<tc>, window_params = [{transform_indices = @transform_0, window_bounds = array<i64: 2, 256>}, {pipeline_mode = #tpu.pipeline_mode<synchronous>, transform_indices = @transform_1, window_bounds = array<i64: 26, 2>}, {pipeline_mode = #tpu.pipeline_mode<synchronous>, transform_indices = @transform_2, window_bounds = array<i64: 26, 1>}, {pipeline_mode = #tpu.pipeline_mode<synchronous>, transform_indices = @transform_3, window_bounds = array<i64: 128, 26>}, {pipeline_mode = #tpu.pipeline_mode<synchronous>, transform_indices = @transform_4, window_bounds = array<i64: 128, 1>}, {pipeline_mode = #tpu.pipeline_mode<synchronous>, transform_indices = @transform_5, window_bounds = array<i64: 128, 128>}, {pipeline_mode = #tpu.pipeline_mode<synchronous>, transform_indices = @transform_6, window_bounds = array<i64: 128, 1>}, {pipeline_mode = #tpu.pipeline_mode<synchronous>, transform_indices = @transform_7, window_bounds = array<i64: 1, 128>}, {pipeline_mode = #tpu.pipeline_mode<synchronous>, transform_indices = @transform_8, window_bounds = array<i64: 1, 1>}, {transform_indices = @transform_9, window_bounds = array<i64: 1, 256>}]} {
    %c0 = arith.constant 0 : index
    %c0_0 = arith.constant 0 : index
    %0 = vector.load %arg1[%c0, %c0_0] : memref<2x256xf32, #tpu.memory_space<vmem>>, vector<2x256xf32>
    %c0_1 = arith.constant 0 : index
    %c0_2 = arith.constant 0 : index
    %1 = vector.load %arg2[%c0_1, %c0_2] : memref<26x2xf32, #tpu.memory_space<vmem>>, vector<26x2xf32>
    %c0_3 = arith.constant 0 : index
    %c0_4 = arith.constant 0 : index
    %2 = vector.load %arg3[%c0_3, %c0_4] : memref<26x1xf32, #tpu.memory_space<vmem>>, vector<26x1xf32>
    %3 = vector.extract_strided_slice %1 {offsets = [0, 0], sizes = [26, 1], strides = [1, 1]} : vector<26x2xf32> to vector<26x1xf32>
    %4 = vector.extract_strided_slice %0 {offsets = [0, 0], sizes = [1, 256], strides = [1, 1]} : vector<2x256xf32> to vector<1x256xf32>
    %5 = vector.broadcast %3 : vector<26x1xf32> to vector<26x256xf32>
    %6 = vector.broadcast %4 : vector<1x256xf32> to vector<26x256xf32>
    %7 = arith.mulf %5, %6 : vector<26x256xf32>
    %8 = vector.broadcast %2 : vector<26x1xf32> to vector<26x256xf32>
    %9 = arith.addf %8, %7 : vector<26x256xf32>
    %10 = vector.extract_strided_slice %1 {offsets = [0, 1], sizes = [26, 1], strides = [1, 1]} : vector<26x2xf32> to vector<26x1xf32>
    %11 = vector.extract_strided_slice %0 {offsets = [1, 0], sizes = [1, 256], strides = [1, 1]} : vector<2x256xf32> to vector<1x256xf32>
    %12 = vector.broadcast %10 : vector<26x1xf32> to vector<26x256xf32>
    %13 = vector.broadcast %11 : vector<1x256xf32> to vector<26x256xf32>
    %14 = arith.mulf %12, %13 : vector<26x256xf32>
    %15 = arith.addf %9, %14 : vector<26x256xf32>
    %16 = tpu.iota {dimensions = array<i32: 0>} : vector<26x1xi32>
    %c2_i32 = arith.constant 2 : i32
    %17 = vector.broadcast %c2_i32 : i32 to vector<26x1xi32>
    %18 = arith.cmpi slt, %16, %17 : vector<26x1xi32>
    %19 = math.sin %15 : vector<26x256xf32>
    %20 = vector.shape_cast %18 : vector<26x1xi1> to vector<26x1xi1>
    %21 = vector.broadcast %20 : vector<26x1xi1> to vector<26x256xi1>
    %22 = arith.select %21, %15, %19 : vector<26x256xi1>, vector<26x256xf32>
    %c0_5 = arith.constant 0 : index
    %c0_6 = arith.constant 0 : index
    %23 = vector.load %arg4[%c0_5, %c0_6] : memref<128x26xf32, #tpu.memory_space<vmem>>, vector<128x26xf32>
    %cst = arith.constant dense<0.000000e+00> : vector<128x256xf32>
    %24 = tpu.matmul %23, %22, %cst {dimension_numbers = #tpu.dot_dimension_numbers<[1], [0], [0], [1], [0, 0, 1, 1], [], []>, precision = #tpu.contract_precision<fp32>} : vector<128x26xf32>, vector<26x256xf32>, vector<128x256xf32> -> vector<128x256xf32>
    %c0_7 = arith.constant 0 : index
    %c0_8 = arith.constant 0 : index
    %25 = vector.load %arg5[%c0_7, %c0_8] : memref<128x1xf32, #tpu.memory_space<vmem>>, vector<128x1xf32>
    %26 = vector.broadcast %25 : vector<128x1xf32> to vector<128x256xf32>
    %27 = arith.addf %24, %26 : vector<128x256xf32>
    %cst_9 = arith.constant 1.000000e+02 : f32
    %28 = vector.broadcast %cst_9 : f32 to vector<128x256xf32>
    %29 = arith.mulf %27, %28 : vector<128x256xf32>
    %cst_10 = arith.constant 2.000000e+01 : f32
    %30 = vector.broadcast %cst_10 : f32 to vector<128x256xf32>
    %31 = arith.minimumf %29, %30 : vector<128x256xf32>
    %32 = math.exp %31 : vector<128x256xf32>
    %cst_11 = arith.constant 1.000000e+00 : f32
    %33 = vector.broadcast %cst_11 : f32 to vector<128x256xf32>
    %34 = arith.addf %33, %32 : vector<128x256xf32>
    %35 = math.log %34 : vector<128x256xf32>
    %cst_12 = arith.constant 0.00999999977 : f32
    %36 = vector.broadcast %cst_12 : f32 to vector<128x256xf32>
    %37 = arith.mulf %35, %36 : vector<128x256xf32>
    %cst_13 = arith.constant 2.000000e+01 : f32
    %38 = vector.broadcast %cst_13 : f32 to vector<128x256xf32>
    %39 = arith.cmpf ogt, %29, %38 : vector<128x256xf32>
    %40 = arith.select %39, %27, %37 : vector<128x256xi1>, vector<128x256xf32>
    %c0_14 = arith.constant 0 : index
    %c0_15 = arith.constant 0 : index
    %41 = vector.load %arg6[%c0_14, %c0_15] : memref<128x128xf32, #tpu.memory_space<vmem>>, vector<128x128xf32>
    %cst_16 = arith.constant dense<0.000000e+00> : vector<128x256xf32>
    %42 = tpu.matmul %41, %40, %cst_16 {dimension_numbers = #tpu.dot_dimension_numbers<[1], [0], [0], [1], [0, 0, 1, 1], [], []>, precision = #tpu.contract_precision<fp32>} : vector<128x128xf32>, vector<128x256xf32>, vector<128x256xf32> -> vector<128x256xf32>
    %c0_17 = arith.constant 0 : index
    %c0_18 = arith.constant 0 : index
    %43 = vector.load %arg7[%c0_17, %c0_18] : memref<128x1xf32, #tpu.memory_space<vmem>>, vector<128x1xf32>
    %44 = vector.broadcast %43 : vector<128x1xf32> to vector<128x256xf32>
    %45 = arith.addf %42, %44 : vector<128x256xf32>
    %cst_19 = arith.constant 1.000000e+02 : f32
    %46 = vector.broadcast %cst_19 : f32 to vector<128x256xf32>
    %47 = arith.mulf %45, %46 : vector<128x256xf32>
    %cst_20 = arith.constant 2.000000e+01 : f32
    %48 = vector.broadcast %cst_20 : f32 to vector<128x256xf32>
    %49 = arith.minimumf %47, %48 : vector<128x256xf32>
    %50 = math.exp %49 : vector<128x256xf32>
    %cst_21 = arith.constant 1.000000e+00 : f32
    %51 = vector.broadcast %cst_21 : f32 to vector<128x256xf32>
    %52 = arith.addf %51, %50 : vector<128x256xf32>
    %53 = math.log %52 : vector<128x256xf32>
    %cst_22 = arith.constant 0.00999999977 : f32
    %54 = vector.broadcast %cst_22 : f32 to vector<128x256xf32>
    %55 = arith.mulf %53, %54 : vector<128x256xf32>
    %cst_23 = arith.constant 2.000000e+01 : f32
    %56 = vector.broadcast %cst_23 : f32 to vector<128x256xf32>
    %57 = arith.cmpf ogt, %47, %56 : vector<128x256xf32>
    %58 = arith.select %57, %45, %55 : vector<128x256xi1>, vector<128x256xf32>
    %c0_24 = arith.constant 0 : index
    %c0_25 = arith.constant 0 : index
    %59 = vector.load %arg8[%c0_24, %c0_25] : memref<1x128xf32, #tpu.memory_space<vmem>>, vector<1x128xf32>
    %cst_26 = arith.constant dense<0.000000e+00> : vector<1x256xf32>
    %60 = tpu.matmul %59, %58, %cst_26 {dimension_numbers = #tpu.dot_dimension_numbers<[1], [0], [0], [1], [0, 0, 1, 1], [], []>, precision = #tpu.contract_precision<fp32>} : vector<1x128xf32>, vector<128x256xf32>, vector<1x256xf32> -> vector<1x256xf32>
    %c0_27 = arith.constant 0 : index
    %c0_28 = arith.constant 0 : index
    %61 = vector.load %arg9[%c0_27, %c0_28] : memref<1x1xf32, #tpu.memory_space<vmem>>, vector<1x1xf32>
    %62 = vector.broadcast %61 : vector<1x1xf32> to vector<1x256xf32>
    %63 = arith.addf %60, %62 : vector<1x256xf32>
    %c0_29 = arith.constant 0 : index
    %c0_30 = arith.constant 0 : index
    %64 = vector.load %arg10[%c0_29, %c0_30] : memref<1x256xf32, #tpu.memory_space<vmem>>, vector<1x256xf32>
    tpu.vector_store %arg10[%c0_29, %c0_30], %63 {strides = array<i32>} : memref<1x256xf32, #tpu.memory_space<vmem>>, vector<1x256xf32>,
    return
  }
  func.func @transform_0(%arg0: i32) -> (i32, i32) {
    %c0_i32 = arith.constant 0 : i32
    %c0_i32_0 = arith.constant 0 : i32
    return %c0_i32, %arg0 : i32, i32
  }
  func.func @transform_1(%arg0: i32) -> (i32, i32) {
    %c0_i32 = arith.constant 0 : i32
    %c0_i32_0 = arith.constant 0 : i32
    %c0_i32_1 = arith.constant 0 : i32
    return %c0_i32, %c0_i32_0 : i32, i32
  }
  func.func @transform_2(%arg0: i32) -> (i32, i32) {
    %c0_i32 = arith.constant 0 : i32
    %c0_i32_0 = arith.constant 0 : i32
    %c0_i32_1 = arith.constant 0 : i32
    return %c0_i32, %c0_i32_0 : i32, i32
  }
  func.func @transform_3(%arg0: i32) -> (i32, i32) {
    %c0_i32 = arith.constant 0 : i32
    %c0_i32_0 = arith.constant 0 : i32
    %c0_i32_1 = arith.constant 0 : i32
    return %c0_i32, %c0_i32_0 : i32, i32
  }
  func.func @transform_4(%arg0: i32) -> (i32, i32) {
    %c0_i32 = arith.constant 0 : i32
    %c0_i32_0 = arith.constant 0 : i32
    %c0_i32_1 = arith.constant 0 : i32
    return %c0_i32, %c0_i32_0 : i32, i32
  }
  func.func @transform_5(%arg0: i32) -> (i32, i32) {
    %c0_i32 = arith.constant 0 : i32
    %c0_i32_0 = arith.constant 0 : i32
    %c0_i32_1 = arith.constant 0 : i32
    return %c0_i32, %c0_i32_0 : i32, i32
  }
  func.func @transform_6(%arg0: i32) -> (i32, i32) {
    %c0_i32 = arith.constant 0 : i32
    %c0_i32_0 = arith.constant 0 : i32
    %c0_i32_1 = arith.constant 0 : i32
    return %c0_i32, %c0_i32_0 : i32, i32
  }
  func.func @transform_7(%arg0: i32) -> (i32, i32) {
    %c0_i32 = arith.constant 0 : i32
    %c0_i32_0 = arith.constant 0 : i32
    %c0_i32_1 = arith.constant 0 : i32
    return %c0_i32, %c0_i32_0 : i32, i32
  }
  func.func @transform_8(%arg0: i32) -> (i32, i32) {
    %c0_i32 = arith.constant 0 : i32
    %c0_i32_0 = arith.constant 0 : i32
    %c0_i32_1 = arith.constant 0 : i32
    return %c0_i32, %c0_i32_0 : i32, i32
  }
  func.func @transform_9(%arg0: i32) -> (i32, i32) {
    %c0_i32 = arith.constant 0 : i32
    %c0_i32_0 = arith.constant 0 : i32
    return %c0_i32, %arg0 : i32, i32
  }
}

</mosaic_0001>

<llo_original>
// kernel: distance_model_forward.1
$region0: #{distance_model_forward.1}
  #allocation0 [shape = 'u32[]', space=smem, size = 0x4, offset = 0x4, fixed_abs, tag = 'smem constant byte address 0x4 - core index']
  #allocation1 [shape = 'u32[144,128]{1,0:T(1,128)}', space=vmem, size = 0x12000, scoped, tag = 'internal scratch']
  #allocation2 [shape = 'f32[1,1]{1,0:T(1,128)S(1)}', space=vmem, size = 0x200, scoped, tag = 'scoped memory for distance_model_forward.1']
  %s0 = inlined_call_operand.vmem [shape: f32[2,1024], index: 0, kind: input, shape index: {}]
  %s1 = inlined_call_operand.vmem [shape: f32[26,2], index: 1, kind: input, shape index: {}]
  %s2 = inlined_call_operand.vmem [shape: f32[26,1], index: 2, kind: input, shape index: {}]
  %s3 = inlined_call_operand.vmem [shape: f32[128,26], index: 3, kind: input, shape index: {}]
  %s4 = inlined_call_operand.vmem [shape: f32[128,1], index: 4, kind: input, shape index: {}]
  %s5 = inlined_call_operand.vmem [shape: f32[128,128], index: 5, kind: input, shape index: {}]
  %s6 = inlined_call_operand.vmem [shape: f32[128,1], index: 6, kind: input, shape index: {}]
  %s7 = inlined_call_operand.vmem [shape: f32[1,128], index: 7, kind: input, shape index: {}]
  %s8 = inlined_call_operand.<no memory space> [shape: f32[1,1], index: 8, kind: input, shape index: {}]
  %s9 = inlined_call_operand.vmem [shape: f32[1,1024], index: 9, kind: output, shape index: {}]
  %s10 = sld [smem:[#allocation0]]
  $region69: #{distance_model_forward.1} parent=0
    _
  %s12 = ssub.s32 1, %s10
  %s13 = scalar_select 0, %s12, %s10
  %v14 = vstv %s8
  %15 = vst [vmem:[#allocation2] sm:$0x1] %v14
  loop: start=0, step=1, limit=6
  $region2: #{distance_model_forward.1} parent=0 // loop_pre_header
    _
  $region3: #{distance_model_forward.1} parent=0 // loop_header
    %s17 = sphi 0, %s21
    %p18 = scmp.ge.s32.totalorder %s17, 6
    %s27 = sphi 0, %s29
    %s30 = sphi 0, %s27
    %s31 = sphi 0, %s30
    %s47 = sphi 0, %s31
    %s51 = sphi 0, %s51
    %s53 = sphi 0, %s51
    %s54 = sphi 0, %s53
    %s68 = sphi 0, %s54
    %s72 = sphi 0, %s72
    %s74 = sphi 0, %s72
    %s75 = sphi 0, %s74
    %s89 = sphi 0, %s75
    %s93 = sphi 0, %s93
    %s95 = sphi 0, %s93
    %s96 = sphi 0, %s95
    %s110 = sphi 0, %s96
    %s114 = sphi 0, %s114
    %s116 = sphi 0, %s114
    %s117 = sphi 0, %s116
    %s131 = sphi 0, %s117
    %s135 = sphi 0, %s135
    %s137 = sphi 0, %s135
    %s138 = sphi 0, %s137
    %s152 = sphi 0, %s138
    %s156 = sphi 0, %s156
    %s158 = sphi 0, %s156
    %s159 = sphi 0, %s158
    %s173 = sphi 0, %s159
    %s177 = sphi 0, %s177
    %s179 = sphi 0, %s177
    %s180 = sphi 0, %s179
    %s194 = sphi 0, %s180
    %s198 = sphi 0, %s198
    %s200 = sphi 0, %s198
    %s201 = sphi 0, %s200
    %s215 = sphi 0, %s201
    %s221 = sphi 0, %s223
    %s224 = sphi 0, %s221
    %s225 = sphi 0, %s224
    %s241 = sphi 0, %s225
  $region4: #{distance_model_forward.1} parent=0 // loop_header_branch
    %20 = sbr.rel (%p18) target = $region8
  $region5: #{distance_model_forward.1} parent=0 // loop_body
    %s22 = ssub.s32 %s17, 1
    %s23 = ssub.s32 %s17, 2
    %s24 = sadd.s32 %s17, 1
    %s25 = ssub.s32 %s17, %s24
    %p26 = scmp.eq.s32.totalorder %s25, 0
    %s28 = sadd.s32 %s27, 1
    %s29 = scalar_select %p26, %s27, %s28
    %p32 = pneg %p26
    %p33 = scmp.eq.s32.totalorder %s17, 3
    %p34 = por %p32, %p33
    %p35 = scmp.ne.s32.totalorder %s27, %s30
    %p36 = scmp.eq.s32.totalorder %s17, 0
    %p37 = por %p35, %p36
    %p38 = scmp.ne.s32.totalorder %s27, %s30
    %p39 = scmp.eq.s32.totalorder %s22, 3
    %p40 = por %p38, %p39
    %p41 = scmp.ne.s32.totalorder %s30, %s31
    %p42 = scmp.eq.s32.totalorder %s22, 0
    %p43 = por %p41, %p42
    %p44 = scmp.ne.s32.totalorder %s30, %s31
    %p45 = scmp.eq.s32.totalorder %s23, 3
    %p46 = por %p44, %p45
    %p48 = scmp.ne.s32.totalorder %s31, %s47
    %p49 = scmp.eq.s32.totalorder %s23, 0
    %p50 = por %p48, %p49
    %s52 = sadd.s32 %s51, 1
    %p55 = scmp.eq.s32.totalorder %s17, 3
    %p56 = scmp.ne.s32.totalorder %s51, %s53
    %p57 = scmp.eq.s32.totalorder %s17, 0
    %p58 = por %p56, %p57
    %p59 = scmp.ne.s32.totalorder %s51, %s53
    %p60 = scmp.eq.s32.totalorder %s22, 3
    %p61 = por %p59, %p60
    %p62 = scmp.ne.s32.totalorder %s53, %s54
    %p63 = scmp.eq.s32.totalorder %s22, 0
    %p64 = por %p62, %p63
    %p65 = scmp.ne.s32.totalorder %s53, %s54
    %p66 = scmp.eq.s32.totalorder %s23, 3
    %p67 = por %p65, %p66
    %p69 = scmp.ne.s32.totalorder %s54, %s68
    %p70 = scmp.eq.s32.totalorder %s23, 0
    %p71 = por %p69, %p70
    %s73 = sadd.s32 %s72, 1
    %p76 = scmp.eq.s32.totalorder %s17, 3
    %p77 = scmp.ne.s32.totalorder %s72, %s74
    %p78 = scmp.eq.s32.totalorder %s17, 0
    %p79 = por %p77, %p78
    %p80 = scmp.ne.s32.totalorder %s72, %s74
    %p81 = scmp.eq.s32.totalorder %s22, 3
    %p82 = por %p80, %p81
    %p83 = scmp.ne.s32.totalorder %s74, %s75
    %p84 = scmp.eq.s32.totalorder %s22, 0
    %p85 = por %p83, %p84
    %p86 = scmp.ne.s32.totalorder %s74, %s75
    %p87 = scmp.eq.s32.totalorder %s23, 3
    %p88 = por %p86, %p87
    %p90 = scmp.ne.s32.totalorder %s75, %s89
    %p91 = scmp.eq.s32.totalorder %s23, 0
    %p92 = por %p90, %p91
    %s94 = sadd.s32 %s93, 1
    %p97 = scmp.eq.s32.totalorder %s17, 3
    %p98 = scmp.ne.s32.totalorder %s93, %s95
    %p99 = scmp.eq.s32.totalorder %s17, 0
    %p100 = por %p98, %p99
    %p101 = scmp.ne.s32.totalorder %s93, %s95
    %p102 = scmp.eq.s32.totalorder %s22, 3
    %p103 = por %p101, %p102
    %p104 = scmp.ne.s32.totalorder %s95, %s96
    %p105 = scmp.eq.s32.totalorder %s22, 0
    %p106 = por %p104, %p105
    %p107 = scmp.ne.s32.totalorder %s95, %s96
    %p108 = scmp.eq.s32.totalorder %s23, 3
    %p109 = por %p107, %p108
    %p111 = scmp.ne.s32.totalorder %s96, %s110
    %p112 = scmp.eq.s32.totalorder %s23, 0
    %p113 = por %p111, %p112
    %s115 = sadd.s32 %s114, 1
    %p118 = scmp.eq.s32.totalorder %s17, 3
    %p119 = scmp.ne.s32.totalorder %s114, %s116
    %p120 = scmp.eq.s32.totalorder %s17, 0
    %p121 = por %p119, %p120
    %p122 = scmp.ne.s32.totalorder %s114, %s116
    %p123 = scmp.eq.s32.totalorder %s22, 3
    %p124 = por %p122, %p123
    %p125 = scmp.ne.s32.totalorder %s116, %s117
    %p126 = scmp.eq.s32.totalorder %s22, 0
    %p127 = por %p125, %p126
    %p128 = scmp.ne.s32.totalorder %s116, %s117
    %p129 = scmp.eq.s32.totalorder %s23, 3
    %p130 = por %p128, %p129
    %p132 = scmp.ne.s32.totalorder %s117, %s131
    %p133 = scmp.eq.s32.totalorder %s23, 0
    %p134 = por %p132, %p133
    %s136 = sadd.s32 %s135, 1
    %p139 = scmp.eq.s32.totalorder %s17, 3
    %p140 = scmp.ne.s32.totalorder %s135, %s137
    %p141 = scmp.eq.s32.totalorder %s17, 0
    %p142 = por %p140, %p141
    %p143 = scmp.ne.s32.totalorder %s135, %s137
    %p144 = scmp.eq.s32.totalorder %s22, 3
    %p145 = por %p143, %p144
    %p146 = scmp.ne.s32.totalorder %s137, %s138
    %p147 = scmp.eq.s32.totalorder %s22, 0
    %p148 = por %p146, %p147
    %p149 = scmp.ne.s32.totalorder %s137, %s138
    %p150 = scmp.eq.s32.totalorder %s23, 3
    %p151 = por %p149, %p150
    %p153 = scmp.ne.s32.totalorder %s138, %s152
    %p154 = scmp.eq.s32.totalorder %s23, 0
    %p155 = por %p153, %p154
    %s157 = sadd.s32 %s156, 1
    %p160 = scmp.eq.s32.totalorder %s17, 3
    %p161 = scmp.ne.s32.totalorder %s156, %s158
    %p162 = scmp.eq.s32.totalorder %s17, 0
    %p163 = por %p161, %p162
    %p164 = scmp.ne.s32.totalorder %s156, %s158
    %p165 = scmp.eq.s32.totalorder %s22, 3
    %p166 = por %p164, %p165
    %p167 = scmp.ne.s32.totalorder %s158, %s159
    %p168 = scmp.eq.s32.totalorder %s22, 0
    %p169 = por %p167, %p168
    %p170 = scmp.ne.s32.totalorder %s158, %s159
    %p171 = scmp.eq.s32.totalorder %s23, 3
    %p172 = por %p170, %p171
    %p174 = scmp.ne.s32.totalorder %s159, %s173
    %p175 = scmp.eq.s32.totalorder %s23, 0
    %p176 = por %p174, %p175
    %s178 = sadd.s32 %s177, 1
    %p181 = scmp.eq.s32.totalorder %s17, 3
    %p182 = scmp.ne.s32.totalorder %s177, %s179
    %p183 = scmp.eq.s32.totalorder %s17, 0
    %p184 = por %p182, %p183
    %p185 = scmp.ne.s32.totalorder %s177, %s179
    %p186 = scmp.eq.s32.totalorder %s22, 3
    %p187 = por %p185, %p186
    %p188 = scmp.ne.s32.totalorder %s179, %s180
    %p189 = scmp.eq.s32.totalorder %s22, 0
    %p190 = por %p188, %p189
    %p191 = scmp.ne.s32.totalorder %s179, %s180
    %p192 = scmp.eq.s32.totalorder %s23, 3
    %p193 = por %p191, %p192
    %p195 = scmp.ne.s32.totalorder %s180, %s194
    %p196 = scmp.eq.s32.totalorder %s23, 0
    %p197 = por %p195, %p196
    %s199 = sadd.s32 %s198, 1
    %p202 = scmp.eq.s32.totalorder %s17, 3
    %p203 = scmp.ne.s32.totalorder %s198, %s200
    %p204 = scmp.eq.s32.totalorder %s17, 0
    %p205 = por %p203, %p204
    %p206 = scmp.ne.s32.totalorder %s198, %s200
    %p207 = scmp.eq.s32.totalorder %s22, 3
    %p208 = por %p206, %p207
    %p209 = scmp.ne.s32.totalorder %s200, %s201
    %p210 = scmp.eq.s32.totalorder %s22, 0
    %p211 = por %p209, %p210
    %p212 = scmp.ne.s32.totalorder %s200, %s201
    %p213 = scmp.eq.s32.totalorder %s23, 3
    %p214 = por %p212, %p213
    %p216 = scmp.ne.s32.totalorder %s201, %s215
    %p217 = scmp.eq.s32.totalorder %s23, 0
    %p218 = por %p216, %p217
    %s219 = ssub.s32 %s17, %s24
    %p220 = scmp.eq.s32.totalorder %s219, 0
    %s222 = sadd.s32 %s221, 1
    %s223 = scalar_select %p220, %s221, %s222
    %p226 = pneg %p220
    %p227 = scmp.eq.s32.totalorder %s17, 3
    %p228 = por %p226, %p227
    %p229 = scmp.ne.s32.totalorder %s221, %s224
    %p230 = scmp.eq.s32.totalorder %s17, 0
    %p231 = por %p229, %p230
    %p232 = scmp.ne.s32.totalorder %s221, %s224
    %p233 = scmp.eq.s32.totalorder %s22, 3
    %p234 = por %p232, %p233
    %p235 = scmp.ne.s32.totalorder %s224, %s225
    %p236 = scmp.eq.s32.totalorder %s22, 0
    %p237 = por %p235, %p236
    %p238 = scmp.ne.s32.totalorder %s224, %s225
    %p239 = scmp.eq.s32.totalorder %s23, 3
    %p240 = por %p238, %p239
    %p242 = scmp.ne.s32.totalorder %s225, %s241
    %p243 = scmp.eq.s32.totalorder %s23, 0
    %p244 = por %p242, %p243
    %p245 = scmp.le.s32.totalorder 1, %s17
    %p246 = scmp.lt.s32.totalorder %s17, 5
    %p247 = pnand %p245, %p246
    %p248 = pneg %p247
    // Predicated region
    $region9: #{distance_model_forward.1} parent=5 // pred_check
      _
    $region10: #{distance_model_forward.1} parent=5 // pred_check_branch
      %250 = sbr.rel (%p247) target = $region12
    $region11: #{distance_model_forward.1} parent=5 // pred_region
      %s251 = ssub.s32 %s17, 1
      // Predicated region
      $region13: #{distance_model_forward.1} parent=11 // pred_check
        %p252 = pneg %p64
      $region14: #{distance_model_forward.1} parent=11 // pred_check_branch
        %254 = sbr.rel (%p252) target = $region16
      $region15: #{distance_model_forward.1} parent=11 // pred_region
        _
      $region16: #{distance_model_forward.1} parent=11 // pred_fallthru
        _
      // Predicated region
      $region17: #{distance_model_forward.1} parent=11 // pred_check
        %p255 = pneg %p85
      $region18: #{distance_model_forward.1} parent=11 // pred_check_branch
        %257 = sbr.rel (%p255) target = $region20
      $region19: #{distance_model_forward.1} parent=11 // pred_region
        _
      $region20: #{distance_model_forward.1} parent=11 // pred_fallthru
        _
      // Predicated region
      $region21: #{distance_model_forward.1} parent=11 // pred_check
        %p258 = pneg %p106
      $region22: #{distance_model_forward.1} parent=11 // pred_check_branch
        %260 = sbr.rel (%p258) target = $region24
      $region23: #{distance_model_forward.1} parent=11 // pred_region
        _
      $region24: #{distance_model_forward.1} parent=11 // pred_fallthru
        _
      // Predicated region
      $region25: #{distance_model_forward.1} parent=11 // pred_check
        %p261 = pneg %p127
      $region26: #{distance_model_forward.1} parent=11 // pred_check_branch
        %263 = sbr.rel (%p261) target = $region28
      $region27: #{distance_model_forward.1} parent=11 // pred_region
        _
      $region28: #{distance_model_forward.1} parent=11 // pred_fallthru
        _
      // Predicated region
      $region29: #{distance_model_forward.1} parent=11 // pred_check
        %p264 = pneg %p148
      $region30: #{distance_model_forward.1} parent=11 // pred_check_branch
        %266 = sbr.rel (%p264) target = $region32
      $region31: #{distance_model_forward.1} parent=11 // pred_region
        _
      $region32: #{distance_model_forward.1} parent=11 // pred_fallthru
        _
      // Predicated region
      $region33: #{distance_model_forward.1} parent=11 // pred_check
        %p267 = pneg %p169
      $region34: #{distance_model_forward.1} parent=11 // pred_check_branch
        %269 = sbr.rel (%p267) target = $region36
      $region35: #{distance_model_forward.1} parent=11 // pred_region
        _
      $region36: #{distance_model_forward.1} parent=11 // pred_fallthru
        _
      // Predicated region
      $region37: #{distance_model_forward.1} parent=11 // pred_check
        %p270 = pneg %p190
      $region38: #{distance_model_forward.1} parent=11 // pred_check_branch
        %272 = sbr.rel (%p270) target = $region40
      $region39: #{distance_model_forward.1} parent=11 // pred_region
        _
      $region40: #{distance_model_forward.1} parent=11 // pred_fallthru
        _
      // Predicated region
      $region41: #{distance_model_forward.1} parent=11 // pred_check
        %p273 = pneg %p211
      $region42: #{distance_model_forward.1} parent=11 // pred_check_branch
        %275 = sbr.rel (%p273) target = $region44
      $region43: #{distance_model_forward.1} parent=11 // pred_region
        _
      $region44: #{distance_model_forward.1} parent=11 // pred_fallthru
        _
    $region12: #{distance_model_forward.1} parent=5 // pred_fallthru
      _
    %p276 = scmp.lt.s32.totalorder %s17, 4
    // Predicated region
    $region45: #{distance_model_forward.1} parent=5 // pred_check
      %p277 = pneg %p276
    $region46: #{distance_model_forward.1} parent=5 // pred_check_branch
      %279 = sbr.rel (%p277) target = $region48
    $region47: #{distance_model_forward.1} parent=5 // pred_region
      // Predicated region
      $region49: #{distance_model_forward.1} parent=47 // pred_check
        %p280 = pneg %p37
      $region50: #{distance_model_forward.1} parent=47 // pred_check_branch
        %282 = sbr.rel (%p280) target = $region52
      $region51: #{distance_model_forward.1} parent=47 // pred_region
        %s283 = smul.u32 2, %s17
        %p284 = scmp.lt.s32.totalorder %s283, 7
        %s285 = scalar_select %p284, %s283, 7
        %s286 = smul.addr %s285, 2
        %s287 = scalar_lea.vmem %s0, %s286
        %s288 = smul.u32 2, %s17
      $region52: #{distance_model_forward.1} parent=47 // pred_fallthru
        _
    $region48: #{distance_model_forward.1} parent=5 // pred_fallthru
      _
    %p289 = scmp.le.s32.totalorder 1, %s17
    %p290 = scmp.lt.s32.totalorder %s17, 5
    %p291 = pnand %p289, %p290
    %p292 = pneg %p291
    // Predicated region
    $region53: #{distance_model_forward.1} parent=5 // pred_check
      _
    $region54: #{distance_model_forward.1} parent=5 // pred_check_branch
      %294 = sbr.rel (%p291) target = $region56
    $region55: #{distance_model_forward.1} parent=5 // pred_region
      %s295 = ssub.s32 %s17, 1
      %s296 = smul.u32 2, %s22
      %p297 = scmp.lt.s32.totalorder %s296, 7
      %s298 = scalar_select %p297, %s296, 7
      %s299 = smul.addr %s298, 2
      %s300 = scalar_lea.vmem %s0, %s299
      %p301 = pneg %p43
      %p302 = pneg %p40
      %p303 = pneg %p64
      %p304 = pneg %p61
      %p305 = pneg %p85
      %p306 = pneg %p82
      %p307 = pneg %p106
      %p308 = pneg %p103
      %p309 = pneg %p127
      %p310 = pneg %p124
      %p311 = pneg %p148
      %p312 = pneg %p145
      %p313 = pneg %p169
      %p314 = pneg %p166
      %p315 = pneg %p190
      %p316 = pneg %p187
      %p317 = pneg %p211
      %p318 = pneg %p208
      %p319 = pneg %p237
      %p320 = pneg %p234
      %s321 = smul.u32 2, %s22
      %p322 = scmp.lt.s32.totalorder %s321, 7
      %s323 = scalar_select %p322, %s321, 7
      %s324 = scalar_lea.vmem %s9, %s323
      %s325 = smul.u32 2, %s22
      %p326 = scmp.lt.s32.totalorder %s325, 7
      %s327 = scalar_select %p326, %s325, 7
      %s328 = smul.addr %s327, 2
      %s329 = scalar_lea.vmem %s0, %s328
      %s330 = smul.u32 2, %s22
      %s331 = smul.u32 2, %s22
      %p332 = scmp.lt.s32.totalorder %s331, 7
      %s333 = scalar_select %p332, %s331, 7
      %s334 = scalar_lea.vmem %s9, %s333
      %s335 = smul.u32 2, %s22
      %v336 = vld [vmem:[%s329] sm:$0xf]
      %v337 = vld [vmem:[%s1] sm:$0xff]
      %v338 = vld [vmem:[%s1 + $0x8] sm:$0xff]
      %v339 = vld [vmem:[%s1 + $0x10] sm:$0xff]
      %v340 = vld [vmem:[%s1 + $0x18] sm:$0x3]
      %v341 = vld [vmem:[%s2] sm:$0xff]
      %v342 = vld [vmem:[%s2 + $0x8] sm:$0xff]
      %v343 = vld [vmem:[%s2 + $0x10] sm:$0xff]
      %v344 = vld [vmem:[%s2 + $0x18] sm:$0x3]
      %346 = vset.pattern.permute.xlu0 0
      %347 = vperm.xlu0 %346, %v337
      %v348 = vpop.permute.xlu0 %347
      %351 = vset.pattern.permute.xlu0 0
      %352 = vperm.xlu0 %351, %v338
      %v353 = vpop.permute.xlu0 %352
      %356 = vset.pattern.permute.xlu0 0
      %357 = vperm.xlu0 %356, %v339
      %v358 = vpop.permute.xlu0 %357
      %361 = vset.pattern.permute.xlu0 0
      %362 = vperm.xlu0 %361, %v340
      %v363 = vpop.permute.xlu0 %362
      %v366 = vlaneseq
      %v367 = vshrl.u32 %v366, 7
      %v368 = vsub.s32 0, %v367
      %v369 = vrot.slane %v336, %v368
      %v370 = vlaneseq
      %v371 = vshrl.u32 %v370, 7
      %v372 = vsub.s32 2, %v371
      %v373 = vrot.slane %v336, %v372
      %v376 = vlaneseq
      %v377 = vshrl.u32 %v376, 7
      %v378 = vsub.s32 0, %v377
      %v379 = vrot.slane %v369, %v378
      %v380 = vlaneseq
      %v381 = vshrl.u32 %v380, 7
      %v382 = vsub.s32 0, %v381
      %v383 = vrot.slane %v373, %v382
      %v384 = vmul.f32 %v348, %v379
      %v385 = vmul.f32 %v348, %v383
      %v386 = vmul.f32 %v353, %v379
      %v387 = vmul.f32 %v353, %v383
      %v388 = vmul.f32 %v358, %v379
      %v389 = vmul.f32 %v358, %v383
      %v390 = vmul.f32 %v363, %v379
      %v391 = vmul.f32 %v363, %v383
      %393 = vset.pattern.permute.xlu0 0
      %394 = vperm.xlu0 %393, %v341
      %v395 = vpop.permute.xlu0 %394
      %398 = vset.pattern.permute.xlu0 0
      %399 = vperm.xlu0 %398, %v342
      %v400 = vpop.permute.xlu0 %399
      %403 = vset.pattern.permute.xlu0 0
      %404 = vperm.xlu0 %403, %v343
      %v405 = vpop.permute.xlu0 %404
      %408 = vset.pattern.permute.xlu0 0
      %409 = vperm.xlu0 %408, %v344
      %v410 = vpop.permute.xlu0 %409
      %v412 = vadd.f32 %v395, %v384
      %v413 = vadd.f32 %v395, %v385
      %v414 = vadd.f32 %v400, %v386
      %v415 = vadd.f32 %v400, %v387
      %v416 = vadd.f32 %v405, %v388
      %v417 = vadd.f32 %v405, %v389
      %v418 = vadd.f32 %v410, %v390
      %v419 = vadd.f32 %v410, %v391
      %420 = vset.pattern.permute.xlu0 1
      %421 = vperm.xlu0 %420, %v337
      %v422 = vpop.permute.xlu0 %421
      %424 = vset.pattern.permute.xlu0 1
      %425 = vperm.xlu0 %424, %v338
      %v426 = vpop.permute.xlu0 %425
      %428 = vset.pattern.permute.xlu0 1
      %429 = vperm.xlu0 %428, %v339
      %v430 = vpop.permute.xlu0 %429
      %432 = vset.pattern.permute.xlu0 1
      %433 = vperm.xlu0 %432, %v340
      %v434 = vpop.permute.xlu0 %433
      %v436 = vlaneseq
      %v437 = vshrl.u32 %v436, 7
      %v438 = vsub.s32 1, %v437
      %v439 = vrot.slane %v336, %v438
      %v440 = vlaneseq
      %v441 = vshrl.u32 %v440, 7
      %v442 = vsub.s32 3, %v441
      %v443 = vrot.slane %v336, %v442
      %v446 = vlaneseq
      %v447 = vshrl.u32 %v446, 7
      %v448 = vsub.s32 1, %v447
      %v449 = vrot.slane %v439, %v448
      %v450 = vlaneseq
      %v451 = vshrl.u32 %v450, 7
      %v452 = vsub.s32 1, %v451
      %v453 = vrot.slane %v443, %v452
      %v454 = vmul.f32 %v422, %v449
      %v455 = vmul.f32 %v422, %v453
      %v456 = vmul.f32 %v426, %v449
      %v457 = vmul.f32 %v426, %v453
      %v458 = vmul.f32 %v430, %v449
      %v459 = vmul.f32 %v430, %v453
      %v460 = vmul.f32 %v434, %v449
      %v461 = vmul.f32 %v434, %v453
      %v462 = vadd.f32 %v412, %v454
      %v463 = vadd.f32 %v413, %v455
      %v464 = vadd.f32 %v414, %v456
      %v465 = vadd.f32 %v415, %v457
      %v466 = vadd.f32 %v416, %v458
      %v467 = vadd.f32 %v417, %v459
      %v468 = vadd.f32 %v418, %v460
      %v469 = vadd.f32 %v419, %v461
      %v470 = vlaneseq
      %v471 = vshrl.u32 %v470, 7
      %v472 = vadd.s32 %v471, 8
      %v473 = vadd.s32 %v471, 16
      %v474 = vadd.s32 %v471, 24
      %vm475 = vcmp.lt.s32.totalorder %v471, 2
      %vm476 = vcmp.lt.s32.totalorder %v472, 2
      %vm477 = vcmp.lt.s32.totalorder %v473, 2
      %vm478 = vcmp.lt.s32.totalorder %v474, 2
      %v479 = vand.u32 2147483647, %v462
      %vm480 = vcmp.le.f32.partialorder %v479, 0.7853982
      %vm481 = vcmp.lt.s32.totalorder %v462, 0
      %v482 = vand.u32 %v462, 2139095040
      %v483 = vshrl.u32 %v482, 23
      %v484 = vsub.s32 %v483, 127
      %v485 = vand.u32 2147483647, %v462
      %v486 = vand.u32 %v485, 8388607
      %v487 = vor.u32 %v486, 8388608
      %v488 = vsub.s32 0, %v487
      %v489 = vadd.s32 %v484, 1
      %vm490 = vcmp.gt.s32.totalorder %v489, 0
      %v491 = vsel %vm490, %v489, 0
      %v492 = vshrl.u32 %v491, 5
      %v493 = vand.u32 %v491, 31
      %v494 = vsub.s32 32, %v493
      %v495 = vshrl.u32 683565275, %v494
      %v496 = vshll.u32 683565275, %v493
      %v497 = vshrl.u32 2475754826, %v494
      %v498 = vor.u32 %v496, %v497
      %v499 = vshll.u32 2475754826, %v493
      %v500 = vshrl.u32 2131351028, %v494
      %v501 = vor.u32 %v499, %v500
      %v502 = vshll.u32 2131351028, %v493
      %v503 = vshrl.u32 2102212464, %v494
      %v504 = vor.u32 %v502, %v503
      %v505 = vshll.u32 2102212464, %v493
      %v506 = vshrl.u32 920167782, %v494
      %v507 = vor.u32 %v505, %v506
      %v508 = vshll.u32 920167782, %v493
      %v509 = vshrl.u32 1326507024, %v494
      %v510 = vor.u32 %v508, %v509
      %vm511 = vcmp.lt.s32.totalorder %v492, 1
      %vm512 = vcmp.lt.s32.totalorder %v492, 2
      %vm513 = vcmp.lt.s32.totalorder %v492, 3
      %vm514 = vcmp.lt.s32.totalorder %v492, 4
      %v515 = vsel %vm511, %v495, %v498
      %v516 = vsel %vm514, %v504, 2102212464
      %v517 = vsel %vm513, %v501, %v516
      %v518 = vsel %vm512, %v515, %v517
      %v519 = vsel %vm511, %v498, %v501
      %v520 = vsel %vm514, %v507, 920167782
      %v521 = vsel %vm513, %v504, %v520
      %v522 = vsel %vm512, %v519, %v521
      %v523 = vsel %vm511, %v501, %v504
      %v524 = vsel %vm514, %v510, 1326507024
      %v525 = vsel %vm513, %v507, %v524
      %v526 = vsel %vm512, %v523, %v525
      %v527 = vshll.u32 %v487, 8
      %v528 = vmul.u32.u64.compose %v527, %v526
      %v529 = vextract.low.u32 %v528
      %v530 = vextract.high.u32 %v528
      %v531 = vmul.u32.u64.compose %v527, %v522
      %v532 = vextract.low.u32 %v531
      %v533 = vextract.high.u32 %v531
      %v534 = vmul.u32 %v527, %v518
      %v535 = vadd.s32 %v530, %v532
      %vm536 = vc.u32 %v530, %v532
      %v537 = vadd.s32 %v533, 1
      %v538 = vsel %vm536, %v537, %v533
      %v539 = vadd.s32 %v534, %v538
      %v540 = vadd.s32 %v539, 536870912
      %v541 = vshrl.u32 %v540, 30
      %v542 = vshll.u32 %v541, 30
      %v543 = vsub.s32 %v539, %v542
      %vm544 = vcmp.lt.s32.totalorder %v543, 0
      %v545 = vsub.s32 0, %v543
      %v546 = vsel %vm544, %v545, %v543
      %v547 = vclz %v546
      %v548 = vsub.s32 %v547, 2
      %vm549 = vcmp.gt.s32.totalorder 0, %v548
      %v550 = vsel %vm549, 0, %v548
      %v551 = vsub.s32 32, %v550
      %v552 = vshll.u32 %v543, %v550
      %v553 = vshrl.u32 %v535, %v551
      %v554 = vor.u32 %v552, %v553
      %v555 = vsub.s32 4294967266, %v550
      %v556 = vadd.s32 %v555, 127
      %v557 = vshll.u32 %v556, 23
      %v558 = vor.u32 4788187, %v557
      %v559 = vand.u32 2147483647, %v558
      %v561 = vcvt.s32.f32 %v554
      %v562 = vmul.f32 %v561, %v559
      %v563 = vxor.u32 %v562, 2147483648
      %v564 = vsel %vm481, %v563, %v562
      %v565 = vsub.s32 4, %v541
      %v566 = vsel %vm481, %v565, %v541
      %v567 = vsel %vm480, %v462, %v564
      %v568 = vsel %vm480, 0, %v566
      %v569 = vcosq.f32.pop %v567
      %v570 = vsinq.f32.pop %v567
      %vm571 = vweird.f32 %v462
      %v572 = vadd.s32 %v568, 3
      %v573 = vand.u32 %v572, 3
      %vm574 = vcmp.lt.s32.totalorder %v573, 2
      %vm575 = vcmp.eq.s32.totalorder %v573, 0
      %v576 = vxor.u32 %v570, 2147483648
      %v577 = vsel %vm575, %v569, %v576
      %vm578 = vcmp.eq.s32.totalorder %v573, 2
      %v579 = vxor.u32 %v569, 2147483648
      %v580 = vsel %vm578, %v579, %v570
      %v581 = vsel %vm574, %v577, %v580
      %v582 = vsel %vm571, nan, %v581
      %v583 = vand.u32 2147483647, %v463
      %vm584 = vcmp.le.f32.partialorder %v583, 0.7853982
      %vm585 = vcmp.lt.s32.totalorder %v463, 0
      %v586 = vand.u32 %v463, 2139095040
      %v587 = vshrl.u32 %v586, 23
      %v588 = vsub.s32 %v587, 127
      %v589 = vand.u32 2147483647, %v463
      %v590 = vand.u32 %v589, 8388607
      %v591 = vor.u32 %v590, 8388608
      %v592 = vsub.s32 0, %v591
      %v593 = vadd.s32 %v588, 1
      %vm594 = vcmp.gt.s32.totalorder %v593, 0
      %v595 = vsel %vm594, %v593, 0
      %v596 = vshrl.u32 %v595, 5
      %v597 = vand.u32 %v595, 31
      %v598 = vsub.s32 32, %v597
      %v599 = vshrl.u32 683565275, %v598
      %v600 = vshll.u32 683565275, %v597
      %v601 = vshrl.u32 2475754826, %v598
      %v602 = vor.u32 %v600, %v601
      %v603 = vshll.u32 2475754826, %v597
      %v604 = vshrl.u32 2131351028, %v598
      %v605 = vor.u32 %v603, %v604
      %v606 = vshll.u32 2131351028, %v597
      %v607 = vshrl.u32 2102212464, %v598
      %v608 = vor.u32 %v606, %v607
      %v609 = vshll.u32 2102212464, %v597
      %v610 = vshrl.u32 920167782, %v598
      %v611 = vor.u32 %v609, %v610
      %v612 = vshll.u32 920167782, %v597
      %v613 = vshrl.u32 1326507024, %v598
      %v614 = vor.u32 %v612, %v613
      %vm615 = vcmp.lt.s32.totalorder %v596, 1
      %vm616 = vcmp.lt.s32.totalorder %v596, 2
      %vm617 = vcmp.lt.s32.totalorder %v596, 3
      %vm618 = vcmp.lt.s32.totalorder %v596, 4
      %v619 = vsel %vm615, %v599, %v602
      %v620 = vsel %vm618, %v608, 2102212464
      %v621 = vsel %vm617, %v605, %v620
      %v622 = vsel %vm616, %v619, %v621
      %v623 = vsel %vm615, %v602, %v605
      %v624 = vsel %vm618, %v611, 920167782
      %v625 = vsel %vm617, %v608, %v624
      %v626 = vsel %vm616, %v623, %v625
      %v627 = vsel %vm615, %v605, %v608
      %v628 = vsel %vm618, %v614, 1326507024
      %v629 = vsel %vm617, %v611, %v628
      %v630 = vsel %vm616, %v627, %v629
      %v631 = vshll.u32 %v591, 8
      %v632 = vmul.u32.u64.compose %v631, %v630
      %v633 = vextract.low.u32 %v632
      %v634 = vextract.high.u32 %v632
      %v635 = vmul.u32.u64.compose %v631, %v626
      %v636 = vextract.low.u32 %v635
      %v637 = vextract.high.u32 %v635
      %v638 = vmul.u32 %v631, %v622
      %v639 = vadd.s32 %v634, %v636
      %vm640 = vc.u32 %v634, %v636
      %v641 = vadd.s32 %v637, 1
      %v642 = vsel %vm640, %v641, %v637
      %v643 = vadd.s32 %v638, %v642
      %v644 = vadd.s32 %v643, 536870912
      %v645 = vshrl.u32 %v644, 30
      %v646 = vshll.u32 %v645, 30
      %v647 = vsub.s32 %v643, %v646
      %vm648 = vcmp.lt.s32.totalorder %v647, 0
      %v649 = vsub.s32 0, %v647
      %v650 = vsel %vm648, %v649, %v647
      %v651 = vclz %v650
      %v652 = vsub.s32 %v651, 2
      %vm653 = vcmp.gt.s32.totalorder 0, %v652
      %v654 = vsel %vm653, 0, %v652
      %v655 = vsub.s32 32, %v654
      %v656 = vshll.u32 %v647, %v654
      %v657 = vshrl.u32 %v639, %v655
      %v658 = vor.u32 %v656, %v657
      %v659 = vsub.s32 4294967266, %v654
      %v660 = vadd.s32 %v659, 127
      %v661 = vshll.u32 %v660, 23
      %v662 = vor.u32 4788187, %v661
      %v663 = vand.u32 2147483647, %v662
      %v665 = vcvt.s32.f32 %v658
      %v666 = vmul.f32 %v665, %v663
      %v667 = vxor.u32 %v666, 2147483648
      %v668 = vsel %vm585, %v667, %v666
      %v669 = vsub.s32 4, %v645
      %v670 = vsel %vm585, %v669, %v645
      %v671 = vsel %vm584, %v463, %v668
      %v672 = vsel %vm584, 0, %v670
      %v673 = vcosq.f32.pop %v671
      %v674 = vsinq.f32.pop %v671
      %vm675 = vweird.f32 %v463
      %v676 = vadd.s32 %v672, 3
      %v677 = vand.u32 %v676, 3
      %vm678 = vcmp.lt.s32.totalorder %v677, 2
      %vm679 = vcmp.eq.s32.totalorder %v677, 0
      %v680 = vxor.u32 %v674, 2147483648
      %v681 = vsel %vm679, %v673, %v680
      %vm682 = vcmp.eq.s32.totalorder %v677, 2
      %v683 = vxor.u32 %v673, 2147483648
      %v684 = vsel %vm682, %v683, %v674
      %v685 = vsel %vm678, %v681, %v684
      %v686 = vsel %vm675, nan, %v685
      %v687 = vand.u32 2147483647, %v464
      %vm688 = vcmp.le.f32.partialorder %v687, 0.7853982
      %vm689 = vcmp.lt.s32.totalorder %v464, 0
      %v690 = vand.u32 %v464, 2139095040
      %v691 = vshrl.u32 %v690, 23
      %v692 = vsub.s32 %v691, 127
      %v693 = vand.u32 2147483647, %v464
      %v694 = vand.u32 %v693, 8388607
      %v695 = vor.u32 %v694, 8388608
      %v696 = vsub.s32 0, %v695
      %v697 = vadd.s32 %v692, 1
      %vm698 = vcmp.gt.s32.totalorder %v697, 0
      %v699 = vsel %vm698, %v697, 0
      %v700 = vshrl.u32 %v699, 5
      %v701 = vand.u32 %v699, 31
      %v702 = vsub.s32 32, %v701
      %v703 = vshrl.u32 683565275, %v702
      %v704 = vshll.u32 683565275, %v701
      %v705 = vshrl.u32 2475754826, %v702
      %v706 = vor.u32 %v704, %v705
      %v707 = vshll.u32 2475754826, %v701
      %v708 = vshrl.u32 2131351028, %v702
      %v709 = vor.u32 %v707, %v708
      %v710 = vshll.u32 2131351028, %v701
      %v711 = vshrl.u32 2102212464, %v702
      %v712 = vor.u32 %v710, %v711
      %v713 = vshll.u32 2102212464, %v701
      %v714 = vshrl.u32 920167782, %v702
      %v715 = vor.u32 %v713, %v714
      %v716 = vshll.u32 920167782, %v701
      %v717 = vshrl.u32 1326507024, %v702
      %v718 = vor.u32 %v716, %v717
      %vm719 = vcmp.lt.s32.totalorder %v700, 1
      %vm720 = vcmp.lt.s32.totalorder %v700, 2
      %vm721 = vcmp.lt.s32.totalorder %v700, 3
      %vm722 = vcmp.lt.s32.totalorder %v700, 4
      %v723 = vsel %vm719, %v703, %v706
      %v724 = vsel %vm722, %v712, 2102212464
      %v725 = vsel %vm721, %v709, %v724
      %v726 = vsel %vm720, %v723, %v725
      %v727 = vsel %vm719, %v706, %v709
      %v728 = vsel %vm722, %v715, 920167782
      %v729 = vsel %vm721, %v712, %v728
      %v730 = vsel %vm720, %v727, %v729
      %v731 = vsel %vm719, %v709, %v712
      %v732 = vsel %vm722, %v718, 1326507024
      %v733 = vsel %vm721, %v715, %v732
      %v734 = vsel %vm720, %v731, %v733
      %v735 = vshll.u32 %v695, 8
      %v736 = vmul.u32.u64.compose %v735, %v734
      %v737 = vextract.low.u32 %v736
      %v738 = vextract.high.u32 %v736
      %v739 = vmul.u32.u64.compose %v735, %v730
      %v740 = vextract.low.u32 %v739
      %v741 = vextract.high.u32 %v739
      %v742 = vmul.u32 %v735, %v726
      %v743 = vadd.s32 %v738, %v740
      %vm744 = vc.u32 %v738, %v740
      %v745 = vadd.s32 %v741, 1
      %v746 = vsel %vm744, %v745, %v741
      %v747 = vadd.s32 %v742, %v746
      %v748 = vadd.s32 %v747, 536870912
      %v749 = vshrl.u32 %v748, 30
      %v750 = vshll.u32 %v749, 30
      %v751 = vsub.s32 %v747, %v750
      %vm752 = vcmp.lt.s32.totalorder %v751, 0
      %v753 = vsub.s32 0, %v751
      %v754 = vsel %vm752, %v753, %v751
      %v755 = vclz %v754
      %v756 = vsub.s32 %v755, 2
      %vm757 = vcmp.gt.s32.totalorder 0, %v756
      %v758 = vsel %vm757, 0, %v756
      %v759 = vsub.s32 32, %v758
      %v760 = vshll.u32 %v751, %v758
      %v761 = vshrl.u32 %v743, %v759
      %v762 = vor.u32 %v760, %v761
      %v763 = vsub.s32 4294967266, %v758
      %v764 = vadd.s32 %v763, 127
      %v765 = vshll.u32 %v764, 23
      %v766 = vor.u32 4788187, %v765
      %v767 = vand.u32 2147483647, %v766
      %v769 = vcvt.s32.f32 %v762
      %v770 = vmul.f32 %v769, %v767
      %v771 = vxor.u32 %v770, 2147483648
      %v772 = vsel %vm689, %v771, %v770
      %v773 = vsub.s32 4, %v749
      %v774 = vsel %vm689, %v773, %v749
      %v775 = vsel %vm688, %v464, %v772
      %v776 = vsel %vm688, 0, %v774
      %v777 = vcosq.f32.pop %v775
      %v778 = vsinq.f32.pop %v775
      %vm779 = vweird.f32 %v464
      %v780 = vadd.s32 %v776, 3
      %v781 = vand.u32 %v780, 3
      %vm782 = vcmp.lt.s32.totalorder %v781, 2
      %vm783 = vcmp.eq.s32.totalorder %v781, 0
      %v784 = vxor.u32 %v778, 2147483648
      %v785 = vsel %vm783, %v777, %v784
      %vm786 = vcmp.eq.s32.totalorder %v781, 2
      %v787 = vxor.u32 %v777, 2147483648
      %v788 = vsel %vm786, %v787, %v778
      %v789 = vsel %vm782, %v785, %v788
      %v790 = vsel %vm779, nan, %v789
      %v791 = vand.u32 2147483647, %v465
      %vm792 = vcmp.le.f32.partialorder %v791, 0.7853982
      %vm793 = vcmp.lt.s32.totalorder %v465, 0
      %v794 = vand.u32 %v465, 2139095040
      %v795 = vshrl.u32 %v794, 23
      %v796 = vsub.s32 %v795, 127
      %v797 = vand.u32 2147483647, %v465
      %v798 = vand.u32 %v797, 8388607
      %v799 = vor.u32 %v798, 8388608
      %v800 = vsub.s32 0, %v799
      %v801 = vadd.s32 %v796, 1
      %vm802 = vcmp.gt.s32.totalorder %v801, 0
      %v803 = vsel %vm802, %v801, 0
      %v804 = vshrl.u32 %v803, 5
      %v805 = vand.u32 %v803, 31
      %v806 = vsub.s32 32, %v805
      %v807 = vshrl.u32 683565275, %v806
      %v808 = vshll.u32 683565275, %v805
      %v809 = vshrl.u32 2475754826, %v806
      %v810 = vor.u32 %v808, %v809
      %v811 = vshll.u32 2475754826, %v805
      %v812 = vshrl.u32 2131351028, %v806
      %v813 = vor.u32 %v811, %v812
      %v814 = vshll.u32 2131351028, %v805
      %v815 = vshrl.u32 2102212464, %v806
      %v816 = vor.u32 %v814, %v815
      %v817 = vshll.u32 2102212464, %v805
      %v818 = vshrl.u32 920167782, %v806
      %v819 = vor.u32 %v817, %v818
      %v820 = vshll.u32 920167782, %v805
      %v821 = vshrl.u32 1326507024, %v806
      %v822 = vor.u32 %v820, %v821
      %vm823 = vcmp.lt.s32.totalorder %v804, 1
      %vm824 = vcmp.lt.s32.totalorder %v804, 2
      %vm825 = vcmp.lt.s32.totalorder %v804, 3
      %vm826 = vcmp.lt.s32.totalorder %v804, 4
      %v827 = vsel %vm823, %v807, %v810
      %v828 = vsel %vm826, %v816, 2102212464
      %v829 = vsel %vm825, %v813, %v828
      %v830 = vsel %vm824, %v827, %v829
      %v831 = vsel %vm823, %v810, %v813
      %v832 = vsel %vm826, %v819, 920167782
      %v833 = vsel %vm825, %v816, %v832
      %v834 = vsel %vm824, %v831, %v833
      %v835 = vsel %vm823, %v813, %v816
      %v836 = vsel %vm826, %v822, 1326507024
      %v837 = vsel %vm825, %v819, %v836
      %v838 = vsel %vm824, %v835, %v837
      %v839 = vshll.u32 %v799, 8
      %v840 = vmul.u32.u64.compose %v839, %v838
      %v841 = vextract.low.u32 %v840
      %v842 = vextract.high.u32 %v840
      %v843 = vmul.u32.u64.compose %v839, %v834
      %v844 = vextract.low.u32 %v843
      %v845 = vextract.high.u32 %v843
      %v846 = vmul.u32 %v839, %v830
      %v847 = vadd.s32 %v842, %v844
      %vm848 = vc.u32 %v842, %v844
      %v849 = vadd.s32 %v845, 1
      %v850 = vsel %vm848, %v849, %v845
      %v851 = vadd.s32 %v846, %v850
      %v852 = vadd.s32 %v851, 536870912
      %v853 = vshrl.u32 %v852, 30
      %v854 = vshll.u32 %v853, 30
      %v855 = vsub.s32 %v851, %v854
      %vm856 = vcmp.lt.s32.totalorder %v855, 0
      %v857 = vsub.s32 0, %v855
      %v858 = vsel %vm856, %v857, %v855
      %v859 = vclz %v858
      %v860 = vsub.s32 %v859, 2
      %vm861 = vcmp.gt.s32.totalorder 0, %v860
      %v862 = vsel %vm861, 0, %v860
      %v863 = vsub.s32 32, %v862
      %v864 = vshll.u32 %v855, %v862
      %v865 = vshrl.u32 %v847, %v863
      %v866 = vor.u32 %v864, %v865
      %v867 = vsub.s32 4294967266, %v862
      %v868 = vadd.s32 %v867, 127
      %v869 = vshll.u32 %v868, 23
      %v870 = vor.u32 4788187, %v869
      %v871 = vand.u32 2147483647, %v870
      %v873 = vcvt.s32.f32 %v866
      %v874 = vmul.f32 %v873, %v871
      %v875 = vxor.u32 %v874, 2147483648
      %v876 = vsel %vm793, %v875, %v874
      %v877 = vsub.s32 4, %v853
      %v878 = vsel %vm793, %v877, %v853
      %v879 = vsel %vm792, %v465, %v876
      %v880 = vsel %vm792, 0, %v878
      %v881 = vcosq.f32.pop %v879
      %v882 = vsinq.f32.pop %v879
      %vm883 = vweird.f32 %v465
      %v884 = vadd.s32 %v880, 3
      %v885 = vand.u32 %v884, 3
      %vm886 = vcmp.lt.s32.totalorder %v885, 2
      %vm887 = vcmp.eq.s32.totalorder %v885, 0
      %v888 = vxor.u32 %v882, 2147483648
      %v889 = vsel %vm887, %v881, %v888
      %vm890 = vcmp.eq.s32.totalorder %v885, 2
      %v891 = vxor.u32 %v881, 2147483648
      %v892 = vsel %vm890, %v891, %v882
      %v893 = vsel %vm886, %v889, %v892
      %v894 = vsel %vm883, nan, %v893
      %v895 = vand.u32 2147483647, %v466
      %vm896 = vcmp.le.f32.partialorder %v895, 0.7853982
      %vm897 = vcmp.lt.s32.totalorder %v466, 0
      %v898 = vand.u32 %v466, 2139095040
      %v899 = vshrl.u32 %v898, 23
      %v900 = vsub.s32 %v899, 127
      %v901 = vand.u32 2147483647, %v466
      %v902 = vand.u32 %v901, 8388607
      %v903 = vor.u32 %v902, 8388608
      %v904 = vsub.s32 0, %v903
      %v905 = vadd.s32 %v900, 1
      %vm906 = vcmp.gt.s32.totalorder %v905, 0
      %v907 = vsel %vm906, %v905, 0
      %v908 = vshrl.u32 %v907, 5
      %v909 = vand.u32 %v907, 31
      %v910 = vsub.s32 32, %v909
      %v911 = vshrl.u32 683565275, %v910
      %v912 = vshll.u32 683565275, %v909
      %v913 = vshrl.u32 2475754826, %v910
      %v914 = vor.u32 %v912, %v913
      %v915 = vshll.u32 2475754826, %v909
      %v916 = vshrl.u32 2131351028, %v910
      %v917 = vor.u32 %v915, %v916
      %v918 = vshll.u32 2131351028, %v909
      %v919 = vshrl.u32 2102212464, %v910
      %v920 = vor.u32 %v918, %v919
      %v921 = vshll.u32 2102212464, %v909
      %v922 = vshrl.u32 920167782, %v910
      %v923 = vor.u32 %v921, %v922
      %v924 = vshll.u32 920167782, %v909
      %v925 = vshrl.u32 1326507024, %v910
      %v926 = vor.u32 %v924, %v925
      %vm927 = vcmp.lt.s32.totalorder %v908, 1
      %vm928 = vcmp.lt.s32.totalorder %v908, 2
      %vm929 = vcmp.lt.s32.totalorder %v908, 3
      %vm930 = vcmp.lt.s32.totalorder %v908, 4
      %v931 = vsel %vm927, %v911, %v914
      %v932 = vsel %vm930, %v920, 2102212464
      %v933 = vsel %vm929, %v917, %v932
      %v934 = vsel %vm928, %v931, %v933
      %v935 = vsel %vm927, %v914, %v917
      %v936 = vsel %vm930, %v923, 920167782
      %v937 = vsel %vm929, %v920, %v936
      %v938 = vsel %vm928, %v935, %v937
      %v939 = vsel %vm927, %v917, %v920
      %v940 = vsel %vm930, %v926, 1326507024
      %v941 = vsel %vm929, %v923, %v940
      %v942 = vsel %vm928, %v939, %v941
      %v943 = vshll.u32 %v903, 8
      %v944 = vmul.u32.u64.compose %v943, %v942
      %v945 = vextract.low.u32 %v944
      %v946 = vextract.high.u32 %v944
      %v947 = vmul.u32.u64.compose %v943, %v938
      %v948 = vextract.low.u32 %v947
      %v949 = vextract.high.u32 %v947
      %v950 = vmul.u32 %v943, %v934
      %v951 = vadd.s32 %v946, %v948
      %vm952 = vc.u32 %v946, %v948
      %v953 = vadd.s32 %v949, 1
      %v954 = vsel %vm952, %v953, %v949
      %v955 = vadd.s32 %v950, %v954
      %v956 = vadd.s32 %v955, 536870912
      %v957 = vshrl.u32 %v956, 30
      %v958 = vshll.u32 %v957, 30
      %v959 = vsub.s32 %v955, %v958
      %vm960 = vcmp.lt.s32.totalorder %v959, 0
      %v961 = vsub.s32 0, %v959
      %v962 = vsel %vm960, %v961, %v959
      %v963 = vclz %v962
      %v964 = vsub.s32 %v963, 2
      %vm965 = vcmp.gt.s32.totalorder 0, %v964
      %v966 = vsel %vm965, 0, %v964
      %v967 = vsub.s32 32, %v966
      %v968 = vshll.u32 %v959, %v966
      %v969 = vshrl.u32 %v951, %v967
      %v970 = vor.u32 %v968, %v969
      %v971 = vsub.s32 4294967266, %v966
      %v972 = vadd.s32 %v971, 127
      %v973 = vshll.u32 %v972, 23
      %v974 = vor.u32 4788187, %v973
      %v975 = vand.u32 2147483647, %v974
      %v977 = vcvt.s32.f32 %v970
      %v978 = vmul.f32 %v977, %v975
      %v979 = vxor.u32 %v978, 2147483648
      %v980 = vsel %vm897, %v979, %v978
      %v981 = vsub.s32 4, %v957
      %v982 = vsel %vm897, %v981, %v957
      %v983 = vsel %vm896, %v466, %v980
      %v984 = vsel %vm896, 0, %v982
      %v985 = vcosq.f32.pop %v983
      %v986 = vsinq.f32.pop %v983
      %vm987 = vweird.f32 %v466
      %v988 = vadd.s32 %v984, 3
      %v989 = vand.u32 %v988, 3
      %vm990 = vcmp.lt.s32.totalorder %v989, 2
      %vm991 = vcmp.eq.s32.totalorder %v989, 0
      %v992 = vxor.u32 %v986, 2147483648
      %v993 = vsel %vm991, %v985, %v992
      %vm994 = vcmp.eq.s32.totalorder %v989, 2
      %v995 = vxor.u32 %v985, 2147483648
      %v996 = vsel %vm994, %v995, %v986
      %v997 = vsel %vm990, %v993, %v996
      %v998 = vsel %vm987, nan, %v997
      %v999 = vand.u32 2147483647, %v467
      %vm1000 = vcmp.le.f32.partialorder %v999, 0.7853982
      %vm1001 = vcmp.lt.s32.totalorder %v467, 0
      %v1002 = vand.u32 %v467, 2139095040
      %v1003 = vshrl.u32 %v1002, 23
      %v1004 = vsub.s32 %v1003, 127
      %v1005 = vand.u32 2147483647, %v467
      %v1006 = vand.u32 %v1005, 8388607
      %v1007 = vor.u32 %v1006, 8388608
      %v1008 = vsub.s32 0, %v1007
      %v1009 = vadd.s32 %v1004, 1
      %vm1010 = vcmp.gt.s32.totalorder %v1009, 0
      %v1011 = vsel %vm1010, %v1009, 0
      %v1012 = vshrl.u32 %v1011, 5
      %v1013 = vand.u32 %v1011, 31
      %v1014 = vsub.s32 32, %v1013
      %v1015 = vshrl.u32 683565275, %v1014
      %v1016 = vshll.u32 683565275, %v1013
      %v1017 = vshrl.u32 2475754826, %v1014
      %v1018 = vor.u32 %v1016, %v1017
      %v1019 = vshll.u32 2475754826, %v1013
      %v1020 = vshrl.u32 2131351028, %v1014
      %v1021 = vor.u32 %v1019, %v1020
      %v1022 = vshll.u32 2131351028, %v1013
      %v1023 = vshrl.u32 2102212464, %v1014
      %v1024 = vor.u32 %v1022, %v1023
      %v1025 = vshll.u32 2102212464, %v1013
      %v1026 = vshrl.u32 920167782, %v1014
      %v1027 = vor.u32 %v1025, %v1026
      %v1028 = vshll.u32 920167782, %v1013
      %v1029 = vshrl.u32 1326507024, %v1014
      %v1030 = vor.u32 %v1028, %v1029
      %vm1031 = vcmp.lt.s32.totalorder %v1012, 1
      %vm1032 = vcmp.lt.s32.totalorder %v1012, 2
      %vm1033 = vcmp.lt.s32.totalorder %v1012, 3
      %vm1034 = vcmp.lt.s32.totalorder %v1012, 4
      %v1035 = vsel %vm1031, %v1015, %v1018
      %v1036 = vsel %vm1034, %v1024, 2102212464
      %v1037 = vsel %vm1033, %v1021, %v1036
      %v1038 = vsel %vm1032, %v1035, %v1037
      %v1039 = vsel %vm1031, %v1018, %v1021
      %v1040 = vsel %vm1034, %v1027, 920167782
      %v1041 = vsel %vm1033, %v1024, %v1040
      %v1042 = vsel %vm1032, %v1039, %v1041
      %v1043 = vsel %vm1031, %v1021, %v1024
      %v1044 = vsel %vm1034, %v1030, 1326507024
      %v1045 = vsel %vm1033, %v1027, %v1044
      %v1046 = vsel %vm1032, %v1043, %v1045
      %v1047 = vshll.u32 %v1007, 8
      %v1048 = vmul.u32.u64.compose %v1047, %v1046
      %v1049 = vextract.low.u32 %v1048
      %v1050 = vextract.high.u32 %v1048
      %v1051 = vmul.u32.u64.compose %v1047, %v1042
      %v1052 = vextract.low.u32 %v1051
      %v1053 = vextract.high.u32 %v1051
      %v1054 = vmul.u32 %v1047, %v1038
      %v1055 = vadd.s32 %v1050, %v1052
      %vm1056 = vc.u32 %v1050, %v1052
      %v1057 = vadd.s32 %v1053, 1
      %v1058 = vsel %vm1056, %v1057, %v1053
      %v1059 = vadd.s32 %v1054, %v1058
      %v1060 = vadd.s32 %v1059, 536870912
      %v1061 = vshrl.u32 %v1060, 30
      %v1062 = vshll.u32 %v1061, 30
      %v1063 = vsub.s32 %v1059, %v1062
      %vm1064 = vcmp.lt.s32.totalorder %v1063, 0
      %v1065 = vsub.s32 0, %v1063
      %v1066 = vsel %vm1064, %v1065, %v1063
      %v1067 = vclz %v1066
      %v1068 = vsub.s32 %v1067, 2
      %vm1069 = vcmp.gt.s32.totalorder 0, %v1068
      %v1070 = vsel %vm1069, 0, %v1068
      %v1071 = vsub.s32 32, %v1070
      %v1072 = vshll.u32 %v1063, %v1070
      %v1073 = vshrl.u32 %v1055, %v1071
      %v1074 = vor.u32 %v1072, %v1073
      %v1075 = vsub.s32 4294967266, %v1070
      %v1076 = vadd.s32 %v1075, 127
      %v1077 = vshll.u32 %v1076, 23
      %v1078 = vor.u32 4788187, %v1077
      %v1079 = vand.u32 2147483647, %v1078
      %v1081 = vcvt.s32.f32 %v1074
      %v1082 = vmul.f32 %v1081, %v1079
      %v1083 = vxor.u32 %v1082, 2147483648
      %v1084 = vsel %vm1001, %v1083, %v1082
      %v1085 = vsub.s32 4, %v1061
      %v1086 = vsel %vm1001, %v1085, %v1061
      %v1087 = vsel %vm1000, %v467, %v1084
      %v1088 = vsel %vm1000, 0, %v1086
      %v1089 = vcosq.f32.pop %v1087
      %v1090 = vsinq.f32.pop %v1087
      %vm1091 = vweird.f32 %v467
      %v1092 = vadd.s32 %v1088, 3
      %v1093 = vand.u32 %v1092, 3
      %vm1094 = vcmp.lt.s32.totalorder %v1093, 2
      %vm1095 = vcmp.eq.s32.totalorder %v1093, 0
      %v1096 = vxor.u32 %v1090, 2147483648
      %v1097 = vsel %vm1095, %v1089, %v1096
      %vm1098 = vcmp.eq.s32.totalorder %v1093, 2
      %v1099 = vxor.u32 %v1089, 2147483648
      %v1100 = vsel %vm1098, %v1099, %v1090
      %v1101 = vsel %vm1094, %v1097, %v1100
      %v1102 = vsel %vm1091, nan, %v1101
      %v1103 = vand.u32 2147483647, %v468
      %vm1104 = vcmp.le.f32.partialorder %v1103, 0.7853982
      %vm1105 = vcmp.lt.s32.totalorder %v468, 0
      %v1106 = vand.u32 %v468, 2139095040
      %v1107 = vshrl.u32 %v1106, 23
      %v1108 = vsub.s32 %v1107, 127
      %v1109 = vand.u32 2147483647, %v468
      %v1110 = vand.u32 %v1109, 8388607
      %v1111 = vor.u32 %v1110, 8388608
      %v1112 = vsub.s32 0, %v1111
      %v1113 = vadd.s32 %v1108, 1
      %vm1114 = vcmp.gt.s32.totalorder %v1113, 0
      %v1115 = vsel %vm1114, %v1113, 0
      %v1116 = vshrl.u32 %v1115, 5
      %v1117 = vand.u32 %v1115, 31
      %v1118 = vsub.s32 32, %v1117
      %v1119 = vshrl.u32 683565275, %v1118
      %v1120 = vshll.u32 683565275, %v1117
      %v1121 = vshrl.u32 2475754826, %v1118
      %v1122 = vor.u32 %v1120, %v1121
      %v1123 = vshll.u32 2475754826, %v1117
      %v1124 = vshrl.u32 2131351028, %v1118
      %v1125 = vor.u32 %v1123, %v1124
      %v1126 = vshll.u32 2131351028, %v1117
      %v1127 = vshrl.u32 2102212464, %v1118
      %v1128 = vor.u32 %v1126, %v1127
      %v1129 = vshll.u32 2102212464, %v1117
      %v1130 = vshrl.u32 920167782, %v1118
      %v1131 = vor.u32 %v1129, %v1130
      %v1132 = vshll.u32 920167782, %v1117
      %v1133 = vshrl.u32 1326507024, %v1118
      %v1134 = vor.u32 %v1132, %v1133
      %vm1135 = vcmp.lt.s32.totalorder %v1116, 1
      %vm1136 = vcmp.lt.s32.totalorder %v1116, 2
      %vm1137 = vcmp.lt.s32.totalorder %v1116, 3
      %vm1138 = vcmp.lt.s32.totalorder %v1116, 4
      %v1139 = vsel %vm1135, %v1119, %v1122
      %v1140 = vsel %vm1138, %v1128, 2102212464
      %v1141 = vsel %vm1137, %v1125, %v1140
      %v1142 = vsel %vm1136, %v1139, %v1141
      %v1143 = vsel %vm1135, %v1122, %v1125
      %v1144 = vsel %vm1138, %v1131, 920167782
      %v1145 = vsel %vm1137, %v1128, %v1144
      %v1146 = vsel %vm1136, %v1143, %v1145
      %v1147 = vsel %vm1135, %v1125, %v1128
      %v1148 = vsel %vm1138, %v1134, 1326507024
      %v1149 = vsel %vm1137, %v1131, %v1148
      %v1150 = vsel %vm1136, %v1147, %v1149
      %v1151 = vshll.u32 %v1111, 8
      %v1152 = vmul.u32.u64.compose %v1151, %v1150
      %v1153 = vextract.low.u32 %v1152
      %v1154 = vextract.high.u32 %v1152
      %v1155 = vmul.u32.u64.compose %v1151, %v1146
      %v1156 = vextract.low.u32 %v1155
      %v1157 = vextract.high.u32 %v1155
      %v1158 = vmul.u32 %v1151, %v1142
      %v1159 = vadd.s32 %v1154, %v1156
      %vm1160 = vc.u32 %v1154, %v1156
      %v1161 = vadd.s32 %v1157, 1
      %v1162 = vsel %vm1160, %v1161, %v1157
      %v1163 = vadd.s32 %v1158, %v1162
      %v1164 = vadd.s32 %v1163, 536870912
      %v1165 = vshrl.u32 %v1164, 30
      %v1166 = vshll.u32 %v1165, 30
      %v1167 = vsub.s32 %v1163, %v1166
      %vm1168 = vcmp.lt.s32.totalorder %v1167, 0
      %v1169 = vsub.s32 0, %v1167
      %v1170 = vsel %vm1168, %v1169, %v1167
      %v1171 = vclz %v1170
      %v1172 = vsub.s32 %v1171, 2
      %vm1173 = vcmp.gt.s32.totalorder 0, %v1172
      %v1174 = vsel %vm1173, 0, %v1172
      %v1175 = vsub.s32 32, %v1174
      %v1176 = vshll.u32 %v1167, %v1174
      %v1177 = vshrl.u32 %v1159, %v1175
      %v1178 = vor.u32 %v1176, %v1177
      %v1179 = vsub.s32 4294967266, %v1174
      %v1180 = vadd.s32 %v1179, 127
      %v1181 = vshll.u32 %v1180, 23
      %v1182 = vor.u32 4788187, %v1181
      %v1183 = vand.u32 2147483647, %v1182
      %v1185 = vcvt.s32.f32 %v1178
      %v1186 = vmul.f32 %v1185, %v1183
      %v1187 = vxor.u32 %v1186, 2147483648
      %v1188 = vsel %vm1105, %v1187, %v1186
      %v1189 = vsub.s32 4, %v1165
      %v1190 = vsel %vm1105, %v1189, %v1165
      %v1191 = vsel %vm1104, %v468, %v1188
      %v1192 = vsel %vm1104, 0, %v1190
      %v1193 = vcosq.f32.pop %v1191
      %v1194 = vsinq.f32.pop %v1191
      %vm1195 = vweird.f32 %v468
      %v1196 = vadd.s32 %v1192, 3
      %v1197 = vand.u32 %v1196, 3
      %vm1198 = vcmp.lt.s32.totalorder %v1197, 2
      %vm1199 = vcmp.eq.s32.totalorder %v1197, 0
      %v1200 = vxor.u32 %v1194, 2147483648
      %v1201 = vsel %vm1199, %v1193, %v1200
      %vm1202 = vcmp.eq.s32.totalorder %v1197, 2
      %v1203 = vxor.u32 %v1193, 2147483648
      %v1204 = vsel %vm1202, %v1203, %v1194
      %v1205 = vsel %vm1198, %v1201, %v1204
      %v1206 = vsel %vm1195, nan, %v1205
      %v1207 = vand.u32 2147483647, %v469
      %vm1208 = vcmp.le.f32.partialorder %v1207, 0.7853982
      %vm1209 = vcmp.lt.s32.totalorder %v469, 0
      %v1210 = vand.u32 %v469, 2139095040
      %v1211 = vshrl.u32 %v1210, 23
      %v1212 = vsub.s32 %v1211, 127
      %v1213 = vand.u32 2147483647, %v469
      %v1214 = vand.u32 %v1213, 8388607
      %v1215 = vor.u32 %v1214, 8388608
      %v1216 = vsub.s32 0, %v1215
      %v1217 = vadd.s32 %v1212, 1
      %vm1218 = vcmp.gt.s32.totalorder %v1217, 0
      %v1219 = vsel %vm1218, %v1217, 0
      %v1220 = vshrl.u32 %v1219, 5
      %v1221 = vand.u32 %v1219, 31
      %v1222 = vsub.s32 32, %v1221
      %v1223 = vshrl.u32 683565275, %v1222
      %v1224 = vshll.u32 683565275, %v1221
      %v1225 = vshrl.u32 2475754826, %v1222
      %v1226 = vor.u32 %v1224, %v1225
      %v1227 = vshll.u32 2475754826, %v1221
      %v1228 = vshrl.u32 2131351028, %v1222
      %v1229 = vor.u32 %v1227, %v1228
      %v1230 = vshll.u32 2131351028, %v1221
      %v1231 = vshrl.u32 2102212464, %v1222
      %v1232 = vor.u32 %v1230, %v1231
      %v1233 = vshll.u32 2102212464, %v1221
      %v1234 = vshrl.u32 920167782, %v1222
      %v1235 = vor.u32 %v1233, %v1234
      %v1236 = vshll.u32 920167782, %v1221
      %v1237 = vshrl.u32 1326507024, %v1222
      %v1238 = vor.u32 %v1236, %v1237
      %vm1239 = vcmp.lt.s32.totalorder %v1220, 1
      %vm1240 = vcmp.lt.s32.totalorder %v1220, 2
      %vm1241 = vcmp.lt.s32.totalorder %v1220, 3
      %vm1242 = vcmp.lt.s32.totalorder %v1220, 4
      %v1243 = vsel %vm1239, %v1223, %v1226
      %v1244 = vsel %vm1242, %v1232, 2102212464
      %v1245 = vsel %vm1241, %v1229, %v1244
      %v1246 = vsel %vm1240, %v1243, %v1245
      %v1247 = vsel %vm1239, %v1226, %v1229
      %v1248 = vsel %vm1242, %v1235, 920167782
      %v1249 = vsel %vm1241, %v1232, %v1248
      %v1250 = vsel %vm1240, %v1247, %v1249
      %v1251 = vsel %vm1239, %v1229, %v1232
      %v1252 = vsel %vm1242, %v1238, 1326507024
      %v1253 = vsel %vm1241, %v1235, %v1252
      %v1254 = vsel %vm1240, %v1251, %v1253
      %v1255 = vshll.u32 %v1215, 8
      %v1256 = vmul.u32.u64.compose %v1255, %v1254
      %v1257 = vextract.low.u32 %v1256
      %v1258 = vextract.high.u32 %v1256
      %v1259 = vmul.u32.u64.compose %v1255, %v1250
      %v1260 = vextract.low.u32 %v1259
      %v1261 = vextract.high.u32 %v1259
      %v1262 = vmul.u32 %v1255, %v1246
      %v1263 = vadd.s32 %v1258, %v1260
      %vm1264 = vc.u32 %v1258, %v1260
      %v1265 = vadd.s32 %v1261, 1
      %v1266 = vsel %vm1264, %v1265, %v1261
      %v1267 = vadd.s32 %v1262, %v1266
      %v1268 = vadd.s32 %v1267, 536870912
      %v1269 = vshrl.u32 %v1268, 30
      %v1270 = vshll.u32 %v1269, 30
      %v1271 = vsub.s32 %v1267, %v1270
      %vm1272 = vcmp.lt.s32.totalorder %v1271, 0
      %v1273 = vsub.s32 0, %v1271
      %v1274 = vsel %vm1272, %v1273, %v1271
      %v1275 = vclz %v1274
      %v1276 = vsub.s32 %v1275, 2
      %vm1277 = vcmp.gt.s32.totalorder 0, %v1276
      %v1278 = vsel %vm1277, 0, %v1276
      %v1279 = vsub.s32 32, %v1278
      %v1280 = vshll.u32 %v1271, %v1278
      %v1281 = vshrl.u32 %v1263, %v1279
      %v1282 = vor.u32 %v1280, %v1281
      %v1283 = vsub.s32 4294967266, %v1278
      %v1284 = vadd.s32 %v1283, 127
      %v1285 = vshll.u32 %v1284, 23
      %v1286 = vor.u32 4788187, %v1285
      %v1287 = vand.u32 2147483647, %v1286
      %v1289 = vcvt.s32.f32 %v1282
      %v1290 = vmul.f32 %v1289, %v1287
      %v1291 = vxor.u32 %v1290, 2147483648
      %v1292 = vsel %vm1209, %v1291, %v1290
      %v1293 = vsub.s32 4, %v1269
      %v1294 = vsel %vm1209, %v1293, %v1269
      %v1295 = vsel %vm1208, %v469, %v1292
      %v1296 = vsel %vm1208, 0, %v1294
      %v1297 = vcosq.f32.pop %v1295
      %v1298 = vsinq.f32.pop %v1295
      %vm1299 = vweird.f32 %v469
      %v1300 = vadd.s32 %v1296, 3
      %v1301 = vand.u32 %v1300, 3
      %vm1302 = vcmp.lt.s32.totalorder %v1301, 2
      %vm1303 = vcmp.eq.s32.totalorder %v1301, 0
      %v1304 = vxor.u32 %v1298, 2147483648
      %v1305 = vsel %vm1303, %v1297, %v1304
      %vm1306 = vcmp.eq.s32.totalorder %v1301, 2
      %v1307 = vxor.u32 %v1297, 2147483648
      %v1308 = vsel %vm1306, %v1307, %v1298
      %v1309 = vsel %vm1302, %v1305, %v1308
      %v1310 = vsel %vm1299, nan, %v1309
      %v1311 = vsel %vm475, 1, 0
      %v1312 = vsel %vm476, 1, 0
      %v1313 = vsel %vm477, 1, 0
      %v1314 = vsel %vm478, 1, 0
      %vm1315 = vcmp.eq.s32.totalorder %v1311, 1
      %vm1316 = vcmp.eq.s32.totalorder %v1312, 1
      %vm1317 = vcmp.eq.s32.totalorder %v1313, 1
      %vm1318 = vcmp.eq.s32.totalorder %v1314, 1
      %v1319 = vsel %vm1315, %v462, %v582
      %v1320 = vsel %vm1315, %v463, %v686
      %v1321 = vsel %vm1316, %v464, %v790
      %v1322 = vsel %vm1316, %v465, %v894
      %v1323 = vsel %vm1317, %v466, %v998
      %v1324 = vsel %vm1317, %v467, %v1102
      %v1325 = vsel %vm1318, %v468, %v1206
      %v1326 = vsel %vm1318, %v469, %v1310
      %v1327 = vld [vmem:[%s3] sm:$0xff]
      %v1328 = vld [vmem:[%s3 + $0x8] sm:$0xff]
      %v1329 = vld [vmem:[%s3 + $0x10] sm:$0xff]
      %v1330 = vld [vmem:[%s3 + $0x18] sm:$0xff]
      %v1331 = vld [vmem:[%s3 + $0x20] sm:$0xff]
      %v1332 = vld [vmem:[%s3 + $0x28] sm:$0xff]
      %v1333 = vld [vmem:[%s3 + $0x30] sm:$0xff]
      %v1334 = vld [vmem:[%s3 + $0x38] sm:$0xff]
      %v1335 = vld [vmem:[%s3 + $0x40] sm:$0xff]
      %v1336 = vld [vmem:[%s3 + $0x48] sm:$0xff]
      %v1337 = vld [vmem:[%s3 + $0x50] sm:$0xff]
      %v1338 = vld [vmem:[%s3 + $0x58] sm:$0xff]
      %v1339 = vld [vmem:[%s3 + $0x60] sm:$0xff]
      %v1340 = vld [vmem:[%s3 + $0x68] sm:$0xff]
      %v1341 = vld [vmem:[%s3 + $0x70] sm:$0xff]
      %v1342 = vld [vmem:[%s3 + $0x78] sm:$0xff]
      %v1343 = vld [vmem:[%s4] sm:$0xff]
      %v1344 = vld [vmem:[%s4 + $0x8] sm:$0xff]
      %v1345 = vld [vmem:[%s4 + $0x10] sm:$0xff]
      %v1346 = vld [vmem:[%s4 + $0x18] sm:$0xff]
      %v1347 = vld [vmem:[%s4 + $0x20] sm:$0xff]
      %v1348 = vld [vmem:[%s4 + $0x28] sm:$0xff]
      %v1349 = vld [vmem:[%s4 + $0x30] sm:$0xff]
      %v1350 = vld [vmem:[%s4 + $0x38] sm:$0xff]
      %v1351 = vld [vmem:[%s4 + $0x40] sm:$0xff]
      %v1352 = vld [vmem:[%s4 + $0x48] sm:$0xff]
      %v1353 = vld [vmem:[%s4 + $0x50] sm:$0xff]
      %v1354 = vld [vmem:[%s4 + $0x58] sm:$0xff]
      %v1355 = vld [vmem:[%s4 + $0x60] sm:$0xff]
      %v1356 = vld [vmem:[%s4 + $0x68] sm:$0xff]
      %v1357 = vld [vmem:[%s4 + $0x70] sm:$0xff]
      %v1358 = vld [vmem:[%s4 + $0x78] sm:$0xff]
      %1360 = vset.pattern.permute.xlu0 0
      %1361 = vperm.xlu0 %1360, %v1343
      %v1362 = vpop.permute.xlu0 %1361
      %1365 = vset.pattern.permute.xlu0 0
      %1366 = vperm.xlu0 %1365, %v1344
      %v1367 = vpop.permute.xlu0 %1366
      %1370 = vset.pattern.permute.xlu0 0
      %1371 = vperm.xlu0 %1370, %v1345
      %v1372 = vpop.permute.xlu0 %1371
      %1375 = vset.pattern.permute.xlu0 0
      %1376 = vperm.xlu0 %1375, %v1346
      %v1377 = vpop.permute.xlu0 %1376
      %1380 = vset.pattern.permute.xlu0 0
      %1381 = vperm.xlu0 %1380, %v1347
      %v1382 = vpop.permute.xlu0 %1381
      %1385 = vset.pattern.permute.xlu0 0
      %1386 = vperm.xlu0 %1385, %v1348
      %v1387 = vpop.permute.xlu0 %1386
      %1390 = vset.pattern.permute.xlu0 0
      %1391 = vperm.xlu0 %1390, %v1349
      %v1392 = vpop.permute.xlu0 %1391
      %1395 = vset.pattern.permute.xlu0 0
      %1396 = vperm.xlu0 %1395, %v1350
      %v1397 = vpop.permute.xlu0 %1396
      %1400 = vset.pattern.permute.xlu0 0
      %1401 = vperm.xlu0 %1400, %v1351
      %v1402 = vpop.permute.xlu0 %1401
      %1405 = vset.pattern.permute.xlu0 0
      %1406 = vperm.xlu0 %1405, %v1352
      %v1407 = vpop.permute.xlu0 %1406
      %1410 = vset.pattern.permute.xlu0 0
      %1411 = vperm.xlu0 %1410, %v1353
      %v1412 = vpop.permute.xlu0 %1411
      %1415 = vset.pattern.permute.xlu0 0
      %1416 = vperm.xlu0 %1415, %v1354
      %v1417 = vpop.permute.xlu0 %1416
      %1420 = vset.pattern.permute.xlu0 0
      %1421 = vperm.xlu0 %1420, %v1355
      %v1422 = vpop.permute.xlu0 %1421
      %1425 = vset.pattern.permute.xlu0 0
      %1426 = vperm.xlu0 %1425, %v1356
      %v1427 = vpop.permute.xlu0 %1426
      %1430 = vset.pattern.permute.xlu0 0
      %1431 = vperm.xlu0 %1430, %v1357
      %v1432 = vpop.permute.xlu0 %1431
      %1435 = vset.pattern.permute.xlu0 0
      %1436 = vperm.xlu0 %1435, %v1358
      %v1437 = vpop.permute.xlu0 %1436
      %vm1439 = vcmask 211968
      %v1441 = vsel %vm1439, %v1327, 0
      %v1444 = vsel %vm1439, %v1328, 0
      %v1447 = vsel %vm1439, %v1329, 0
      %v1450 = vsel %vm1439, %v1330, 0
      %v1453 = vsel %vm1439, %v1331, 0
      %v1456 = vsel %vm1439, %v1332, 0
      %v1459 = vsel %vm1439, %v1333, 0
      %v1462 = vsel %vm1439, %v1334, 0
      %v1465 = vsel %vm1439, %v1335, 0
      %v1468 = vsel %vm1439, %v1336, 0
      %v1471 = vsel %vm1439, %v1337, 0
      %v1474 = vsel %vm1439, %v1338, 0
      %v1477 = vsel %vm1439, %v1339, 0
      %v1480 = vsel %vm1439, %v1340, 0
      %v1483 = vsel %vm1439, %v1341, 0
      %v1486 = vsel %vm1439, %v1342, 0
      %vm1488 = vcmask 1041408
      %v1490 = vsel %vm1488, %v1325, 0
      %v1493 = vsel %vm1488, %v1326, 0
      %v1495 = vand.u32 %v1320, 4294901760
      %1496 = vmatprep.subr.mxu0 %v1495
      %v1497 = vand.u32 %v1319, 4294901760
      %1498 = vmatpush1.msra.mxu0 %v1497
      %v1499 = vand.u32 %v1322, 4294901760
      %1500 = vmatprep.subr.mxu0 %v1499
      %v1501 = vand.u32 %v1321, 4294901760
      %1502 = vmatpush1.msra.mxu0 %v1501
      %v1503 = vand.u32 %v1324, 4294901760
      %1504 = vmatprep.subr.mxu0 %v1503
      %v1505 = vand.u32 %v1323, 4294901760
      %1506 = vmatpush1.msra.mxu0 %v1505
      %v1507 = vand.u32 %v1493, 4294901760
      %1508 = vmatprep.subr.mxu0 %v1507
      %v1509 = vand.u32 %v1490, 4294901760
      %1510 = vmatpush1.msra.mxu0 %v1509
      %1511 = vmatprep.subr.mxu0 0.0
      %1512 = vmatpush1.msra.mxu0 0.0
      %1513 = vmatprep.subr.mxu0 0.0
      %1514 = vmatpush1.msra.mxu0 0.0
      %1515 = vmatprep.subr.mxu0 0.0
      %1516 = vmatpush1.msra.mxu0 0.0
      %1517 = vmatprep.subr.mxu0 0.0
      %1518 = vmatpush1.msra.mxu0 0.0
      %1519 = vmatprep.subr.mxu0 0.0
      %1520 = vmatpush1.msra.mxu0 0.0
      %1521 = vmatprep.subr.mxu0 0.0
      %1522 = vmatpush1.msra.mxu0 0.0
      %1523 = vmatprep.subr.mxu0 0.0
      %1524 = vmatpush1.msra.mxu0 0.0
      %1525 = vmatprep.subr.mxu0 0.0
      %1526 = vmatpush1.msra.mxu0 0.0
      %1527 = vmatprep.subr.mxu0 0.0
      %1528 = vmatpush1.msra.mxu0 0.0
      %1529 = vmatprep.subr.mxu0 0.0
      %1530 = vmatpush1.msra.mxu0 0.0
      %1531 = vmatprep.subr.mxu0 0.0
      %1532 = vmatpush1.msra.mxu0 0.0
      %1533 = vmatprep.subr.mxu0 0.0
      %1534 = vmatpush1.msra.mxu0 0.0
      %1535 = vmatprep.subr.mxu0 0.0
      %1536 = vmatpush1.msra.mxu0 0.0
      %1537 = vmatprep.subr.mxu0 0.0
      %1538 = vmatpush1.msra.mxu0 0.0
      %1539 = vmatprep.subr.mxu0 0.0
      %1540 = vmatpush1.msra.mxu0 0.0
      %1541 = vmatprep.subr.mxu0 0.0
      %1542 = vmatpush1.msra.mxu0 0.0
      %1543 = vmatprep.subr.mxu0 0.0
      %1544 = vmatpush1.msra.mxu0 0.0
      %1545 = vmatprep.subr.mxu0 0.0
      %1546 = vmatpush1.msra.mxu0 0.0
      %1547 = vmatprep.subr.mxu0 0.0
      %1548 = vmatpush1.msra.mxu0 0.0
      %1549 = vmatprep.subr.mxu0 0.0
      %1550 = vmatpush1.msra.mxu0 0.0
      %1551 = vmatprep.subr.mxu0 0.0
      %1552 = vmatpush1.msra.mxu0 0.0
      %1553 = vmatprep.subr.mxu0 0.0
      %1554 = vmatpush1.msra.mxu0 0.0
      %1555 = vmatprep.subr.mxu0 0.0
      %1556 = vmatpush1.msra.mxu0 0.0
      %1557 = vmatprep.subr.mxu0 0.0
      %1558 = vmatpush1.msra.mxu0 0.0
      %1559 = vmatprep.subr.mxu0 0.0
      %1560 = vmatpush1.msra.mxu0 0.0
      %1561 = vmatprep.subr.mxu0 0.0
      %1562 = vmatpush1.msra.mxu0 0.0
      %1563 = vmatprep.subr.mxu0 0.0
      %1564 = vmatpush1.msra.mxu0 0.0
      %1565 = vmatprep.subr.mxu0 0.0
      %1566 = vmatpush1.msra.mxu0 0.0
      %1567 = vmatprep.mubr.f32.mxu0 0.0
      %v1568 = vand.u32 %v1441, 4294901760
      %v1569 = vsub.f32 %v1441, %v1568
      %v1570 = vand.u32 %v1569, 4294901760
      %v1571 = vsub.f32 %v1569, %v1570
      %v1572 = vand.u32 %v1571, 4294901760
      %1573 = vmatmul.mubr.f32.gmra.mrb[0].mxu0 %v1572
      %v1574 = vpop.f32.mrb[0].mxu0
      %v1575 = vadd.f32 %v1362, %v1574
      %v1576 = vpop.f32.mrb[0].mxu0
      %v1577 = vadd.f32 %v1362, %v1576
      %1578 = vmatprep.mubr.f32.mxu0 0.0
      %v1579 = vand.u32 %v1444, 4294901760
      %v1580 = vsub.f32 %v1444, %v1579
      %v1581 = vand.u32 %v1580, 4294901760
      %v1582 = vsub.f32 %v1580, %v1581
      %v1583 = vand.u32 %v1582, 4294901760
      %1584 = vmatmul.mubr.f32.gmra.mrb[0].mxu0 %v1583
      %v1585 = vpop.f32.mrb[0].mxu0
      %v1586 = vadd.f32 %v1367, %v1585
      %v1587 = vpop.f32.mrb[0].mxu0
      %v1588 = vadd.f32 %v1367, %v1587
      %1589 = vmatprep.mubr.f32.mxu0 0.0
      %v1590 = vand.u32 %v1447, 4294901760
      %v1591 = vsub.f32 %v1447, %v1590
      %v1592 = vand.u32 %v1591, 4294901760
      %v1593 = vsub.f32 %v1591, %v1592
      %v1594 = vand.u32 %v1593, 4294901760
      %1595 = vmatmul.mubr.f32.gmra.mrb[0].mxu0 %v1594
      %v1596 = vpop.f32.mrb[0].mxu0
      %v1597 = vadd.f32 %v1372, %v1596
      %v1598 = vpop.f32.mrb[0].mxu0
      %v1599 = vadd.f32 %v1372, %v1598
      %1600 = vmatprep.mubr.f32.mxu0 0.0
      %v1601 = vand.u32 %v1450, 4294901760
      %v1602 = vsub.f32 %v1450, %v1601
      %v1603 = vand.u32 %v1602, 4294901760
      %v1604 = vsub.f32 %v1602, %v1603
      %v1605 = vand.u32 %v1604, 4294901760
      %1606 = vmatmul.mubr.f32.gmra.mrb[0].mxu0 %v1605
      %v1607 = vpop.f32.mrb[0].mxu0
      %v1608 = vadd.f32 %v1377, %v1607
      %v1609 = vpop.f32.mrb[0].mxu0
      %v1610 = vadd.f32 %v1377, %v1609
      %1611 = vmatprep.mubr.f32.mxu0 0.0
      %v1612 = vand.u32 %v1453, 4294901760
      %v1613 = vsub.f32 %v1453, %v1612
      %v1614 = vand.u32 %v1613, 4294901760
      %v1615 = vsub.f32 %v1613, %v1614
      %v1616 = vand.u32 %v1615, 4294901760
      %1617 = vmatmul.mubr.f32.gmra.mrb[0].mxu0 %v1616
      %v1618 = vpop.f32.mrb[0].mxu0
      %v1619 = vadd.f32 %v1382, %v1618
      %v1620 = vpop.f32.mrb[0].mxu0
      %v1621 = vadd.f32 %v1382, %v1620
      %1622 = vmatprep.mubr.f32.mxu0 0.0
      %v1623 = vand.u32 %v1456, 4294901760
      %v1624 = vsub.f32 %v1456, %v1623
      %v1625 = vand.u32 %v1624, 4294901760
      %v1626 = vsub.f32 %v1624, %v1625
      %v1627 = vand.u32 %v1626, 4294901760
      %1628 = vmatmul.mubr.f32.gmra.mrb[0].mxu0 %v1627
      %v1629 = vpop.f32.mrb[0].mxu0
      %v1630 = vadd.f32 %v1387, %v1629
      %v1631 = vpop.f32.mrb[0].mxu0
      %v1632 = vadd.f32 %v1387, %v1631
      %1633 = vmatprep.mubr.f32.mxu0 0.0
      %v1634 = vand.u32 %v1459, 4294901760
      %v1635 = vsub.f32 %v1459, %v1634
      %v1636 = vand.u32 %v1635, 4294901760
      %v1637 = vsub.f32 %v1635, %v1636
      %v1638 = vand.u32 %v1637, 4294901760
      %1639 = vmatmul.mubr.f32.gmra.mrb[0].mxu0 %v1638
      %v1640 = vpop.f32.mrb[0].mxu0
      %v1641 = vadd.f32 %v1392, %v1640
      %v1642 = vpop.f32.mrb[0].mxu0
      %v1643 = vadd.f32 %v1392, %v1642
      %1644 = vmatprep.mubr.f32.mxu0 0.0
      %v1645 = vand.u32 %v1462, 4294901760
      %v1646 = vsub.f32 %v1462, %v1645
      %v1647 = vand.u32 %v1646, 4294901760
      %v1648 = vsub.f32 %v1646, %v1647
      %v1649 = vand.u32 %v1648, 4294901760
      %1650 = vmatmul.mubr.f32.gmra.mrb[0].mxu0 %v1649
      %v1651 = vpop.f32.mrb[0].mxu0
      %v1652 = vadd.f32 %v1397, %v1651
      %v1653 = vpop.f32.mrb[0].mxu0
      %v1654 = vadd.f32 %v1397, %v1653
      %1655 = vmatprep.mubr.f32.mxu0 0.0
      %v1656 = vand.u32 %v1465, 4294901760
      %v1657 = vsub.f32 %v1465, %v1656
      %v1658 = vand.u32 %v1657, 4294901760
      %v1659 = vsub.f32 %v1657, %v1658
      %v1660 = vand.u32 %v1659, 4294901760
      %1661 = vmatmul.mubr.f32.gmra.mrb[0].mxu0 %v1660
      %v1662 = vpop.f32.mrb[0].mxu0
      %v1663 = vadd.f32 %v1402, %v1662
      %v1664 = vpop.f32.mrb[0].mxu0
      %v1665 = vadd.f32 %v1402, %v1664
      %1666 = vmatprep.mubr.f32.mxu0 0.0
      %v1667 = vand.u32 %v1468, 4294901760
      %v1668 = vsub.f32 %v1468, %v1667
      %v1669 = vand.u32 %v1668, 4294901760
      %v1670 = vsub.f32 %v1668, %v1669
      %v1671 = vand.u32 %v1670, 4294901760
      %1672 = vmatmul.mubr.f32.gmra.mrb[0].mxu0 %v1671
      %v1673 = vpop.f32.mrb[0].mxu0
      %v1674 = vadd.f32 %v1407, %v1673
      %v1675 = vpop.f32.mrb[0].mxu0
      %v1676 = vadd.f32 %v1407, %v1675
      %1677 = vmatprep.mubr.f32.mxu0 0.0
      %v1678 = vand.u32 %v1471, 4294901760
      %v1679 = vsub.f32 %v1471, %v1678
      %v1680 = vand.u32 %v1679, 4294901760
      %v1681 = vsub.f32 %v1679, %v1680
      %v1682 = vand.u32 %v1681, 4294901760
      %1683 = vmatmul.mubr.f32.gmra.mrb[0].mxu0 %v1682
      %v1684 = vpop.f32.mrb[0].mxu0
      %v1685 = vadd.f32 %v1412, %v1684
      %v1686 = vpop.f32.mrb[0].mxu0
      %v1687 = vadd.f32 %v1412, %v1686
      %1688 = vmatprep.mubr.f32.mxu0 0.0
      %v1689 = vand.u32 %v1474, 4294901760
      %v1690 = vsub.f32 %v1474, %v1689
      %v1691 = vand.u32 %v1690, 4294901760
      %v1692 = vsub.f32 %v1690, %v1691
      %v1693 = vand.u32 %v1692, 4294901760
      %1694 = vmatmul.mubr.f32.gmra.mrb[0].mxu0 %v1693
      %v1695 = vpop.f32.mrb[0].mxu0
      %v1696 = vadd.f32 %v1417, %v1695
      %v1697 = vpop.f32.mrb[0].mxu0
      %v1698 = vadd.f32 %v1417, %v1697
      %1699 = vmatprep.mubr.f32.mxu0 0.0
      %v1700 = vand.u32 %v1477, 4294901760
      %v1701 = vsub.f32 %v1477, %v1700
      %v1702 = vand.u32 %v1701, 4294901760
      %v1703 = vsub.f32 %v1701, %v1702
      %v1704 = vand.u32 %v1703, 4294901760
      %1705 = vmatmul.mubr.f32.gmra.mrb[0].mxu0 %v1704
      %v1706 = vpop.f32.mrb[0].mxu0
      %v1707 = vadd.f32 %v1422, %v1706
      %v1708 = vpop.f32.mrb[0].mxu0
      %v1709 = vadd.f32 %v1422, %v1708
      %1710 = vmatprep.mubr.f32.mxu0 0.0
      %v1711 = vand.u32 %v1480, 4294901760
      %v1712 = vsub.f32 %v1480, %v1711
      %v1713 = vand.u32 %v1712, 4294901760
      %v1714 = vsub.f32 %v1712, %v1713
      %v1715 = vand.u32 %v1714, 4294901760
      %1716 = vmatmul.mubr.f32.gmra.mrb[0].mxu0 %v1715
      %v1717 = vpop.f32.mrb[0].mxu0
      %v1718 = vadd.f32 %v1427, %v1717
      %v1719 = vpop.f32.mrb[0].mxu0
      %v1720 = vadd.f32 %v1427, %v1719
      %1721 = vmatprep.mubr.f32.mxu0 0.0
      %v1722 = vand.u32 %v1483, 4294901760
      %v1723 = vsub.f32 %v1483, %v1722
      %v1724 = vand.u32 %v1723, 4294901760
      %v1725 = vsub.f32 %v1723, %v1724
      %v1726 = vand.u32 %v1725, 4294901760
      %1727 = vmatmul.mubr.f32.gmra.mrb[0].mxu0 %v1726
      %v1728 = vpop.f32.mrb[0].mxu0
      %v1729 = vadd.f32 %v1432, %v1728
      %v1730 = vpop.f32.mrb[0].mxu0
      %v1731 = vadd.f32 %v1432, %v1730
      %1732 = vmatprep.mubr.f32.mxu0 0.0
      %v1733 = vand.u32 %v1486, 4294901760
      %v1734 = vsub.f32 %v1486, %v1733
      %v1735 = vand.u32 %v1734, 4294901760
      %v1736 = vsub.f32 %v1734, %v1735
      %v1737 = vand.u32 %v1736, 4294901760
      %1738 = vmatmul.mubr.f32.gmra.mrb[0].mxu0 %v1737
      %v1739 = vpop.f32.mrb[0].mxu0
      %v1740 = vadd.f32 %v1437, %v1739
      %v1741 = vpop.f32.mrb[0].mxu0
      %v1742 = vadd.f32 %v1437, %v1741
      %1743 = vdwg.mxu0
      %v1744 = vand.u32 %v1320, 4294901760
      %v1745 = vsub.f32 %v1320, %v1744
      %v1746 = vand.u32 %v1745, 4294901760
      %v1747 = vsub.f32 %v1745, %v1746
      %v1748 = vand.u32 %v1747, 4294901760
      %1749 = vmatprep.subr.mxu0 %v1748
      %v1750 = vand.u32 %v1319, 4294901760
      %v1751 = vsub.f32 %v1319, %v1750
      %v1752 = vand.u32 %v1751, 4294901760
      %v1753 = vsub.f32 %v1751, %v1752
      %v1754 = vand.u32 %v1753, 4294901760
      %1755 = vmatpush1.msra.mxu0 %v1754
      %v1756 = vand.u32 %v1322, 4294901760
      %v1757 = vsub.f32 %v1322, %v1756
      %v1758 = vand.u32 %v1757, 4294901760
      %v1759 = vsub.f32 %v1757, %v1758
      %v1760 = vand.u32 %v1759, 4294901760
      %1761 = vmatprep.subr.mxu0 %v1760
      %v1762 = vand.u32 %v1321, 4294901760
      %v1763 = vsub.f32 %v1321, %v1762
      %v1764 = vand.u32 %v1763, 4294901760
      %v1765 = vsub.f32 %v1763, %v1764
      %v1766 = vand.u32 %v1765, 4294901760
      %1767 = vmatpush1.msra.mxu0 %v1766
      %v1768 = vand.u32 %v1324, 4294901760
      %v1769 = vsub.f32 %v1324, %v1768
      %v1770 = vand.u32 %v1769, 4294901760
      %v1771 = vsub.f32 %v1769, %v1770
      %v1772 = vand.u32 %v1771, 4294901760
      %1773 = vmatprep.subr.mxu0 %v1772
      %v1774 = vand.u32 %v1323, 4294901760
      %v1775 = vsub.f32 %v1323, %v1774
      %v1776 = vand.u32 %v1775, 4294901760
      %v1777 = vsub.f32 %v1775, %v1776
      %v1778 = vand.u32 %v1777, 4294901760
      %1779 = vmatpush1.msra.mxu0 %v1778
      %v1780 = vand.u32 %v1493, 4294901760
      %v1781 = vsub.f32 %v1493, %v1780
      %v1782 = vand.u32 %v1781, 4294901760
      %v1783 = vsub.f32 %v1781, %v1782
      %v1784 = vand.u32 %v1783, 4294901760
      %1785 = vmatprep.subr.mxu0 %v1784
      %v1786 = vand.u32 %v1490, 4294901760
      %v1787 = vsub.f32 %v1490, %v1786
      %v1788 = vand.u32 %v1787, 4294901760
      %v1789 = vsub.f32 %v1787, %v1788
      %v1790 = vand.u32 %v1789, 4294901760
      %1791 = vmatpush1.msra.mxu0 %v1790
      %1792 = vmatprep.subr.mxu0 0.0
      %1793 = vmatpush1.msra.mxu0 0.0
      %1794 = vmatprep.subr.mxu0 0.0
      %1795 = vmatpush1.msra.mxu0 0.0
      %1796 = vmatprep.subr.mxu0 0.0
      %1797 = vmatpush1.msra.mxu0 0.0
      %1798 = vmatprep.subr.mxu0 0.0
      %1799 = vmatpush1.msra.mxu0 0.0
      %1800 = vmatprep.subr.mxu0 0.0
      %1801 = vmatpush1.msra.mxu0 0.0
      %1802 = vmatprep.subr.mxu0 0.0
      %1803 = vmatpush1.msra.mxu0 0.0
      %1804 = vmatprep.subr.mxu0 0.0
      %1805 = vmatpush1.msra.mxu0 0.0
      %1806 = vmatprep.subr.mxu0 0.0
      %1807 = vmatpush1.msra.mxu0 0.0
      %1808 = vmatprep.subr.mxu0 0.0
      %1809 = vmatpush1.msra.mxu0 0.0
      %1810 = vmatprep.subr.mxu0 0.0
      %1811 = vmatpush1.msra.mxu0 0.0
      %1812 = vmatprep.subr.mxu0 0.0
      %1813 = vmatpush1.msra.mxu0 0.0
      %1814 = vmatprep.subr.mxu0 0.0
      %1815 = vmatpush1.msra.mxu0 0.0
      %1816 = vmatprep.subr.mxu0 0.0
      %1817 = vmatpush1.msra.mxu0 0.0
      %1818 = vmatprep.subr.mxu0 0.0
      %1819 = vmatpush1.msra.mxu0 0.0
      %1820 = vmatprep.subr.mxu0 0.0
      %1821 = vmatpush1.msra.mxu0 0.0
      %1822 = vmatprep.subr.mxu0 0.0
      %1823 = vmatpush1.msra.mxu0 0.0
      %1824 = vmatprep.subr.mxu0 0.0
      %1825 = vmatpush1.msra.mxu0 0.0
      %1826 = vmatprep.subr.mxu0 0.0
      %1827 = vmatpush1.msra.mxu0 0.0
      %1828 = vmatprep.subr.mxu0 0.0
      %1829 = vmatpush1.msra.mxu0 0.0
      %1830 = vmatprep.subr.mxu0 0.0
      %1831 = vmatpush1.msra.mxu0 0.0
      %1832 = vmatprep.subr.mxu0 0.0
      %1833 = vmatpush1.msra.mxu0 0.0
      %1834 = vmatprep.subr.mxu0 0.0
      %1835 = vmatpush1.msra.mxu0 0.0
      %1836 = vmatprep.subr.mxu0 0.0
      %1837 = vmatpush1.msra.mxu0 0.0
      %1838 = vmatprep.subr.mxu0 0.0
      %1839 = vmatpush1.msra.mxu0 0.0
      %1840 = vmatprep.subr.mxu0 0.0
      %1841 = vmatpush1.msra.mxu0 0.0
      %1842 = vmatprep.subr.mxu0 0.0
      %1843 = vmatpush1.msra.mxu0 0.0
      %1844 = vmatprep.subr.mxu0 0.0
      %1845 = vmatpush1.msra.mxu0 0.0
      %1846 = vmatprep.subr.mxu0 0.0
      %1847 = vmatpush1.msra.mxu0 0.0
      %1848 = vmatprep.mubr.f32.mxu0 0.0
      %v1849 = vand.u32 %v1441, 4294901760
      %1850 = vmatmul.mubr.f32.gmra.mrb[0].mxu0 %v1849
      %v1851 = vpop.f32.mrb[0].mxu0
      %v1852 = vadd.f32 %v1575, %v1851
      %v1853 = vpop.f32.mrb[0].mxu0
      %v1854 = vadd.f32 %v1577, %v1853
      %1855 = vmatprep.mubr.f32.mxu0 0.0
      %v1856 = vand.u32 %v1444, 4294901760
      %1857 = vmatmul.mubr.f32.gmra.mrb[0].mxu0 %v1856
      %v1858 = vpop.f32.mrb[0].mxu0
      %v1859 = vadd.f32 %v1586, %v1858
      %v1860 = vpop.f32.mrb[0].mxu0
      %v1861 = vadd.f32 %v1588, %v1860
      %1862 = vmatprep.mubr.f32.mxu0 0.0
      %v1863 = vand.u32 %v1447, 4294901760
      %1864 = vmatmul.mubr.f32.gmra.mrb[0].mxu0 %v1863
      %v1865 = vpop.f32.mrb[0].mxu0
      %v1866 = vadd.f32 %v1597, %v1865
      %v1867 = vpop.f32.mrb[0].mxu0
      %v1868 = vadd.f32 %v1599, %v1867
      %1869 = vmatprep.mubr.f32.mxu0 0.0
      %v1870 = vand.u32 %v1450, 4294901760
      %1871 = vmatmul.mubr.f32.gmra.mrb[0].mxu0 %v1870
      %v1872 = vpop.f32.mrb[0].mxu0
      %v1873 = vadd.f32 %v1608, %v1872
      %v1874 = vpop.f32.mrb[0].mxu0
      %v1875 = vadd.f32 %v1610, %v1874
      %1876 = vmatprep.mubr.f32.mxu0 0.0
      %v1877 = vand.u32 %v1453, 4294901760
      %1878 = vmatmul.mubr.f32.gmra.mrb[0].mxu0 %v1877
      %v1879 = vpop.f32.mrb[0].mxu0
      %v1880 = vadd.f32 %v1619, %v1879
      %v1881 = vpop.f32.mrb[0].mxu0
      %v1882 = vadd.f32 %v1621, %v1881
      %1883 = vmatprep.mubr.f32.mxu0 0.0
      %v1884 = vand.u32 %v1456, 4294901760
      %1885 = vmatmul.mubr.f32.gmra.mrb[0].mxu0 %v1884
      %v1886 = vpop.f32.mrb[0].mxu0
      %v1887 = vadd.f32 %v1630, %v1886
      %v1888 = vpop.f32.mrb[0].mxu0
      %v1889 = vadd.f32 %v1632, %v1888
      %1890 = vmatprep.mubr.f32.mxu0 0.0
      %v1891 = vand.u32 %v1459, 4294901760
      %1892 = vmatmul.mubr.f32.gmra.mrb[0].mxu0 %v1891
      %v1893 = vpop.f32.mrb[0].mxu0
      %v1894 = vadd.f32 %v1641, %v1893
      %v1895 = vpop.f32.mrb[0].mxu0
      %v1896 = vadd.f32 %v1643, %v1895
      %1897 = vmatprep.mubr.f32.mxu0 0.0
      %v1898 = vand.u32 %v1462, 4294901760
      %1899 = vmatmul.mubr.f32.gmra.mrb[0].mxu0 %v1898
      %v1900 = vpop.f32.mrb[0].mxu0
      %v1901 = vadd.f32 %v1652, %v1900
      %v1902 = vpop.f32.mrb[0].mxu0
      %v1903 = vadd.f32 %v1654, %v1902
      %1904 = vmatprep.mubr.f32.mxu0 0.0
      %v1905 = vand.u32 %v1465, 4294901760
      %1906 = vmatmul.mubr.f32.gmra.mrb[0].mxu0 %v1905
      %v1907 = vpop.f32.mrb[0].mxu0
      %v1908 = vadd.f32 %v1663, %v1907
      %v1909 = vpop.f32.mrb[0].mxu0
      %v1910 = vadd.f32 %v1665, %v1909
      %1911 = vmatprep.mubr.f32.mxu0 0.0
      %v1912 = vand.u32 %v1468, 4294901760
      %1913 = vmatmul.mubr.f32.gmra.mrb[0].mxu0 %v1912
      %v1914 = vpop.f32.mrb[0].mxu0
      %v1915 = vadd.f32 %v1674, %v1914
      %v1916 = vpop.f32.mrb[0].mxu0
      %v1917 = vadd.f32 %v1676, %v1916
      %1918 = vmatprep.mubr.f32.mxu0 0.0
      %v1919 = vand.u32 %v1471, 4294901760
      %1920 = vmatmul.mubr.f32.gmra.mrb[0].mxu0 %v1919
      %v1921 = vpop.f32.mrb[0].mxu0
      %v1922 = vadd.f32 %v1685, %v1921
      %v1923 = vpop.f32.mrb[0].mxu0
      %v1924 = vadd.f32 %v1687, %v1923
      %1925 = vmatprep.mubr.f32.mxu0 0.0
      %v1926 = vand.u32 %v1474, 4294901760
      %1927 = vmatmul.mubr.f32.gmra.mrb[0].mxu0 %v1926
      %v1928 = vpop.f32.mrb[0].mxu0
      %v1929 = vadd.f32 %v1696, %v1928
      %v1930 = vpop.f32.mrb[0].mxu0
      %v1931 = vadd.f32 %v1698, %v1930
      %1932 = vmatprep.mubr.f32.mxu0 0.0
      %v1933 = vand.u32 %v1477, 4294901760
      %1934 = vmatmul.mubr.f32.gmra.mrb[0].mxu0 %v1933
      %v1935 = vpop.f32.mrb[0].mxu0
      %v1936 = vadd.f32 %v1707, %v1935
      %v1937 = vpop.f32.mrb[0].mxu0
      %v1938 = vadd.f32 %v1709, %v1937
      %1939 = vmatprep.mubr.f32.mxu0 0.0
      %v1940 = vand.u32 %v1480, 4294901760
      %1941 = vmatmul.mubr.f32.gmra.mrb[0].mxu0 %v1940
      %v1942 = vpop.f32.mrb[0].mxu0
      %v1943 = vadd.f32 %v1718, %v1942
      %v1944 = vpop.f32.mrb[0].mxu0
      %v1945 = vadd.f32 %v1720, %v1944
      %1946 = vmatprep.mubr.f32.mxu0 0.0
      %v1947 = vand.u32 %v1483, 4294901760
      %1948 = vmatmul.mubr.f32.gmra.mrb[0].mxu0 %v1947
      %v1949 = vpop.f32.mrb[0].mxu0
      %v1950 = vadd.f32 %v1729, %v1949
      %v1951 = vpop.f32.mrb[0].mxu0
      %v1952 = vadd.f32 %v1731, %v1951
      %1953 = vmatprep.mubr.f32.mxu0 0.0
      %v1954 = vand.u32 %v1486, 4294901760
      %1955 = vmatmul.mubr.f32.gmra.mrb[0].mxu0 %v1954
      %v1956 = vpop.f32.mrb[0].mxu0
      %v1957 = vadd.f32 %v1740, %v1956
      %v1958 = vpop.f32.mrb[0].mxu0
      %v1959 = vadd.f32 %v1742, %v1958
      %1960 = vdwg.mxu0
      %v1961 = vand.u32 %v1320, 4294901760
      %v1962 = vsub.f32 %v1320, %v1961
      %1963 = vmatprep.subr.mxu0 %v1962
      %v1964 = vand.u32 %v1319, 4294901760
      %v1965 = vsub.f32 %v1319, %v1964
      %1966 = vmatpush1.msra.mxu0 %v1965
      %v1967 = vand.u32 %v1322, 4294901760
      %v1968 = vsub.f32 %v1322, %v1967
      %1969 = vmatprep.subr.mxu0 %v1968
      %v1970 = vand.u32 %v1321, 4294901760
      %v1971 = vsub.f32 %v1321, %v1970
      %1972 = vmatpush1.msra.mxu0 %v1971
      %v1973 = vand.u32 %v1324, 4294901760
      %v1974 = vsub.f32 %v1324, %v1973
      %1975 = vmatprep.subr.mxu0 %v1974
      %v1976 = vand.u32 %v1323, 4294901760
      %v1977 = vsub.f32 %v1323, %v1976
      %1978 = vmatpush1.msra.mxu0 %v1977
      %v1979 = vand.u32 %v1493, 4294901760
      %v1980 = vsub.f32 %v1493, %v1979
      %1981 = vmatprep.subr.mxu0 %v1980
      %v1982 = vand.u32 %v1490, 4294901760
      %v1983 = vsub.f32 %v1490, %v1982
      %1984 = vmatpush1.msra.mxu0 %v1983
      %1985 = vmatprep.subr.mxu0 0.0
      %1986 = vmatpush1.msra.mxu0 0.0
      %1987 = vmatprep.subr.mxu0 0.0
      %1988 = vmatpush1.msra.mxu0 0.0
      %1989 = vmatprep.subr.mxu0 0.0
      %1990 = vmatpush1.msra.mxu0 0.0
      %1991 = vmatprep.subr.mxu0 0.0
      %1992 = vmatpush1.msra.mxu0 0.0
      %1993 = vmatprep.subr.mxu0 0.0
      %1994 = vmatpush1.msra.mxu0 0.0
      %1995 = vmatprep.subr.mxu0 0.0
      %1996 = vmatpush1.msra.mxu0 0.0
      %1997 = vmatprep.subr.mxu0 0.0
      %1998 = vmatpush1.msra.mxu0 0.0
      %1999 = vmatprep.subr.mxu0 0.0
      %2000 = vmatpush1.msra.mxu0 0.0
      %2001 = vmatprep.subr.mxu0 0.0
      %2002 = vmatpush1.msra.mxu0 0.0
      %2003 = vmatprep.subr.mxu0 0.0
      %2004 = vmatpush1.msra.mxu0 0.0
      %2005 = vmatprep.subr.mxu0 0.0
      %2006 = vmatpush1.msra.mxu0 0.0
      %2007 = vmatprep.subr.mxu0 0.0
      %2008 = vmatpush1.msra.mxu0 0.0
      %2009 = vmatprep.subr.mxu0 0.0
      %2010 = vmatpush1.msra.mxu0 0.0
      %2011 = vmatprep.subr.mxu0 0.0
      %2012 = vmatpush1.msra.mxu0 0.0
      %2013 = vmatprep.subr.mxu0 0.0
      %2014 = vmatpush1.msra.mxu0 0.0
      %2015 = vmatprep.subr.mxu0 0.0
      %2016 = vmatpush1.msra.mxu0 0.0
      %2017 = vmatprep.subr.mxu0 0.0
      %2018 = vmatpush1.msra.mxu0 0.0
      %2019 = vmatprep.subr.mxu0 0.0
      %2020 = vmatpush1.msra.mxu0 0.0
      %2021 = vmatprep.subr.mxu0 0.0
      %2022 = vmatpush1.msra.mxu0 0.0
      %2023 = vmatprep.subr.mxu0 0.0
      %2024 = vmatpush1.msra.mxu0 0.0
      %2025 = vmatprep.subr.mxu0 0.0
      %2026 = vmatpush1.msra.mxu0 0.0
      %2027 = vmatprep.subr.mxu0 0.0
      %2028 = vmatpush1.msra.mxu0 0.0
      %2029 = vmatprep.subr.mxu0 0.0
      %2030 = vmatpush1.msra.mxu0 0.0
      %2031 = vmatprep.subr.mxu0 0.0
      %2032 = vmatpush1.msra.mxu0 0.0
      %2033 = vmatprep.subr.mxu0 0.0
      %2034 = vmatpush1.msra.mxu0 0.0
      %2035 = vmatprep.subr.mxu0 0.0
      %2036 = vmatpush1.msra.mxu0 0.0
      %2037 = vmatprep.subr.mxu0 0.0
      %2038 = vmatpush1.msra.mxu0 0.0
      %2039 = vmatprep.subr.mxu0 0.0
      %2040 = vmatpush1.msra.mxu0 0.0
      %2041 = vmatprep.mubr.f32.mxu0 0.0
      %v2042 = vand.u32 %v1441, 4294901760
      %v2043 = vsub.f32 %v1441, %v2042
      %2044 = vmatmul.mubr.f32.gmra.mrb[0].mxu0 %v2043
      %v2045 = vpop.f32.mrb[0].mxu0
      %v2046 = vadd.f32 %v1852, %v2045
      %v2047 = vpop.f32.mrb[0].mxu0
      %v2048 = vadd.f32 %v1854, %v2047
      %2049 = vmatprep.mubr.f32.mxu0 0.0
      %v2050 = vand.u32 %v1444, 4294901760
      %v2051 = vsub.f32 %v1444, %v2050
      %2052 = vmatmul.mubr.f32.gmra.mrb[0].mxu0 %v2051
      %v2053 = vpop.f32.mrb[0].mxu0
      %v2054 = vadd.f32 %v1859, %v2053
      %v2055 = vpop.f32.mrb[0].mxu0
      %v2056 = vadd.f32 %v1861, %v2055
      %2057 = vmatprep.mubr.f32.mxu0 0.0
      %v2058 = vand.u32 %v1447, 4294901760
      %v2059 = vsub.f32 %v1447, %v2058
      %2060 = vmatmul.mubr.f32.gmra.mrb[0].mxu0 %v2059
      %v2061 = vpop.f32.mrb[0].mxu0
      %v2062 = vadd.f32 %v1866, %v2061
      %v2063 = vpop.f32.mrb[0].mxu0
      %v2064 = vadd.f32 %v1868, %v2063
      %2065 = vmatprep.mubr.f32.mxu0 0.0
      %v2066 = vand.u32 %v1450, 4294901760
      %v2067 = vsub.f32 %v1450, %v2066
      %2068 = vmatmul.mubr.f32.gmra.mrb[0].mxu0 %v2067
      %v2069 = vpop.f32.mrb[0].mxu0
      %v2070 = vadd.f32 %v1873, %v2069
      %v2071 = vpop.f32.mrb[0].mxu0
      %v2072 = vadd.f32 %v1875, %v2071
      %2073 = vmatprep.mubr.f32.mxu0 0.0
      %v2074 = vand.u32 %v1453, 4294901760
      %v2075 = vsub.f32 %v1453, %v2074
      %2076 = vmatmul.mubr.f32.gmra.mrb[0].mxu0 %v2075
      %v2077 = vpop.f32.mrb[0].mxu0
      %v2078 = vadd.f32 %v1880, %v2077
      %v2079 = vpop.f32.mrb[0].mxu0
      %v2080 = vadd.f32 %v1882, %v2079
      %2081 = vmatprep.mubr.f32.mxu0 0.0
      %v2082 = vand.u32 %v1456, 4294901760
      %v2083 = vsub.f32 %v1456, %v2082
      %2084 = vmatmul.mubr.f32.gmra.mrb[0].mxu0 %v2083
      %v2085 = vpop.f32.mrb[0].mxu0
      %v2086 = vadd.f32 %v1887, %v2085
      %v2087 = vpop.f32.mrb[0].mxu0
      %v2088 = vadd.f32 %v1889, %v2087
      %2089 = vmatprep.mubr.f32.mxu0 0.0
      %v2090 = vand.u32 %v1459, 4294901760
      %v2091 = vsub.f32 %v1459, %v2090
      %2092 = vmatmul.mubr.f32.gmra.mrb[0].mxu0 %v2091
      %v2093 = vpop.f32.mrb[0].mxu0
      %v2094 = vadd.f32 %v1894, %v2093
      %v2095 = vpop.f32.mrb[0].mxu0
      %v2096 = vadd.f32 %v1896, %v2095
      %2097 = vmatprep.mubr.f32.mxu0 0.0
      %v2098 = vand.u32 %v1462, 4294901760
      %v2099 = vsub.f32 %v1462, %v2098
      %2100 = vmatmul.mubr.f32.gmra.mrb[0].mxu0 %v2099
      %v2101 = vpop.f32.mrb[0].mxu0
      %v2102 = vadd.f32 %v1901, %v2101
      %v2103 = vpop.f32.mrb[0].mxu0
      %v2104 = vadd.f32 %v1903, %v2103
      %2105 = vmatprep.mubr.f32.mxu0 0.0
      %v2106 = vand.u32 %v1465, 4294901760
      %v2107 = vsub.f32 %v1465, %v2106
      %2108 = vmatmul.mubr.f32.gmra.mrb[0].mxu0 %v2107
      %v2109 = vpop.f32.mrb[0].mxu0
      %v2110 = vadd.f32 %v1908, %v2109
      %v2111 = vpop.f32.mrb[0].mxu0
      %v2112 = vadd.f32 %v1910, %v2111
      %2113 = vmatprep.mubr.f32.mxu0 0.0
      %v2114 = vand.u32 %v1468, 4294901760
      %v2115 = vsub.f32 %v1468, %v2114
      %2116 = vmatmul.mubr.f32.gmra.mrb[0].mxu0 %v2115
      %v2117 = vpop.f32.mrb[0].mxu0
      %v2118 = vadd.f32 %v1915, %v2117
      %v2119 = vpop.f32.mrb[0].mxu0
      %v2120 = vadd.f32 %v1917, %v2119
      %2121 = vmatprep.mubr.f32.mxu0 0.0
      %v2122 = vand.u32 %v1471, 4294901760
      %v2123 = vsub.f32 %v1471, %v2122
      %2124 = vmatmul.mubr.f32.gmra.mrb[0].mxu0 %v2123
      %v2125 = vpop.f32.mrb[0].mxu0
      %v2126 = vadd.f32 %v1922, %v2125
      %v2127 = vpop.f32.mrb[0].mxu0
      %v2128 = vadd.f32 %v1924, %v2127
      %2129 = vmatprep.mubr.f32.mxu0 0.0
      %v2130 = vand.u32 %v1474, 4294901760
      %v2131 = vsub.f32 %v1474, %v2130
      %2132 = vmatmul.mubr.f32.gmra.mrb[0].mxu0 %v2131
      %v2133 = vpop.f32.mrb[0].mxu0
      %v2134 = vadd.f32 %v1929, %v2133
      %v2135 = vpop.f32.mrb[0].mxu0
      %v2136 = vadd.f32 %v1931, %v2135
      %2137 = vmatprep.mubr.f32.mxu0 0.0
      %v2138 = vand.u32 %v1477, 4294901760
      %v2139 = vsub.f32 %v1477, %v2138
      %2140 = vmatmul.mubr.f32.gmra.mrb[0].mxu0 %v2139
      %v2141 = vpop.f32.mrb[0].mxu0
      %v2142 = vadd.f32 %v1936, %v2141
      %v2143 = vpop.f32.mrb[0].mxu0
      %v2144 = vadd.f32 %v1938, %v2143
      %2145 = vmatprep.mubr.f32.mxu0 0.0
      %v2146 = vand.u32 %v1480, 4294901760
      %v2147 = vsub.f32 %v1480, %v2146
      %2148 = vmatmul.mubr.f32.gmra.mrb[0].mxu0 %v2147
      %v2149 = vpop.f32.mrb[0].mxu0
      %v2150 = vadd.f32 %v1943, %v2149
      %v2151 = vpop.f32.mrb[0].mxu0
      %v2152 = vadd.f32 %v1945, %v2151
      %2153 = vmatprep.mubr.f32.mxu0 0.0
      %v2154 = vand.u32 %v1483, 4294901760
      %v2155 = vsub.f32 %v1483, %v2154
      %2156 = vmatmul.mubr.f32.gmra.mrb[0].mxu0 %v2155
      %v2157 = vpop.f32.mrb[0].mxu0
      %v2158 = vadd.f32 %v1950, %v2157
      %v2159 = vpop.f32.mrb[0].mxu0
      %v2160 = vadd.f32 %v1952, %v2159
      %2161 = vmatprep.mubr.f32.mxu0 0.0
      %v2162 = vand.u32 %v1486, 4294901760
      %v2163 = vsub.f32 %v1486, %v2162
      %2164 = vmatmul.mubr.f32.gmra.mrb[0].mxu0 %v2163
      %v2165 = vpop.f32.mrb[0].mxu0
      %v2166 = vadd.f32 %v1957, %v2165
      %v2167 = vpop.f32.mrb[0].mxu0
      %v2168 = vadd.f32 %v1959, %v2167
      %2169 = vdwg.mxu0
      %v2170 = vand.u32 %v1320, 4294901760
      %2171 = vmatprep.subr.mxu0 %v2170
      %v2172 = vand.u32 %v1319, 4294901760
      %2173 = vmatpush1.msra.mxu0 %v2172
      %v2174 = vand.u32 %v1322, 4294901760
      %2175 = vmatprep.subr.mxu0 %v2174
      %v2176 = vand.u32 %v1321, 4294901760
      %2177 = vmatpush1.msra.mxu0 %v2176
      %v2178 = vand.u32 %v1324, 4294901760
      %2179 = vmatprep.subr.mxu0 %v2178
      %v2180 = vand.u32 %v1323, 4294901760
      %2181 = vmatpush1.msra.mxu0 %v2180
      %v2182 = vand.u32 %v1493, 4294901760
      %2183 = vmatprep.subr.mxu0 %v2182
      %v2184 = vand.u32 %v1490, 4294901760
      %2185 = vmatpush1.msra.mxu0 %v2184
      %2186 = vmatprep.subr.mxu0 0.0
      %2187 = vmatpush1.msra.mxu0 0.0
      %2188 = vmatprep.subr.mxu0 0.0
      %2189 = vmatpush1.msra.mxu0 0.0
      %2190 = vmatprep.subr.mxu0 0.0
      %2191 = vmatpush1.msra.mxu0 0.0
      %2192 = vmatprep.subr.mxu0 0.0
      %2193 = vmatpush1.msra.mxu0 0.0
      %2194 = vmatprep.subr.mxu0 0.0
      %2195 = vmatpush1.msra.mxu0 0.0
      %2196 = vmatprep.subr.mxu0 0.0
      %2197 = vmatpush1.msra.mxu0 0.0
      %2198 = vmatprep.subr.mxu0 0.0
      %2199 = vmatpush1.msra.mxu0 0.0
      %2200 = vmatprep.subr.mxu0 0.0
      %2201 = vmatpush1.msra.mxu0 0.0
      %2202 = vmatprep.subr.mxu0 0.0
      %2203 = vmatpush1.msra.mxu0 0.0
      %2204 = vmatprep.subr.mxu0 0.0
      %2205 = vmatpush1.msra.mxu0 0.0
      %2206 = vmatprep.subr.mxu0 0.0
      %2207 = vmatpush1.msra.mxu0 0.0
      %2208 = vmatprep.subr.mxu0 0.0
      %2209 = vmatpush1.msra.mxu0 0.0
      %2210 = vmatprep.subr.mxu0 0.0
      %2211 = vmatpush1.msra.mxu0 0.0
      %2212 = vmatprep.subr.mxu0 0.0
      %2213 = vmatpush1.msra.mxu0 0.0
      %2214 = vmatprep.subr.mxu0 0.0
      %2215 = vmatpush1.msra.mxu0 0.0
      %2216 = vmatprep.subr.mxu0 0.0
      %2217 = vmatpush1.msra.mxu0 0.0
      %2218 = vmatprep.subr.mxu0 0.0
      %2219 = vmatpush1.msra.mxu0 0.0
      %2220 = vmatprep.subr.mxu0 0.0
      %2221 = vmatpush1.msra.mxu0 0.0
      %2222 = vmatprep.subr.mxu0 0.0
      %2223 = vmatpush1.msra.mxu0 0.0
      %2224 = vmatprep.subr.mxu0 0.0
      %2225 = vmatpush1.msra.mxu0 0.0
      %2226 = vmatprep.subr.mxu0 0.0
      %2227 = vmatpush1.msra.mxu0 0.0
      %2228 = vmatprep.subr.mxu0 0.0
      %2229 = vmatpush1.msra.mxu0 0.0
      %2230 = vmatprep.subr.mxu0 0.0
      %2231 = vmatpush1.msra.mxu0 0.0
      %2232 = vmatprep.subr.mxu0 0.0
      %2233 = vmatpush1.msra.mxu0 0.0
      %2234 = vmatprep.subr.mxu0 0.0
      %2235 = vmatpush1.msra.mxu0 0.0
      %2236 = vmatprep.subr.mxu0 0.0
      %2237 = vmatpush1.msra.mxu0 0.0
      %2238 = vmatprep.subr.mxu0 0.0
      %2239 = vmatpush1.msra.mxu0 0.0
      %2240 = vmatprep.subr.mxu0 0.0
      %2241 = vmatpush1.msra.mxu0 0.0
      %2242 = vmatprep.mubr.f32.mxu0 0.0
      %v2243 = vand.u32 %v1441, 4294901760
      %v2244 = vsub.f32 %v1441, %v2243
      %v2245 = vand.u32 %v2244, 4294901760
      %2246 = vmatmul.mubr.f32.gmra.mrb[0].mxu0 %v2245
      %v2247 = vpop.f32.mrb[0].mxu0
      %v2248 = vadd.f32 %v2046, %v2247
      %v2249 = vpop.f32.mrb[0].mxu0
      %v2250 = vadd.f32 %v2048, %v2249
      %2251 = vmatprep.mubr.f32.mxu0 0.0
      %v2252 = vand.u32 %v1444, 4294901760
      %v2253 = vsub.f32 %v1444, %v2252
      %v2254 = vand.u32 %v2253, 4294901760
      %2255 = vmatmul.mubr.f32.gmra.mrb[0].mxu0 %v2254
      %v2256 = vpop.f32.mrb[0].mxu0
      %v2257 = vadd.f32 %v2054, %v2256
      %v2258 = vpop.f32.mrb[0].mxu0
      %v2259 = vadd.f32 %v2056, %v2258
      %2260 = vmatprep.mubr.f32.mxu0 0.0
      %v2261 = vand.u32 %v1447, 4294901760
      %v2262 = vsub.f32 %v1447, %v2261
      %v2263 = vand.u32 %v2262, 4294901760
      %2264 = vmatmul.mubr.f32.gmra.mrb[0].mxu0 %v2263
      %v2265 = vpop.f32.mrb[0].mxu0
      %v2266 = vadd.f32 %v2062, %v2265
      %v2267 = vpop.f32.mrb[0].mxu0
      %v2268 = vadd.f32 %v2064, %v2267
      %2269 = vmatprep.mubr.f32.mxu0 0.0
      %v2270 = vand.u32 %v1450, 4294901760
      %v2271 = vsub.f32 %v1450, %v2270
      %v2272 = vand.u32 %v2271, 4294901760
      %2273 = vmatmul.mubr.f32.gmra.mrb[0].mxu0 %v2272
      %v2274 = vpop.f32.mrb[0].mxu0
      %v2275 = vadd.f32 %v2070, %v2274
      %v2276 = vpop.f32.mrb[0].mxu0
      %v2277 = vadd.f32 %v2072, %v2276
      %2278 = vmatprep.mubr.f32.mxu0 0.0
      %v2279 = vand.u32 %v1453, 4294901760
      %v2280 = vsub.f32 %v1453, %v2279
      %v2281 = vand.u32 %v2280, 4294901760
      %2282 = vmatmul.mubr.f32.gmra.mrb[0].mxu0 %v2281
      %v2283 = vpop.f32.mrb[0].mxu0
      %v2284 = vadd.f32 %v2078, %v2283
      %v2285 = vpop.f32.mrb[0].mxu0
      %v2286 = vadd.f32 %v2080, %v2285
      %2287 = vmatprep.mubr.f32.mxu0 0.0
      %v2288 = vand.u32 %v1456, 4294901760
      %v2289 = vsub.f32 %v1456, %v2288
      %v2290 = vand.u32 %v2289, 4294901760
      %2291 = vmatmul.mubr.f32.gmra.mrb[0].mxu0 %v2290
      %v2292 = vpop.f32.mrb[0].mxu0
      %v2293 = vadd.f32 %v2086, %v2292
      %v2294 = vpop.f32.mrb[0].mxu0
      %v2295 = vadd.f32 %v2088, %v2294
      %2296 = vmatprep.mubr.f32.mxu0 0.0
      %v2297 = vand.u32 %v1459, 4294901760
      %v2298 = vsub.f32 %v1459, %v2297
      %v2299 = vand.u32 %v2298, 4294901760
      %2300 = vmatmul.mubr.f32.gmra.mrb[0].mxu0 %v2299
      %v2301 = vpop.f32.mrb[0].mxu0
      %v2302 = vadd.f32 %v2094, %v2301
      %v2303 = vpop.f32.mrb[0].mxu0
      %v2304 = vadd.f32 %v2096, %v2303
      %2305 = vmatprep.mubr.f32.mxu0 0.0
      %v2306 = vand.u32 %v1462, 4294901760
      %v2307 = vsub.f32 %v1462, %v2306
      %v2308 = vand.u32 %v2307, 4294901760
      %2309 = vmatmul.mubr.f32.gmra.mrb[0].mxu0 %v2308
      %v2310 = vpop.f32.mrb[0].mxu0
      %v2311 = vadd.f32 %v2102, %v2310
      %v2312 = vpop.f32.mrb[0].mxu0
      %v2313 = vadd.f32 %v2104, %v2312
      %2314 = vmatprep.mubr.f32.mxu0 0.0
      %v2315 = vand.u32 %v1465, 4294901760
      %v2316 = vsub.f32 %v1465, %v2315
      %v2317 = vand.u32 %v2316, 4294901760
      %2318 = vmatmul.mubr.f32.gmra.mrb[0].mxu0 %v2317
      %v2319 = vpop.f32.mrb[0].mxu0
      %v2320 = vadd.f32 %v2110, %v2319
      %v2321 = vpop.f32.mrb[0].mxu0
      %v2322 = vadd.f32 %v2112, %v2321
      %2323 = vmatprep.mubr.f32.mxu0 0.0
      %v2324 = vand.u32 %v1468, 4294901760
      %v2325 = vsub.f32 %v1468, %v2324
      %v2326 = vand.u32 %v2325, 4294901760
      %2327 = vmatmul.mubr.f32.gmra.mrb[0].mxu0 %v2326
      %v2328 = vpop.f32.mrb[0].mxu0
      %v2329 = vadd.f32 %v2118, %v2328
      %v2330 = vpop.f32.mrb[0].mxu0
      %v2331 = vadd.f32 %v2120, %v2330
      %2332 = vmatprep.mubr.f32.mxu0 0.0
      %v2333 = vand.u32 %v1471, 4294901760
      %v2334 = vsub.f32 %v1471, %v2333
      %v2335 = vand.u32 %v2334, 4294901760
      %2336 = vmatmul.mubr.f32.gmra.mrb[0].mxu0 %v2335
      %v2337 = vpop.f32.mrb[0].mxu0
      %v2338 = vadd.f32 %v2126, %v2337
      %v2339 = vpop.f32.mrb[0].mxu0
      %v2340 = vadd.f32 %v2128, %v2339
      %2341 = vmatprep.mubr.f32.mxu0 0.0
      %v2342 = vand.u32 %v1474, 4294901760
      %v2343 = vsub.f32 %v1474, %v2342
      %v2344 = vand.u32 %v2343, 4294901760
      %2345 = vmatmul.mubr.f32.gmra.mrb[0].mxu0 %v2344
      %v2346 = vpop.f32.mrb[0].mxu0
      %v2347 = vadd.f32 %v2134, %v2346
      %v2348 = vpop.f32.mrb[0].mxu0
      %v2349 = vadd.f32 %v2136, %v2348
      %2350 = vmatprep.mubr.f32.mxu0 0.0
      %v2351 = vand.u32 %v1477, 4294901760
      %v2352 = vsub.f32 %v1477, %v2351
      %v2353 = vand.u32 %v2352, 4294901760
      %2354 = vmatmul.mubr.f32.gmra.mrb[0].mxu0 %v2353
      %v2355 = vpop.f32.mrb[0].mxu0
      %v2356 = vadd.f32 %v2142, %v2355
      %v2357 = vpop.f32.mrb[0].mxu0
      %v2358 = vadd.f32 %v2144, %v2357
      %2359 = vmatprep.mubr.f32.mxu0 0.0
      %v2360 = vand.u32 %v1480, 4294901760
      %v2361 = vsub.f32 %v1480, %v2360
      %v2362 = vand.u32 %v2361, 4294901760
      %2363 = vmatmul.mubr.f32.gmra.mrb[0].mxu0 %v2362
      %v2364 = vpop.f32.mrb[0].mxu0
      %v2365 = vadd.f32 %v2150, %v2364
      %v2366 = vpop.f32.mrb[0].mxu0
      %v2367 = vadd.f32 %v2152, %v2366
      %2368 = vmatprep.mubr.f32.mxu0 0.0
      %v2369 = vand.u32 %v1483, 4294901760
      %v2370 = vsub.f32 %v1483, %v2369
      %v2371 = vand.u32 %v2370, 4294901760
      %2372 = vmatmul.mubr.f32.gmra.mrb[0].mxu0 %v2371
      %v2373 = vpop.f32.mrb[0].mxu0
      %v2374 = vadd.f32 %v2158, %v2373
      %v2375 = vpop.f32.mrb[0].mxu0
      %v2376 = vadd.f32 %v2160, %v2375
      %2377 = vmatprep.mubr.f32.mxu0 0.0
      %v2378 = vand.u32 %v1486, 4294901760
      %v2379 = vsub.f32 %v1486, %v2378
      %v2380 = vand.u32 %v2379, 4294901760
      %2381 = vmatmul.mubr.f32.gmra.mrb[0].mxu0 %v2380
      %v2382 = vpop.f32.mrb[0].mxu0
      %v2383 = vadd.f32 %v2166, %v2382
      %v2384 = vpop.f32.mrb[0].mxu0
      %v2385 = vadd.f32 %v2168, %v2384
      %2386 = vdwg.mxu0
      %v2387 = vand.u32 %v1320, 4294901760
      %v2388 = vsub.f32 %v1320, %v2387
      %v2389 = vand.u32 %v2388, 4294901760
      %2390 = vmatprep.subr.mxu0 %v2389
      %v2391 = vand.u32 %v1319, 4294901760
      %v2392 = vsub.f32 %v1319, %v2391
      %v2393 = vand.u32 %v2392, 4294901760
      %2394 = vmatpush1.msra.mxu0 %v2393
      %v2395 = vand.u32 %v1322, 4294901760
      %v2396 = vsub.f32 %v1322, %v2395
      %v2397 = vand.u32 %v2396, 4294901760
      %2398 = vmatprep.subr.mxu0 %v2397
      %v2399 = vand.u32 %v1321, 4294901760
      %v2400 = vsub.f32 %v1321, %v2399
      %v2401 = vand.u32 %v2400, 4294901760
      %2402 = vmatpush1.msra.mxu0 %v2401
      %v2403 = vand.u32 %v1324, 4294901760
      %v2404 = vsub.f32 %v1324, %v2403
      %v2405 = vand.u32 %v2404, 4294901760
      %2406 = vmatprep.subr.mxu0 %v2405
      %v2407 = vand.u32 %v1323, 4294901760
      %v2408 = vsub.f32 %v1323, %v2407
      %v2409 = vand.u32 %v2408, 4294901760
      %2410 = vmatpush1.msra.mxu0 %v2409
      %v2411 = vand.u32 %v1493, 4294901760
      %v2412 = vsub.f32 %v1493, %v2411
      %v2413 = vand.u32 %v2412, 4294901760
      %2414 = vmatprep.subr.mxu0 %v2413
      %v2415 = vand.u32 %v1490, 4294901760
      %v2416 = vsub.f32 %v1490, %v2415
      %v2417 = vand.u32 %v2416, 4294901760
      %2418 = vmatpush1.msra.mxu0 %v2417
      %2419 = vmatprep.subr.mxu0 0.0
      %2420 = vmatpush1.msra.mxu0 0.0
      %2421 = vmatprep.subr.mxu0 0.0
      %2422 = vmatpush1.msra.mxu0 0.0
      %2423 = vmatprep.subr.mxu0 0.0
      %2424 = vmatpush1.msra.mxu0 0.0
      %2425 = vmatprep.subr.mxu0 0.0
      %2426 = vmatpush1.msra.mxu0 0.0
      %2427 = vmatprep.subr.mxu0 0.0
      %2428 = vmatpush1.msra.mxu0 0.0
      %2429 = vmatprep.subr.mxu0 0.0
      %2430 = vmatpush1.msra.mxu0 0.0
      %2431 = vmatprep.subr.mxu0 0.0
      %2432 = vmatpush1.msra.mxu0 0.0
      %2433 = vmatprep.subr.mxu0 0.0
      %2434 = vmatpush1.msra.mxu0 0.0
      %2435 = vmatprep.subr.mxu0 0.0
      %2436 = vmatpush1.msra.mxu0 0.0
      %2437 = vmatprep.subr.mxu0 0.0
      %2438 = vmatpush1.msra.mxu0 0.0
      %2439 = vmatprep.subr.mxu0 0.0
      %2440 = vmatpush1.msra.mxu0 0.0
      %2441 = vmatprep.subr.mxu0 0.0
      %2442 = vmatpush1.msra.mxu0 0.0
      %2443 = vmatprep.subr.mxu0 0.0
      %2444 = vmatpush1.msra.mxu0 0.0
      %2445 = vmatprep.subr.mxu0 0.0
      %2446 = vmatpush1.msra.mxu0 0.0
      %2447 = vmatprep.subr.mxu0 0.0
      %2448 = vmatpush1.msra.mxu0 0.0
      %2449 = vmatprep.subr.mxu0 0.0
      %2450 = vmatpush1.msra.mxu0 0.0
      %2451 = vmatprep.subr.mxu0 0.0
      %2452 = vmatpush1.msra.mxu0 0.0
      %2453 = vmatprep.subr.mxu0 0.0
      %2454 = vmatpush1.msra.mxu0 0.0
      %2455 = vmatprep.subr.mxu0 0.0
      %2456 = vmatpush1.msra.mxu0 0.0
      %2457 = vmatprep.subr.mxu0 0.0
      %2458 = vmatpush1.msra.mxu0 0.0
      %2459 = vmatprep.subr.mxu0 0.0
      %2460 = vmatpush1.msra.mxu0 0.0
      %2461 = vmatprep.subr.mxu0 0.0
      %2462 = vmatpush1.msra.mxu0 0.0
      %2463 = vmatprep.subr.mxu0 0.0
      %2464 = vmatpush1.msra.mxu0 0.0
      %2465 = vmatprep.subr.mxu0 0.0
      %2466 = vmatpush1.msra.mxu0 0.0
      %2467 = vmatprep.subr.mxu0 0.0
      %2468 = vmatpush1.msra.mxu0 0.0
      %2469 = vmatprep.subr.mxu0 0.0
      %2470 = vmatpush1.msra.mxu0 0.0
      %2471 = vmatprep.subr.mxu0 0.0
      %2472 = vmatpush1.msra.mxu0 0.0
      %2473 = vmatprep.subr.mxu0 0.0
      %2474 = vmatpush1.msra.mxu0 0.0
      %2475 = vmatprep.mubr.f32.mxu0 0.0
      %v2476 = vand.u32 %v1441, 4294901760
      %2477 = vmatmul.mubr.f32.gmra.mrb[0].mxu0 %v2476
      %v2478 = vpop.f32.mrb[0].mxu0
      %v2479 = vadd.f32 %v2248, %v2478
      %v2480 = vpop.f32.mrb[0].mxu0
      %v2481 = vadd.f32 %v2250, %v2480
      %2482 = vmatprep.mubr.f32.mxu0 0.0
      %v2483 = vand.u32 %v1444, 4294901760
      %2484 = vmatmul.mubr.f32.gmra.mrb[0].mxu0 %v2483
      %v2485 = vpop.f32.mrb[0].mxu0
      %v2486 = vadd.f32 %v2257, %v2485
      %v2487 = vpop.f32.mrb[0].mxu0
      %v2488 = vadd.f32 %v2259, %v2487
      %2489 = vmatprep.mubr.f32.mxu0 0.0
      %v2490 = vand.u32 %v1447, 4294901760
      %2491 = vmatmul.mubr.f32.gmra.mrb[0].mxu0 %v2490
      %v2492 = vpop.f32.mrb[0].mxu0
      %v2493 = vadd.f32 %v2266, %v2492
      %v2494 = vpop.f32.mrb[0].mxu0
      %v2495 = vadd.f32 %v2268, %v2494
      %2496 = vmatprep.mubr.f32.mxu0 0.0
      %v2497 = vand.u32 %v1450, 4294901760
      %2498 = vmatmul.mubr.f32.gmra.mrb[0].mxu0 %v2497
      %v2499 = vpop.f32.mrb[0].mxu0
      %v2500 = vadd.f32 %v2275, %v2499
      %v2501 = vpop.f32.mrb[0].mxu0
      %v2502 = vadd.f32 %v2277, %v2501
      %2503 = vmatprep.mubr.f32.mxu0 0.0
      %v2504 = vand.u32 %v1453, 4294901760
      %2505 = vmatmul.mubr.f32.gmra.mrb[0].mxu0 %v2504
      %v2506 = vpop.f32.mrb[0].mxu0
      %v2507 = vadd.f32 %v2284, %v2506
      %v2508 = vpop.f32.mrb[0].mxu0
      %v2509 = vadd.f32 %v2286, %v2508
      %2510 = vmatprep.mubr.f32.mxu0 0.0
      %v2511 = vand.u32 %v1456, 4294901760
      %2512 = vmatmul.mubr.f32.gmra.mrb[0].mxu0 %v2511
      %v2513 = vpop.f32.mrb[0].mxu0
      %v2514 = vadd.f32 %v2293, %v2513
      %v2515 = vpop.f32.mrb[0].mxu0
      %v2516 = vadd.f32 %v2295, %v2515
      %2517 = vmatprep.mubr.f32.mxu0 0.0
      %v2518 = vand.u32 %v1459, 4294901760
      %2519 = vmatmul.mubr.f32.gmra.mrb[0].mxu0 %v2518
      %v2520 = vpop.f32.mrb[0].mxu0
      %v2521 = vadd.f32 %v2302, %v2520
      %v2522 = vpop.f32.mrb[0].mxu0
      %v2523 = vadd.f32 %v2304, %v2522
      %2524 = vmatprep.mubr.f32.mxu0 0.0
      %v2525 = vand.u32 %v1462, 4294901760
      %2526 = vmatmul.mubr.f32.gmra.mrb[0].mxu0 %v2525
      %v2527 = vpop.f32.mrb[0].mxu0
      %v2528 = vadd.f32 %v2311, %v2527
      %v2529 = vpop.f32.mrb[0].mxu0
      %v2530 = vadd.f32 %v2313, %v2529
      %2531 = vmatprep.mubr.f32.mxu0 0.0
      %v2532 = vand.u32 %v1465, 4294901760
      %2533 = vmatmul.mubr.f32.gmra.mrb[0].mxu0 %v2532
      %v2534 = vpop.f32.mrb[0].mxu0
      %v2535 = vadd.f32 %v2320, %v2534
      %v2536 = vpop.f32.mrb[0].mxu0
      %v2537 = vadd.f32 %v2322, %v2536
      %2538 = vmatprep.mubr.f32.mxu0 0.0
      %v2539 = vand.u32 %v1468, 4294901760
      %2540 = vmatmul.mubr.f32.gmra.mrb[0].mxu0 %v2539
      %v2541 = vpop.f32.mrb[0].mxu0
      %v2542 = vadd.f32 %v2329, %v2541
      %v2543 = vpop.f32.mrb[0].mxu0
      %v2544 = vadd.f32 %v2331, %v2543
      %2545 = vmatprep.mubr.f32.mxu0 0.0
      %v2546 = vand.u32 %v1471, 4294901760
      %2547 = vmatmul.mubr.f32.gmra.mrb[0].mxu0 %v2546
      %v2548 = vpop.f32.mrb[0].mxu0
      %v2549 = vadd.f32 %v2338, %v2548
      %v2550 = vpop.f32.mrb[0].mxu0
      %v2551 = vadd.f32 %v2340, %v2550
      %2552 = vmatprep.mubr.f32.mxu0 0.0
      %v2553 = vand.u32 %v1474, 4294901760
      %2554 = vmatmul.mubr.f32.gmra.mrb[0].mxu0 %v2553
      %v2555 = vpop.f32.mrb[0].mxu0
      %v2556 = vadd.f32 %v2347, %v2555
      %v2557 = vpop.f32.mrb[0].mxu0
      %v2558 = vadd.f32 %v2349, %v2557
      %2559 = vmatprep.mubr.f32.mxu0 0.0
      %v2560 = vand.u32 %v1477, 4294901760
      %2561 = vmatmul.mubr.f32.gmra.mrb[0].mxu0 %v2560
      %v2562 = vpop.f32.mrb[0].mxu0
      %v2563 = vadd.f32 %v2356, %v2562
      %v2564 = vpop.f32.mrb[0].mxu0
      %v2565 = vadd.f32 %v2358, %v2564
      %2566 = vmatprep.mubr.f32.mxu0 0.0
      %v2567 = vand.u32 %v1480, 4294901760
      %2568 = vmatmul.mubr.f32.gmra.mrb[0].mxu0 %v2567
      %v2569 = vpop.f32.mrb[0].mxu0
      %v2570 = vadd.f32 %v2365, %v2569
      %v2571 = vpop.f32.mrb[0].mxu0
      %v2572 = vadd.f32 %v2367, %v2571
      %2573 = vmatprep.mubr.f32.mxu0 0.0
      %v2574 = vand.u32 %v1483, 4294901760
      %2575 = vmatmul.mubr.f32.gmra.mrb[0].mxu0 %v2574
      %v2576 = vpop.f32.mrb[0].mxu0
      %v2577 = vadd.f32 %v2374, %v2576
      %v2578 = vpop.f32.mrb[0].mxu0
      %v2579 = vadd.f32 %v2376, %v2578
      %2580 = vmatprep.mubr.f32.mxu0 0.0
      %v2581 = vand.u32 %v1486, 4294901760
      %2582 = vmatmul.mubr.f32.gmra.mrb[0].mxu0 %v2581
      %v2583 = vpop.f32.mrb[0].mxu0
      %v2584 = vadd.f32 %v2383, %v2583
      %v2585 = vpop.f32.mrb[0].mxu0
      %v2586 = vadd.f32 %v2385, %v2585
      %2587 = vdwg.mxu0
      %v2588 = vand.u32 %v1320, 4294901760
      %2589 = vmatprep.subr.mxu0 %v2588
      %v2590 = vand.u32 %v1319, 4294901760
      %2591 = vmatpush1.msra.mxu0 %v2590
      %v2592 = vand.u32 %v1322, 4294901760
      %2593 = vmatprep.subr.mxu0 %v2592
      %v2594 = vand.u32 %v1321, 4294901760
      %2595 = vmatpush1.msra.mxu0 %v2594
      %v2596 = vand.u32 %v1324, 4294901760
      %2597 = vmatprep.subr.mxu0 %v2596
      %v2598 = vand.u32 %v1323, 4294901760
      %2599 = vmatpush1.msra.mxu0 %v2598
      %v2600 = vand.u32 %v1493, 4294901760
      %2601 = vmatprep.subr.mxu0 %v2600
      %v2602 = vand.u32 %v1490, 4294901760
      %2603 = vmatpush1.msra.mxu0 %v2602
      %2604 = vmatprep.subr.mxu0 0.0
      %2605 = vmatpush1.msra.mxu0 0.0
      %2606 = vmatprep.subr.mxu0 0.0
      %2607 = vmatpush1.msra.mxu0 0.0
      %2608 = vmatprep.subr.mxu0 0.0
      %2609 = vmatpush1.msra.mxu0 0.0
      %2610 = vmatprep.subr.mxu0 0.0
      %2611 = vmatpush1.msra.mxu0 0.0
      %2612 = vmatprep.subr.mxu0 0.0
      %2613 = vmatpush1.msra.mxu0 0.0
      %2614 = vmatprep.subr.mxu0 0.0
      %2615 = vmatpush1.msra.mxu0 0.0
      %2616 = vmatprep.subr.mxu0 0.0
      %2617 = vmatpush1.msra.mxu0 0.0
      %2618 = vmatprep.subr.mxu0 0.0
      %2619 = vmatpush1.msra.mxu0 0.0
      %2620 = vmatprep.subr.mxu0 0.0
      %2621 = vmatpush1.msra.mxu0 0.0
      %2622 = vmatprep.subr.mxu0 0.0
      %2623 = vmatpush1.msra.mxu0 0.0
      %2624 = vmatprep.subr.mxu0 0.0
      %2625 = vmatpush1.msra.mxu0 0.0
      %2626 = vmatprep.subr.mxu0 0.0
      %2627 = vmatpush1.msra.mxu0 0.0
      %2628 = vmatprep.subr.mxu0 0.0
      %2629 = vmatpush1.msra.mxu0 0.0
      %2630 = vmatprep.subr.mxu0 0.0
      %2631 = vmatpush1.msra.mxu0 0.0
      %2632 = vmatprep.subr.mxu0 0.0
      %2633 = vmatpush1.msra.mxu0 0.0
      %2634 = vmatprep.subr.mxu0 0.0
      %2635 = vmatpush1.msra.mxu0 0.0
      %2636 = vmatprep.subr.mxu0 0.0
      %2637 = vmatpush1.msra.mxu0 0.0
      %2638 = vmatprep.subr.mxu0 0.0
      %2639 = vmatpush1.msra.mxu0 0.0
      %2640 = vmatprep.subr.mxu0 0.0
      %2641 = vmatpush1.msra.mxu0 0.0
      %2642 = vmatprep.subr.mxu0 0.0
      %2643 = vmatpush1.msra.mxu0 0.0
      %2644 = vmatprep.subr.mxu0 0.0
      %2645 = vmatpush1.msra.mxu0 0.0
      %2646 = vmatprep.subr.mxu0 0.0
      %2647 = vmatpush1.msra.mxu0 0.0
      %2648 = vmatprep.subr.mxu0 0.0
      %2649 = vmatpush1.msra.mxu0 0.0
      %2650 = vmatprep.subr.mxu0 0.0
      %2651 = vmatpush1.msra.mxu0 0.0
      %2652 = vmatprep.subr.mxu0 0.0
      %2653 = vmatpush1.msra.mxu0 0.0
      %2654 = vmatprep.subr.mxu0 0.0
      %2655 = vmatpush1.msra.mxu0 0.0
      %2656 = vmatprep.subr.mxu0 0.0
      %2657 = vmatpush1.msra.mxu0 0.0
      %2658 = vmatprep.subr.mxu0 0.0
      %2659 = vmatpush1.msra.mxu0 0.0
      %2660 = vmatprep.mubr.f32.mxu0 0.0
      %v2661 = vand.u32 %v1441, 4294901760
      %2662 = vmatmul.mubr.f32.gmra.mrb[0].mxu0 %v2661
      %v2663 = vpop.f32.mrb[0].mxu0
      %v2664 = vadd.f32 %v2479, %v2663
      %v2665 = vpop.f32.mrb[0].mxu0
      %v2666 = vadd.f32 %v2481, %v2665
      %2667 = vmatprep.mubr.f32.mxu0 0.0
      %v2668 = vand.u32 %v1444, 4294901760
      %2669 = vmatmul.mubr.f32.gmra.mrb[0].mxu0 %v2668
      %v2670 = vpop.f32.mrb[0].mxu0
      %v2671 = vadd.f32 %v2486, %v2670
      %v2672 = vpop.f32.mrb[0].mxu0
      %v2673 = vadd.f32 %v2488, %v2672
      %2674 = vmatprep.mubr.f32.mxu0 0.0
      %v2675 = vand.u32 %v1447, 4294901760
      %2676 = vmatmul.mubr.f32.gmra.mrb[0].mxu0 %v2675
      %v2677 = vpop.f32.mrb[0].mxu0
      %v2678 = vadd.f32 %v2493, %v2677
      %v2679 = vpop.f32.mrb[0].mxu0
      %v2680 = vadd.f32 %v2495, %v2679
      %2681 = vmatprep.mubr.f32.mxu0 0.0
      %v2682 = vand.u32 %v1450, 4294901760
      %2683 = vmatmul.mubr.f32.gmra.mrb[0].mxu0 %v2682
      %v2684 = vpop.f32.mrb[0].mxu0
      %v2685 = vadd.f32 %v2500, %v2684
      %v2686 = vpop.f32.mrb[0].mxu0
      %v2687 = vadd.f32 %v2502, %v2686
      %2688 = vmatprep.mubr.f32.mxu0 0.0
      %v2689 = vand.u32 %v1453, 4294901760
      %2690 = vmatmul.mubr.f32.gmra.mrb[0].mxu0 %v2689
      %v2691 = vpop.f32.mrb[0].mxu0
      %v2692 = vadd.f32 %v2507, %v2691
      %v2693 = vpop.f32.mrb[0].mxu0
      %v2694 = vadd.f32 %v2509, %v2693
      %2695 = vmatprep.mubr.f32.mxu0 0.0
      %v2696 = vand.u32 %v1456, 4294901760
      %2697 = vmatmul.mubr.f32.gmra.mrb[0].mxu0 %v2696
      %v2698 = vpop.f32.mrb[0].mxu0
      %v2699 = vadd.f32 %v2514, %v2698
      %v2700 = vpop.f32.mrb[0].mxu0
      %v2701 = vadd.f32 %v2516, %v2700
      %2702 = vmatprep.mubr.f32.mxu0 0.0
      %v2703 = vand.u32 %v1459, 4294901760
      %2704 = vmatmul.mubr.f32.gmra.mrb[0].mxu0 %v2703
      %v2705 = vpop.f32.mrb[0].mxu0
      %v2706 = vadd.f32 %v2521, %v2705
      %v2707 = vpop.f32.mrb[0].mxu0
      %v2708 = vadd.f32 %v2523, %v2707
      %2709 = vmatprep.mubr.f32.mxu0 0.0
      %v2710 = vand.u32 %v1462, 4294901760
      %2711 = vmatmul.mubr.f32.gmra.mrb[0].mxu0 %v2710
      %v2712 = vpop.f32.mrb[0].mxu0
      %v2713 = vadd.f32 %v2528, %v2712
      %v2714 = vpop.f32.mrb[0].mxu0
      %v2715 = vadd.f32 %v2530, %v2714
      %2716 = vmatprep.mubr.f32.mxu0 0.0
      %v2717 = vand.u32 %v1465, 4294901760
      %2718 = vmatmul.mubr.f32.gmra.mrb[0].mxu0 %v2717
      %v2719 = vpop.f32.mrb[0].mxu0
      %v2720 = vadd.f32 %v2535, %v2719
      %v2721 = vpop.f32.mrb[0].mxu0
      %v2722 = vadd.f32 %v2537, %v2721
      %2723 = vmatprep.mubr.f32.mxu0 0.0
      %v2724 = vand.u32 %v1468, 4294901760
      %2725 = vmatmul.mubr.f32.gmra.mrb[0].mxu0 %v2724
      %v2726 = vpop.f32.mrb[0].mxu0
      %v2727 = vadd.f32 %v2542, %v2726
      %v2728 = vpop.f32.mrb[0].mxu0
      %v2729 = vadd.f32 %v2544, %v2728
      %2730 = vmatprep.mubr.f32.mxu0 0.0
      %v2731 = vand.u32 %v1471, 4294901760
      %2732 = vmatmul.mubr.f32.gmra.mrb[0].mxu0 %v2731
      %v2733 = vpop.f32.mrb[0].mxu0
      %v2734 = vadd.f32 %v2549, %v2733
      %v2735 = vpop.f32.mrb[0].mxu0
      %v2736 = vadd.f32 %v2551, %v2735
      %2737 = vmatprep.mubr.f32.mxu0 0.0
      %v2738 = vand.u32 %v1474, 4294901760
      %2739 = vmatmul.mubr.f32.gmra.mrb[0].mxu0 %v2738
      %v2740 = vpop.f32.mrb[0].mxu0
      %v2741 = vadd.f32 %v2556, %v2740
      %v2742 = vpop.f32.mrb[0].mxu0
      %v2743 = vadd.f32 %v2558, %v2742
      %2744 = vmatprep.mubr.f32.mxu0 0.0
      %v2745 = vand.u32 %v1477, 4294901760
      %2746 = vmatmul.mubr.f32.gmra.mrb[0].mxu0 %v2745
      %v2747 = vpop.f32.mrb[0].mxu0
      %v2748 = vadd.f32 %v2563, %v2747
      %v2749 = vpop.f32.mrb[0].mxu0
      %v2750 = vadd.f32 %v2565, %v2749
      %2751 = vmatprep.mubr.f32.mxu0 0.0
      %v2752 = vand.u32 %v1480, 4294901760
      %2753 = vmatmul.mubr.f32.gmra.mrb[0].mxu0 %v2752
      %v2754 = vpop.f32.mrb[0].mxu0
      %v2755 = vadd.f32 %v2570, %v2754
      %v2756 = vpop.f32.mrb[0].mxu0
      %v2757 = vadd.f32 %v2572, %v2756
      %2758 = vmatprep.mubr.f32.mxu0 0.0
      %v2759 = vand.u32 %v1483, 4294901760
      %2760 = vmatmul.mubr.f32.gmra.mrb[0].mxu0 %v2759
      %v2761 = vpop.f32.mrb[0].mxu0
      %v2762 = vadd.f32 %v2577, %v2761
      %v2763 = vpop.f32.mrb[0].mxu0
      %v2764 = vadd.f32 %v2579, %v2763
      %2765 = vmatprep.mubr.f32.mxu0 0.0
      %v2766 = vand.u32 %v1486, 4294901760
      %2767 = vmatmul.mubr.f32.gmra.mrb[0].mxu0 %v2766
      %v2768 = vpop.f32.mrb[0].mxu0
      %v2769 = vadd.f32 %v2584, %v2768
      %v2770 = vpop.f32.mrb[0].mxu0
      %v2771 = vadd.f32 %v2586, %v2770
      %2772 = vdwg.mxu0
      %v2773 = vmul.f32 %v2664, 100.0
      %v2774 = vmul.f32 %v2666, 100.0
      %v2775 = vmul.f32 %v2671, 100.0
      %v2776 = vmul.f32 %v2673, 100.0
      %v2777 = vmul.f32 %v2678, 100.0
      %v2778 = vmul.f32 %v2680, 100.0
      %v2779 = vmul.f32 %v2685, 100.0
      %v2780 = vmul.f32 %v2687, 100.0
      %v2781 = vmul.f32 %v2692, 100.0
      %v2782 = vmul.f32 %v2694, 100.0
      %v2783 = vmul.f32 %v2699, 100.0
      %v2784 = vmul.f32 %v2701, 100.0
      %v2785 = vmul.f32 %v2706, 100.0
      %v2786 = vmul.f32 %v2708, 100.0
      %v2787 = vmul.f32 %v2713, 100.0
      %v2788 = vmul.f32 %v2715, 100.0
      %v2789 = vmul.f32 %v2720, 100.0
      %v2790 = vmul.f32 %v2722, 100.0
      %v2791 = vmul.f32 %v2727, 100.0
      %v2792 = vmul.f32 %v2729, 100.0
      %v2793 = vmul.f32 %v2734, 100.0
      %v2794 = vmul.f32 %v2736, 100.0
      %v2795 = vmul.f32 %v2741, 100.0
      %v2796 = vmul.f32 %v2743, 100.0
      %v2797 = vmul.f32 %v2748, 100.0
      %v2798 = vmul.f32 %v2750, 100.0
      %v2799 = vmul.f32 %v2755, 100.0
      %v2800 = vmul.f32 %v2757, 100.0
      %v2801 = vmul.f32 %v2762, 100.0
      %v2802 = vmul.f32 %v2764, 100.0
      %v2803 = vmul.f32 %v2769, 100.0
      %v2804 = vmul.f32 %v2771, 100.0
      %v2805 = vmin.f32 %v2773, 20.0
      %v2806 = vmin.f32 %v2774, 20.0
      %v2807 = vmin.f32 %v2775, 20.0
      %v2808 = vmin.f32 %v2776, 20.0
      %v2809 = vmin.f32 %v2777, 20.0
      %v2810 = vmin.f32 %v2778, 20.0
      %v2811 = vmin.f32 %v2779, 20.0
      %v2812 = vmin.f32 %v2780, 20.0
      %v2813 = vmin.f32 %v2781, 20.0
      %v2814 = vmin.f32 %v2782, 20.0
      %v2815 = vmin.f32 %v2783, 20.0
      %v2816 = vmin.f32 %v2784, 20.0
      %v2817 = vmin.f32 %v2785, 20.0
      %v2818 = vmin.f32 %v2786, 20.0
      %v2819 = vmin.f32 %v2787, 20.0
      %v2820 = vmin.f32 %v2788, 20.0
      %v2821 = vmin.f32 %v2789, 20.0
      %v2822 = vmin.f32 %v2790, 20.0
      %v2823 = vmin.f32 %v2791, 20.0
      %v2824 = vmin.f32 %v2792, 20.0
      %v2825 = vmin.f32 %v2793, 20.0
      %v2826 = vmin.f32 %v2794, 20.0
      %v2827 = vmin.f32 %v2795, 20.0
      %v2828 = vmin.f32 %v2796, 20.0
      %v2829 = vmin.f32 %v2797, 20.0
      %v2830 = vmin.f32 %v2798, 20.0
      %v2831 = vmin.f32 %v2799, 20.0
      %v2832 = vmin.f32 %v2800, 20.0
      %v2833 = vmin.f32 %v2801, 20.0
      %v2834 = vmin.f32 %v2802, 20.0
      %v2835 = vmin.f32 %v2803, 20.0
      %v2836 = vmin.f32 %v2804, 20.0
      %v2837 = vmul.f32 %v2805, 1.442695
      %v2838 = vpow.pop %v2837
      %v2839 = vmul.f32 %v2806, 1.442695
      %v2840 = vpow.pop %v2839
      %v2841 = vmul.f32 %v2807, 1.442695
      %v2842 = vpow.pop %v2841
      %v2843 = vmul.f32 %v2808, 1.442695
      %v2844 = vpow.pop %v2843
      %v2845 = vmul.f32 %v2809, 1.442695
      %v2846 = vpow.pop %v2845
      %v2847 = vmul.f32 %v2810, 1.442695
      %v2848 = vpow.pop %v2847
      %v2849 = vmul.f32 %v2811, 1.442695
      %v2850 = vpow.pop %v2849
      %v2851 = vmul.f32 %v2812, 1.442695
      %v2852 = vpow.pop %v2851
      %v2853 = vmul.f32 %v2813, 1.442695
      %v2854 = vpow.pop %v2853
      %v2855 = vmul.f32 %v2814, 1.442695
      %v2856 = vpow.pop %v2855
      %v2857 = vmul.f32 %v2815, 1.442695
      %v2858 = vpow.pop %v2857
      %v2859 = vmul.f32 %v2816, 1.442695
      %v2860 = vpow.pop %v2859
      %v2861 = vmul.f32 %v2817, 1.442695
      %v2862 = vpow.pop %v2861
      %v2863 = vmul.f32 %v2818, 1.442695
      %v2864 = vpow.pop %v2863
      %v2865 = vmul.f32 %v2819, 1.442695
      %v2866 = vpow.pop %v2865
      %v2867 = vmul.f32 %v2820, 1.442695
      %v2868 = vpow.pop %v2867
      %v2869 = vmul.f32 %v2821, 1.442695
      %v2870 = vpow.pop %v2869
      %v2871 = vmul.f32 %v2822, 1.442695
      %v2872 = vpow.pop %v2871
      %v2873 = vmul.f32 %v2823, 1.442695
      %v2874 = vpow.pop %v2873
      %v2875 = vmul.f32 %v2824, 1.442695
      %v2876 = vpow.pop %v2875
      %v2877 = vmul.f32 %v2825, 1.442695
      %v2878 = vpow.pop %v2877
      %v2879 = vmul.f32 %v2826, 1.442695
      %v2880 = vpow.pop %v2879
      %v2881 = vmul.f32 %v2827, 1.442695
      %v2882 = vpow.pop %v2881
      %v2883 = vmul.f32 %v2828, 1.442695
      %v2884 = vpow.pop %v2883
      %v2885 = vmul.f32 %v2829, 1.442695
      %v2886 = vpow.pop %v2885
      %v2887 = vmul.f32 %v2830, 1.442695
      %v2888 = vpow.pop %v2887
      %v2889 = vmul.f32 %v2831, 1.442695
      %v2890 = vpow.pop %v2889
      %v2891 = vmul.f32 %v2832, 1.442695
      %v2892 = vpow.pop %v2891
      %v2893 = vmul.f32 %v2833, 1.442695
      %v2894 = vpow.pop %v2893
      %v2895 = vmul.f32 %v2834, 1.442695
      %v2896 = vpow.pop %v2895
      %v2897 = vmul.f32 %v2835, 1.442695
      %v2898 = vpow.pop %v2897
      %v2899 = vmul.f32 %v2836, 1.442695
      %v2900 = vpow.pop %v2899
      %v2901 = vadd.f32 %v2838, 1.0
      %v2902 = vadd.f32 %v2840, 1.0
      %v2903 = vadd.f32 %v2842, 1.0
      %v2904 = vadd.f32 %v2844, 1.0
      %v2905 = vadd.f32 %v2846, 1.0
      %v2906 = vadd.f32 %v2848, 1.0
      %v2907 = vadd.f32 %v2850, 1.0
      %v2908 = vadd.f32 %v2852, 1.0
      %v2909 = vadd.f32 %v2854, 1.0
      %v2910 = vadd.f32 %v2856, 1.0
      %v2911 = vadd.f32 %v2858, 1.0
      %v2912 = vadd.f32 %v2860, 1.0
      %v2913 = vadd.f32 %v2862, 1.0
      %v2914 = vadd.f32 %v2864, 1.0
      %v2915 = vadd.f32 %v2866, 1.0
      %v2916 = vadd.f32 %v2868, 1.0
      %v2917 = vadd.f32 %v2870, 1.0
      %v2918 = vadd.f32 %v2872, 1.0
      %v2919 = vadd.f32 %v2874, 1.0
      %v2920 = vadd.f32 %v2876, 1.0
      %v2921 = vadd.f32 %v2878, 1.0
      %v2922 = vadd.f32 %v2880, 1.0
      %v2923 = vadd.f32 %v2882, 1.0
      %v2924 = vadd.f32 %v2884, 1.0
      %v2925 = vadd.f32 %v2886, 1.0
      %v2926 = vadd.f32 %v2888, 1.0
      %v2927 = vadd.f32 %v2890, 1.0
      %v2928 = vadd.f32 %v2892, 1.0
      %v2929 = vadd.f32 %v2894, 1.0
      %v2930 = vadd.f32 %v2896, 1.0
      %v2931 = vadd.f32 %v2898, 1.0
      %v2932 = vadd.f32 %v2900, 1.0
      %v2933 = vlog2.pop %v2901
      %v2934 = vmul.f32 %v2933, 0.6931472
      %v2935 = vlog2.pop %v2902
      %v2936 = vmul.f32 %v2935, 0.6931472
      %v2937 = vlog2.pop %v2903
      %v2938 = vmul.f32 %v2937, 0.6931472
      %v2939 = vlog2.pop %v2904
      %v2940 = vmul.f32 %v2939, 0.6931472
      %v2941 = vlog2.pop %v2905
      %v2942 = vmul.f32 %v2941, 0.6931472
      %v2943 = vlog2.pop %v2906
      %v2944 = vmul.f32 %v2943, 0.6931472
      %v2945 = vlog2.pop %v2907
      %v2946 = vmul.f32 %v2945, 0.6931472
      %v2947 = vlog2.pop %v2908
      %v2948 = vmul.f32 %v2947, 0.6931472
      %v2949 = vlog2.pop %v2909
      %v2950 = vmul.f32 %v2949, 0.6931472
      %v2951 = vlog2.pop %v2910
      %v2952 = vmul.f32 %v2951, 0.6931472
      %v2953 = vlog2.pop %v2911
      %v2954 = vmul.f32 %v2953, 0.6931472
      %v2955 = vlog2.pop %v2912
      %v2956 = vmul.f32 %v2955, 0.6931472
      %v2957 = vlog2.pop %v2913
      %v2958 = vmul.f32 %v2957, 0.6931472
      %v2959 = vlog2.pop %v2914
      %v2960 = vmul.f32 %v2959, 0.6931472
      %v2961 = vlog2.pop %v2915
      %v2962 = vmul.f32 %v2961, 0.6931472
      %v2963 = vlog2.pop %v2916
      %v2964 = vmul.f32 %v2963, 0.6931472
      %v2965 = vlog2.pop %v2917
      %v2966 = vmul.f32 %v2965, 0.6931472
      %v2967 = vlog2.pop %v2918
      %v2968 = vmul.f32 %v2967, 0.6931472
      %v2969 = vlog2.pop %v2919
      %v2970 = vmul.f32 %v2969, 0.6931472
      %v2971 = vlog2.pop %v2920
      %v2972 = vmul.f32 %v2971, 0.6931472
      %v2973 = vlog2.pop %v2921
      %v2974 = vmul.f32 %v2973, 0.6931472
      %v2975 = vlog2.pop %v2922
      %v2976 = vmul.f32 %v2975, 0.6931472
      %v2977 = vlog2.pop %v2923
      %v2978 = vmul.f32 %v2977, 0.6931472
      %v2979 = vlog2.pop %v2924
      %v2980 = vmul.f32 %v2979, 0.6931472
      %v2981 = vlog2.pop %v2925
      %v2982 = vmul.f32 %v2981, 0.6931472
      %v2983 = vlog2.pop %v2926
      %v2984 = vmul.f32 %v2983, 0.6931472
      %v2985 = vlog2.pop %v2927
      %v2986 = vmul.f32 %v2985, 0.6931472
      %v2987 = vlog2.pop %v2928
      %v2988 = vmul.f32 %v2987, 0.6931472
      %v2989 = vlog2.pop %v2929
      %v2990 = vmul.f32 %v2989, 0.6931472
      %v2991 = vlog2.pop %v2930
      %v2992 = vmul.f32 %v2991, 0.6931472
      %v2993 = vlog2.pop %v2931
      %v2994 = vmul.f32 %v2993, 0.6931472
      %v2995 = vlog2.pop %v2932
      %v2996 = vmul.f32 %v2995, 0.6931472
      %v2997 = vmul.f32 %v2934, 0.01
      %v2998 = vmul.f32 %v2936, 0.01
      %v2999 = vmul.f32 %v2938, 0.01
      %v3000 = vmul.f32 %v2940, 0.01
      %v3001 = vmul.f32 %v2942, 0.01
      %v3002 = vmul.f32 %v2944, 0.01
      %v3003 = vmul.f32 %v2946, 0.01
      %v3004 = vmul.f32 %v2948, 0.01
      %v3005 = vmul.f32 %v2950, 0.01
      %v3006 = vmul.f32 %v2952, 0.01
      %v3007 = vmul.f32 %v2954, 0.01
      %v3008 = vmul.f32 %v2956, 0.01
      %v3009 = vmul.f32 %v2958, 0.01
      %v3010 = vmul.f32 %v2960, 0.01
      %v3011 = vmul.f32 %v2962, 0.01
      %v3012 = vmul.f32 %v2964, 0.01
      %v3013 = vmul.f32 %v2966, 0.01
      %v3014 = vmul.f32 %v2968, 0.01
      %v3015 = vmul.f32 %v2970, 0.01
      %v3016 = vmul.f32 %v2972, 0.01
      %v3017 = vmul.f32 %v2974, 0.01
      %v3018 = vmul.f32 %v2976, 0.01
      %v3019 = vmul.f32 %v2978, 0.01
      %v3020 = vmul.f32 %v2980, 0.01
      %v3021 = vmul.f32 %v2982, 0.01
      %v3022 = vmul.f32 %v2984, 0.01
      %v3023 = vmul.f32 %v2986, 0.01
      %v3024 = vmul.f32 %v2988, 0.01
      %v3025 = vmul.f32 %v2990, 0.01
      %v3026 = vmul.f32 %v2992, 0.01
      %v3027 = vmul.f32 %v2994, 0.01
      %v3028 = vmul.f32 %v2996, 0.01
      %vm3029 = vcmp.gt.f32.partialorder %v2773, 20.0
      %vm3030 = vcmp.gt.f32.partialorder %v2774, 20.0
      %vm3031 = vcmp.gt.f32.partialorder %v2775, 20.0
      %vm3032 = vcmp.gt.f32.partialorder %v2776, 20.0
      %vm3033 = vcmp.gt.f32.partialorder %v2777, 20.0
      %vm3034 = vcmp.gt.f32.partialorder %v2778, 20.0
      %vm3035 = vcmp.gt.f32.partialorder %v2779, 20.0
      %vm3036 = vcmp.gt.f32.partialorder %v2780, 20.0
      %vm3037 = vcmp.gt.f32.partialorder %v2781, 20.0
      %vm3038 = vcmp.gt.f32.partialorder %v2782, 20.0
      %vm3039 = vcmp.gt.f32.partialorder %v2783, 20.0
      %vm3040 = vcmp.gt.f32.partialorder %v2784, 20.0
      %vm3041 = vcmp.gt.f32.partialorder %v2785, 20.0
      %vm3042 = vcmp.gt.f32.partialorder %v2786, 20.0
      %vm3043 = vcmp.gt.f32.partialorder %v2787, 20.0
      %vm3044 = vcmp.gt.f32.partialorder %v2788, 20.0
      %vm3045 = vcmp.gt.f32.partialorder %v2789, 20.0
      %vm3046 = vcmp.gt.f32.partialorder %v2790, 20.0
      %vm3047 = vcmp.gt.f32.partialorder %v2791, 20.0
      %vm3048 = vcmp.gt.f32.partialorder %v2792, 20.0
      %vm3049 = vcmp.gt.f32.partialorder %v2793, 20.0
      %vm3050 = vcmp.gt.f32.partialorder %v2794, 20.0
      %vm3051 = vcmp.gt.f32.partialorder %v2795, 20.0
      %vm3052 = vcmp.gt.f32.partialorder %v2796, 20.0
      %vm3053 = vcmp.gt.f32.partialorder %v2797, 20.0
      %vm3054 = vcmp.gt.f32.partialorder %v2798, 20.0
      %vm3055 = vcmp.gt.f32.partialorder %v2799, 20.0
      %vm3056 = vcmp.gt.f32.partialorder %v2800, 20.0
      %vm3057 = vcmp.gt.f32.partialorder %v2801, 20.0
      %vm3058 = vcmp.gt.f32.partialorder %v2802, 20.0
      %vm3059 = vcmp.gt.f32.partialorder %v2803, 20.0
      %vm3060 = vcmp.gt.f32.partialorder %v2804, 20.0
      %v3061 = vsel %vm3029, %v2664, %v2997
      %v3062 = vsel %vm3030, %v2666, %v2998
      %v3063 = vsel %vm3031, %v2671, %v2999
      %v3064 = vsel %vm3032, %v2673, %v3000
      %v3065 = vsel %vm3033, %v2678, %v3001
      %v3066 = vsel %vm3034, %v2680, %v3002
      %v3067 = vsel %vm3035, %v2685, %v3003
      %v3068 = vsel %vm3036, %v2687, %v3004
      %v3069 = vsel %vm3037, %v2692, %v3005
      %v3070 = vsel %vm3038, %v2694, %v3006
      %v3071 = vsel %vm3039, %v2699, %v3007
      %v3072 = vsel %vm3040, %v2701, %v3008
      %v3073 = vsel %vm3041, %v2706, %v3009
      %v3074 = vsel %vm3042, %v2708, %v3010
      %v3075 = vsel %vm3043, %v2713, %v3011
      %v3076 = vsel %vm3044, %v2715, %v3012
      %v3077 = vsel %vm3045, %v2720, %v3013
      %v3078 = vsel %vm3046, %v2722, %v3014
      %v3079 = vsel %vm3047, %v2727, %v3015
      %v3080 = vsel %vm3048, %v2729, %v3016
      %v3081 = vsel %vm3049, %v2734, %v3017
      %v3082 = vsel %vm3050, %v2736, %v3018
      %v3083 = vsel %vm3051, %v2741, %v3019
      %v3084 = vsel %vm3052, %v2743, %v3020
      %v3085 = vsel %vm3053, %v2748, %v3021
      %v3086 = vsel %vm3054, %v2750, %v3022
      %v3087 = vsel %vm3055, %v2755, %v3023
      %v3088 = vsel %vm3056, %v2757, %v3024
      %v3089 = vsel %vm3057, %v2762, %v3025
      %v3090 = vsel %vm3058, %v2764, %v3026
      %v3091 = vsel %vm3059, %v2769, %v3027
      %v3092 = vsel %vm3060, %v2771, %v3028
      %v3093 = vld [vmem:[%s5] sm:$0xff]
      %v3094 = vld [vmem:[%s5 + $0x8] sm:$0xff]
      %v3095 = vld [vmem:[%s5 + $0x10] sm:$0xff]
      %v3096 = vld [vmem:[%s5 + $0x18] sm:$0xff]
      %v3097 = vld [vmem:[%s5 + $0x20] sm:$0xff]
      %v3098 = vld [vmem:[%s5 + $0x28] sm:$0xff]
      %v3099 = vld [vmem:[%s5 + $0x30] sm:$0xff]
      %v3100 = vld [vmem:[%s5 + $0x38] sm:$0xff]
      %v3101 = vld [vmem:[%s5 + $0x40] sm:$0xff]
      %v3102 = vld [vmem:[%s5 + $0x48] sm:$0xff]
      %v3103 = vld [vmem:[%s5 + $0x50] sm:$0xff]
      %v3104 = vld [vmem:[%s5 + $0x58] sm:$0xff]
      %v3105 = vld [vmem:[%s5 + $0x60] sm:$0xff]
      %v3106 = vld [vmem:[%s5 + $0x68] sm:$0xff]
      %v3107 = vld [vmem:[%s5 + $0x70] sm:$0xff]
      %v3108 = vld [vmem:[%s5 + $0x78] sm:$0xff]
      %v3109 = vld [vmem:[%s6] sm:$0xff]
      %v3110 = vld [vmem:[%s6 + $0x8] sm:$0xff]
      %v3111 = vld [vmem:[%s6 + $0x10] sm:$0xff]
      %v3112 = vld [vmem:[%s6 + $0x18] sm:$0xff]
      %v3113 = vld [vmem:[%s6 + $0x20] sm:$0xff]
      %v3114 = vld [vmem:[%s6 + $0x28] sm:$0xff]
      %v3115 = vld [vmem:[%s6 + $0x30] sm:$0xff]
      %v3116 = vld [vmem:[%s6 + $0x38] sm:$0xff]
      %v3117 = vld [vmem:[%s6 + $0x40] sm:$0xff]
      %v3118 = vld [vmem:[%s6 + $0x48] sm:$0xff]
      %v3119 = vld [vmem:[%s6 + $0x50] sm:$0xff]
      %v3120 = vld [vmem:[%s6 + $0x58] sm:$0xff]
      %v3121 = vld [vmem:[%s6 + $0x60] sm:$0xff]
      %v3122 = vld [vmem:[%s6 + $0x68] sm:$0xff]
      %v3123 = vld [vmem:[%s6 + $0x70] sm:$0xff]
      %v3124 = vld [vmem:[%s6 + $0x78] sm:$0xff]
      %3126 = vset.pattern.permute.xlu0 0
      %3127 = vperm.xlu0 %3126, %v3109
      %v3128 = vpop.permute.xlu0 %3127
      %3131 = vset.pattern.permute.xlu0 0
      %3132 = vperm.xlu0 %3131, %v3110
      %v3133 = vpop.permute.xlu0 %3132
      %3136 = vset.pattern.permute.xlu0 0
      %3137 = vperm.xlu0 %3136, %v3111
      %v3138 = vpop.permute.xlu0 %3137
      %3141 = vset.pattern.permute.xlu0 0
      %3142 = vperm.xlu0 %3141, %v3112
      %v3143 = vpop.permute.xlu0 %3142
      %3146 = vset.pattern.permute.xlu0 0
      %3147 = vperm.xlu0 %3146, %v3113
      %v3148 = vpop.permute.xlu0 %3147
      %3151 = vset.pattern.permute.xlu0 0
      %3152 = vperm.xlu0 %3151, %v3114
      %v3153 = vpop.permute.xlu0 %3152
      %3156 = vset.pattern.permute.xlu0 0
      %3157 = vperm.xlu0 %3156, %v3115
      %v3158 = vpop.permute.xlu0 %3157
      %3161 = vset.pattern.permute.xlu0 0
      %3162 = vperm.xlu0 %3161, %v3116
      %v3163 = vpop.permute.xlu0 %3162
      %3166 = vset.pattern.permute.xlu0 0
      %3167 = vperm.xlu0 %3166, %v3117
      %v3168 = vpop.permute.xlu0 %3167
      %3171 = vset.pattern.permute.xlu0 0
      %3172 = vperm.xlu0 %3171, %v3118
      %v3173 = vpop.permute.xlu0 %3172
      %3176 = vset.pattern.permute.xlu0 0
      %3177 = vperm.xlu0 %3176, %v3119
      %v3178 = vpop.permute.xlu0 %3177
      %3181 = vset.pattern.permute.xlu0 0
      %3182 = vperm.xlu0 %3181, %v3120
      %v3183 = vpop.permute.xlu0 %3182
      %3186 = vset.pattern.permute.xlu0 0
      %3187 = vperm.xlu0 %3186, %v3121
      %v3188 = vpop.permute.xlu0 %3187
      %3191 = vset.pattern.permute.xlu0 0
      %3192 = vperm.xlu0 %3191, %v3122
      %v3193 = vpop.permute.xlu0 %3192
      %3196 = vset.pattern.permute.xlu0 0
      %3197 = vperm.xlu0 %3196, %v3123
      %v3198 = vpop.permute.xlu0 %3197
      %3201 = vset.pattern.permute.xlu0 0
      %3202 = vperm.xlu0 %3201, %v3124
      %v3203 = vpop.permute.xlu0 %3202
      %v3205 = vand.u32 %v3062, 4294901760
      %3206 = vmatprep.subr.mxu0 %v3205
      %v3207 = vand.u32 %v3061, 4294901760
      %3208 = vmatpush1.msra.mxu0 %v3207
      %v3209 = vand.u32 %v3064, 4294901760
      %3210 = vmatprep.subr.mxu0 %v3209
      %v3211 = vand.u32 %v3063, 4294901760
      %3212 = vmatpush1.msra.mxu0 %v3211
      %v3213 = vand.u32 %v3066, 4294901760
      %3214 = vmatprep.subr.mxu0 %v3213
      %v3215 = vand.u32 %v3065, 4294901760
      %3216 = vmatpush1.msra.mxu0 %v3215
      %v3217 = vand.u32 %v3068, 4294901760
      %3218 = vmatprep.subr.mxu0 %v3217
      %v3219 = vand.u32 %v3067, 4294901760
      %3220 = vmatpush1.msra.mxu0 %v3219
      %v3221 = vand.u32 %v3070, 4294901760
      %3222 = vmatprep.subr.mxu0 %v3221
      %v3223 = vand.u32 %v3069, 4294901760
      %3224 = vmatpush1.msra.mxu0 %v3223
      %v3225 = vand.u32 %v3072, 4294901760
      %3226 = vmatprep.subr.mxu0 %v3225
      %v3227 = vand.u32 %v3071, 4294901760
      %3228 = vmatpush1.msra.mxu0 %v3227
      %v3229 = vand.u32 %v3074, 4294901760
      %3230 = vmatprep.subr.mxu0 %v3229
      %v3231 = vand.u32 %v3073, 4294901760
      %3232 = vmatpush1.msra.mxu0 %v3231
      %v3233 = vand.u32 %v3076, 4294901760
      %3234 = vmatprep.subr.mxu0 %v3233
      %v3235 = vand.u32 %v3075, 4294901760
      %3236 = vmatpush1.msra.mxu0 %v3235
      %v3237 = vand.u32 %v3078, 4294901760
      %3238 = vmatprep.subr.mxu0 %v3237
      %v3239 = vand.u32 %v3077, 4294901760
      %3240 = vmatpush1.msra.mxu0 %v3239
      %v3241 = vand.u32 %v3080, 4294901760
      %3242 = vmatprep.subr.mxu0 %v3241
      %v3243 = vand.u32 %v3079, 4294901760
      %3244 = vmatpush1.msra.mxu0 %v3243
      %v3245 = vand.u32 %v3082, 4294901760
      %3246 = vmatprep.subr.mxu0 %v3245
      %v3247 = vand.u32 %v3081, 4294901760
      %3248 = vmatpush1.msra.mxu0 %v3247
      %v3249 = vand.u32 %v3084, 4294901760
      %3250 = vmatprep.subr.mxu0 %v3249
      %v3251 = vand.u32 %v3083, 4294901760
      %3252 = vmatpush1.msra.mxu0 %v3251
      %v3253 = vand.u32 %v3086, 4294901760
      %3254 = vmatprep.subr.mxu0 %v3253
      %v3255 = vand.u32 %v3085, 4294901760
      %3256 = vmatpush1.msra.mxu0 %v3255
      %v3257 = vand.u32 %v3088, 4294901760
      %3258 = vmatprep.subr.mxu0 %v3257
      %v3259 = vand.u32 %v3087, 4294901760
      %3260 = vmatpush1.msra.mxu0 %v3259
      %v3261 = vand.u32 %v3090, 4294901760
      %3262 = vmatprep.subr.mxu0 %v3261
      %v3263 = vand.u32 %v3089, 4294901760
      %3264 = vmatpush1.msra.mxu0 %v3263
      %v3265 = vand.u32 %v3092, 4294901760
      %3266 = vmatprep.subr.mxu0 %v3265
      %v3267 = vand.u32 %v3091, 4294901760
      %3268 = vmatpush1.msra.mxu0 %v3267
      %3269 = vmatprep.subr.mxu0 0.0
      %3270 = vmatpush1.msra.mxu0 0.0
      %3271 = vmatprep.subr.mxu0 0.0
      %3272 = vmatpush1.msra.mxu0 0.0
      %3273 = vmatprep.subr.mxu0 0.0
      %3274 = vmatpush1.msra.mxu0 0.0
      %3275 = vmatprep.subr.mxu0 0.0
      %3276 = vmatpush1.msra.mxu0 0.0
      %3277 = vmatprep.subr.mxu0 0.0
      %3278 = vmatpush1.msra.mxu0 0.0
      %3279 = vmatprep.subr.mxu0 0.0
      %3280 = vmatpush1.msra.mxu0 0.0
      %3281 = vmatprep.subr.mxu0 0.0
      %3282 = vmatpush1.msra.mxu0 0.0
      %3283 = vmatprep.subr.mxu0 0.0
      %3284 = vmatpush1.msra.mxu0 0.0
      %3285 = vmatprep.subr.mxu0 0.0
      %3286 = vmatpush1.msra.mxu0 0.0
      %3287 = vmatprep.subr.mxu0 0.0
      %3288 = vmatpush1.msra.mxu0 0.0
      %3289 = vmatprep.subr.mxu0 0.0
      %3290 = vmatpush1.msra.mxu0 0.0
      %3291 = vmatprep.subr.mxu0 0.0
      %3292 = vmatpush1.msra.mxu0 0.0
      %3293 = vmatprep.subr.mxu0 0.0
      %3294 = vmatpush1.msra.mxu0 0.0
      %3295 = vmatprep.subr.mxu0 0.0
      %3296 = vmatpush1.msra.mxu0 0.0
      %3297 = vmatprep.subr.mxu0 0.0
      %3298 = vmatpush1.msra.mxu0 0.0
      %3299 = vmatprep.subr.mxu0 0.0
      %3300 = vmatpush1.msra.mxu0 0.0
      %3301 = vmatprep.mubr.f32.mxu0 0.0
      %v3302 = vand.u32 %v3093, 4294901760
      %v3303 = vsub.f32 %v3093, %v3302
      %v3304 = vand.u32 %v3303, 4294901760
      %v3305 = vsub.f32 %v3303, %v3304
      %v3306 = vand.u32 %v3305, 4294901760
      %3307 = vmatmul.mubr.f32.gmra.mrb[0].mxu0 %v3306
      %v3308 = vpop.f32.mrb[0].mxu0
      %v3309 = vadd.f32 %v3128, %v3308
      %v3310 = vpop.f32.mrb[0].mxu0
      %v3311 = vadd.f32 %v3128, %v3310
      %3312 = vmatprep.mubr.f32.mxu0 0.0
      %v3313 = vand.u32 %v3094, 4294901760
      %v3314 = vsub.f32 %v3094, %v3313
      %v3315 = vand.u32 %v3314, 4294901760
      %v3316 = vsub.f32 %v3314, %v3315
      %v3317 = vand.u32 %v3316, 4294901760
      %3318 = vmatmul.mubr.f32.gmra.mrb[0].mxu0 %v3317
      %v3319 = vpop.f32.mrb[0].mxu0
      %v3320 = vadd.f32 %v3133, %v3319
      %v3321 = vpop.f32.mrb[0].mxu0
      %v3322 = vadd.f32 %v3133, %v3321
      %3323 = vmatprep.mubr.f32.mxu0 0.0
      %v3324 = vand.u32 %v3095, 4294901760
      %v3325 = vsub.f32 %v3095, %v3324
      %v3326 = vand.u32 %v3325, 4294901760
      %v3327 = vsub.f32 %v3325, %v3326
      %v3328 = vand.u32 %v3327, 4294901760
      %3329 = vmatmul.mubr.f32.gmra.mrb[0].mxu0 %v3328
      %v3330 = vpop.f32.mrb[0].mxu0
      %v3331 = vadd.f32 %v3138, %v3330
      %v3332 = vpop.f32.mrb[0].mxu0
      %v3333 = vadd.f32 %v3138, %v3332
      %3334 = vmatprep.mubr.f32.mxu0 0.0
      %v3335 = vand.u32 %v3096, 4294901760
      %v3336 = vsub.f32 %v3096, %v3335
      %v3337 = vand.u32 %v3336, 4294901760
      %v3338 = vsub.f32 %v3336, %v3337
      %v3339 = vand.u32 %v3338, 4294901760
      %3340 = vmatmul.mubr.f32.gmra.mrb[0].mxu0 %v3339
      %v3341 = vpop.f32.mrb[0].mxu0
      %v3342 = vadd.f32 %v3143, %v3341
      %v3343 = vpop.f32.mrb[0].mxu0
      %v3344 = vadd.f32 %v3143, %v3343
      %3345 = vmatprep.mubr.f32.mxu0 0.0
      %v3346 = vand.u32 %v3097, 4294901760
      %v3347 = vsub.f32 %v3097, %v3346
      %v3348 = vand.u32 %v3347, 4294901760
      %v3349 = vsub.f32 %v3347, %v3348
      %v3350 = vand.u32 %v3349, 4294901760
      %3351 = vmatmul.mubr.f32.gmra.mrb[0].mxu0 %v3350
      %v3352 = vpop.f32.mrb[0].mxu0
      %v3353 = vadd.f32 %v3148, %v3352
      %v3354 = vpop.f32.mrb[0].mxu0
      %v3355 = vadd.f32 %v3148, %v3354
      %3356 = vmatprep.mubr.f32.mxu0 0.0
      %v3357 = vand.u32 %v3098, 4294901760
      %v3358 = vsub.f32 %v3098, %v3357
      %v3359 = vand.u32 %v3358, 4294901760
      %v3360 = vsub.f32 %v3358, %v3359
      %v3361 = vand.u32 %v3360, 4294901760
      %3362 = vmatmul.mubr.f32.gmra.mrb[0].mxu0 %v3361
      %v3363 = vpop.f32.mrb[0].mxu0
      %v3364 = vadd.f32 %v3153, %v3363
      %v3365 = vpop.f32.mrb[0].mxu0
      %v3366 = vadd.f32 %v3153, %v3365
      %3367 = vmatprep.mubr.f32.mxu0 0.0
      %v3368 = vand.u32 %v3099, 4294901760
      %v3369 = vsub.f32 %v3099, %v3368
      %v3370 = vand.u32 %v3369, 4294901760
      %v3371 = vsub.f32 %v3369, %v3370
      %v3372 = vand.u32 %v3371, 4294901760
      %3373 = vmatmul.mubr.f32.gmra.mrb[0].mxu0 %v3372
      %v3374 = vpop.f32.mrb[0].mxu0
      %v3375 = vadd.f32 %v3158, %v3374
      %v3376 = vpop.f32.mrb[0].mxu0
      %v3377 = vadd.f32 %v3158, %v3376
      %3378 = vmatprep.mubr.f32.mxu0 0.0
      %v3379 = vand.u32 %v3100, 4294901760
      %v3380 = vsub.f32 %v3100, %v3379
      %v3381 = vand.u32 %v3380, 4294901760
      %v3382 = vsub.f32 %v3380, %v3381
      %v3383 = vand.u32 %v3382, 4294901760
      %3384 = vmatmul.mubr.f32.gmra.mrb[0].mxu0 %v3383
      %v3385 = vpop.f32.mrb[0].mxu0
      %v3386 = vadd.f32 %v3163, %v3385
      %v3387 = vpop.f32.mrb[0].mxu0
      %v3388 = vadd.f32 %v3163, %v3387
      %3389 = vmatprep.mubr.f32.mxu0 0.0
      %v3390 = vand.u32 %v3101, 4294901760
      %v3391 = vsub.f32 %v3101, %v3390
      %v3392 = vand.u32 %v3391, 4294901760
      %v3393 = vsub.f32 %v3391, %v3392
      %v3394 = vand.u32 %v3393, 4294901760
      %3395 = vmatmul.mubr.f32.gmra.mrb[0].mxu0 %v3394
      %v3396 = vpop.f32.mrb[0].mxu0
      %v3397 = vadd.f32 %v3168, %v3396
      %v3398 = vpop.f32.mrb[0].mxu0
      %v3399 = vadd.f32 %v3168, %v3398
      %3400 = vmatprep.mubr.f32.mxu0 0.0
      %v3401 = vand.u32 %v3102, 4294901760
      %v3402 = vsub.f32 %v3102, %v3401
      %v3403 = vand.u32 %v3402, 4294901760
      %v3404 = vsub.f32 %v3402, %v3403
      %v3405 = vand.u32 %v3404, 4294901760
      %3406 = vmatmul.mubr.f32.gmra.mrb[0].mxu0 %v3405
      %v3407 = vpop.f32.mrb[0].mxu0
      %v3408 = vadd.f32 %v3173, %v3407
      %v3409 = vpop.f32.mrb[0].mxu0
      %v3410 = vadd.f32 %v3173, %v3409
      %3411 = vmatprep.mubr.f32.mxu0 0.0
      %v3412 = vand.u32 %v3103, 4294901760
      %v3413 = vsub.f32 %v3103, %v3412
      %v3414 = vand.u32 %v3413, 4294901760
      %v3415 = vsub.f32 %v3413, %v3414
      %v3416 = vand.u32 %v3415, 4294901760
      %3417 = vmatmul.mubr.f32.gmra.mrb[0].mxu0 %v3416
      %v3418 = vpop.f32.mrb[0].mxu0
      %v3419 = vadd.f32 %v3178, %v3418
      %v3420 = vpop.f32.mrb[0].mxu0
      %v3421 = vadd.f32 %v3178, %v3420
      %3422 = vmatprep.mubr.f32.mxu0 0.0
      %v3423 = vand.u32 %v3104, 4294901760
      %v3424 = vsub.f32 %v3104, %v3423
      %v3425 = vand.u32 %v3424, 4294901760
      %v3426 = vsub.f32 %v3424, %v3425
      %v3427 = vand.u32 %v3426, 4294901760
      %3428 = vmatmul.mubr.f32.gmra.mrb[0].mxu0 %v3427
      %v3429 = vpop.f32.mrb[0].mxu0
      %v3430 = vadd.f32 %v3183, %v3429
      %v3431 = vpop.f32.mrb[0].mxu0
      %v3432 = vadd.f32 %v3183, %v3431
      %3433 = vmatprep.mubr.f32.mxu0 0.0
      %v3434 = vand.u32 %v3105, 4294901760
      %v3435 = vsub.f32 %v3105, %v3434
      %v3436 = vand.u32 %v3435, 4294901760
      %v3437 = vsub.f32 %v3435, %v3436
      %v3438 = vand.u32 %v3437, 4294901760
      %3439 = vmatmul.mubr.f32.gmra.mrb[0].mxu0 %v3438
      %v3440 = vpop.f32.mrb[0].mxu0
      %v3441 = vadd.f32 %v3188, %v3440
      %v3442 = vpop.f32.mrb[0].mxu0
      %v3443 = vadd.f32 %v3188, %v3442
      %3444 = vmatprep.mubr.f32.mxu0 0.0
      %v3445 = vand.u32 %v3106, 4294901760
      %v3446 = vsub.f32 %v3106, %v3445
      %v3447 = vand.u32 %v3446, 4294901760
      %v3448 = vsub.f32 %v3446, %v3447
      %v3449 = vand.u32 %v3448, 4294901760
      %3450 = vmatmul.mubr.f32.gmra.mrb[0].mxu0 %v3449
      %v3451 = vpop.f32.mrb[0].mxu0
      %v3452 = vadd.f32 %v3193, %v3451
      %v3453 = vpop.f32.mrb[0].mxu0
      %v3454 = vadd.f32 %v3193, %v3453
      %3455 = vmatprep.mubr.f32.mxu0 0.0
      %v3456 = vand.u32 %v3107, 4294901760
      %v3457 = vsub.f32 %v3107, %v3456
      %v3458 = vand.u32 %v3457, 4294901760
      %v3459 = vsub.f32 %v3457, %v3458
      %v3460 = vand.u32 %v3459, 4294901760
      %3461 = vmatmul.mubr.f32.gmra.mrb[0].mxu0 %v3460
      %v3462 = vpop.f32.mrb[0].mxu0
      %v3463 = vadd.f32 %v3198, %v3462
      %v3464 = vpop.f32.mrb[0].mxu0
      %v3465 = vadd.f32 %v3198, %v3464
      %3466 = vmatprep.mubr.f32.mxu0 0.0
      %v3467 = vand.u32 %v3108, 4294901760
      %v3468 = vsub.f32 %v3108, %v3467
      %v3469 = vand.u32 %v3468, 4294901760
      %v3470 = vsub.f32 %v3468, %v3469
      %v3471 = vand.u32 %v3470, 4294901760
      %3472 = vmatmul.mubr.f32.gmra.mrb[0].mxu0 %v3471
      %v3473 = vpop.f32.mrb[0].mxu0
      %v3474 = vadd.f32 %v3203, %v3473
      %v3475 = vpop.f32.mrb[0].mxu0
      %v3476 = vadd.f32 %v3203, %v3475
      %3477 = vdwg.mxu0
      %v3478 = vand.u32 %v3062, 4294901760
      %v3479 = vsub.f32 %v3062, %v3478
      %v3480 = vand.u32 %v3479, 4294901760
      %v3481 = vsub.f32 %v3479, %v3480
      %v3482 = vand.u32 %v3481, 4294901760
      %3483 = vmatprep.subr.mxu0 %v3482
      %v3484 = vand.u32 %v3061, 4294901760
      %v3485 = vsub.f32 %v3061, %v3484
      %v3486 = vand.u32 %v3485, 4294901760
      %v3487 = vsub.f32 %v3485, %v3486
      %v3488 = vand.u32 %v3487, 4294901760
      %3489 = vmatpush1.msra.mxu0 %v3488
      %v3490 = vand.u32 %v3064, 4294901760
      %v3491 = vsub.f32 %v3064, %v3490
      %v3492 = vand.u32 %v3491, 4294901760
      %v3493 = vsub.f32 %v3491, %v3492
      %v3494 = vand.u32 %v3493, 4294901760
      %3495 = vmatprep.subr.mxu0 %v3494
      %v3496 = vand.u32 %v3063, 4294901760
      %v3497 = vsub.f32 %v3063, %v3496
      %v3498 = vand.u32 %v3497, 4294901760
      %v3499 = vsub.f32 %v3497, %v3498
      %v3500 = vand.u32 %v3499, 4294901760
      %3501 = vmatpush1.msra.mxu0 %v3500
      %v3502 = vand.u32 %v3066, 4294901760
      %v3503 = vsub.f32 %v3066, %v3502
      %v3504 = vand.u32 %v3503, 4294901760
      %v3505 = vsub.f32 %v3503, %v3504
      %v3506 = vand.u32 %v3505, 4294901760
      %3507 = vmatprep.subr.mxu0 %v3506
      %v3508 = vand.u32 %v3065, 4294901760
      %v3509 = vsub.f32 %v3065, %v3508
      %v3510 = vand.u32 %v3509, 4294901760
      %v3511 = vsub.f32 %v3509, %v3510
      %v3512 = vand.u32 %v3511, 4294901760
      %3513 = vmatpush1.msra.mxu0 %v3512
      %v3514 = vand.u32 %v3068, 4294901760
      %v3515 = vsub.f32 %v3068, %v3514
      %v3516 = vand.u32 %v3515, 4294901760
      %v3517 = vsub.f32 %v3515, %v3516
      %v3518 = vand.u32 %v3517, 4294901760
      %3519 = vmatprep.subr.mxu0 %v3518
      %v3520 = vand.u32 %v3067, 4294901760
      %v3521 = vsub.f32 %v3067, %v3520
      %v3522 = vand.u32 %v3521, 4294901760
      %v3523 = vsub.f32 %v3521, %v3522
      %v3524 = vand.u32 %v3523, 4294901760
      %3525 = vmatpush1.msra.mxu0 %v3524
      %v3526 = vand.u32 %v3070, 4294901760
      %v3527 = vsub.f32 %v3070, %v3526
      %v3528 = vand.u32 %v3527, 4294901760
      %v3529 = vsub.f32 %v3527, %v3528
      %v3530 = vand.u32 %v3529, 4294901760
      %3531 = vmatprep.subr.mxu0 %v3530
      %v3532 = vand.u32 %v3069, 4294901760
      %v3533 = vsub.f32 %v3069, %v3532
      %v3534 = vand.u32 %v3533, 4294901760
      %v3535 = vsub.f32 %v3533, %v3534
      %v3536 = vand.u32 %v3535, 4294901760
      %3537 = vmatpush1.msra.mxu0 %v3536
      %v3538 = vand.u32 %v3072, 4294901760
      %v3539 = vsub.f32 %v3072, %v3538
      %v3540 = vand.u32 %v3539, 4294901760
      %v3541 = vsub.f32 %v3539, %v3540
      %v3542 = vand.u32 %v3541, 4294901760
      %3543 = vmatprep.subr.mxu0 %v3542
      %v3544 = vand.u32 %v3071, 4294901760
      %v3545 = vsub.f32 %v3071, %v3544
      %v3546 = vand.u32 %v3545, 4294901760
      %v3547 = vsub.f32 %v3545, %v3546
      %v3548 = vand.u32 %v3547, 4294901760
      %3549 = vmatpush1.msra.mxu0 %v3548
      %v3550 = vand.u32 %v3074, 4294901760
      %v3551 = vsub.f32 %v3074, %v3550
      %v3552 = vand.u32 %v3551, 4294901760
      %v3553 = vsub.f32 %v3551, %v3552
      %v3554 = vand.u32 %v3553, 4294901760
      %3555 = vmatprep.subr.mxu0 %v3554
      %v3556 = vand.u32 %v3073, 4294901760
      %v3557 = vsub.f32 %v3073, %v3556
      %v3558 = vand.u32 %v3557, 4294901760
      %v3559 = vsub.f32 %v3557, %v3558
      %v3560 = vand.u32 %v3559, 4294901760
      %3561 = vmatpush1.msra.mxu0 %v3560
      %v3562 = vand.u32 %v3076, 4294901760
      %v3563 = vsub.f32 %v3076, %v3562
      %v3564 = vand.u32 %v3563, 4294901760
      %v3565 = vsub.f32 %v3563, %v3564
      %v3566 = vand.u32 %v3565, 4294901760
      %3567 = vmatprep.subr.mxu0 %v3566
      %v3568 = vand.u32 %v3075, 4294901760
      %v3569 = vsub.f32 %v3075, %v3568
      %v3570 = vand.u32 %v3569, 4294901760
      %v3571 = vsub.f32 %v3569, %v3570
      %v3572 = vand.u32 %v3571, 4294901760
      %3573 = vmatpush1.msra.mxu0 %v3572
      %v3574 = vand.u32 %v3078, 4294901760
      %v3575 = vsub.f32 %v3078, %v3574
      %v3576 = vand.u32 %v3575, 4294901760
      %v3577 = vsub.f32 %v3575, %v3576
      %v3578 = vand.u32 %v3577, 4294901760
      %3579 = vmatprep.subr.mxu0 %v3578
      %v3580 = vand.u32 %v3077, 4294901760
      %v3581 = vsub.f32 %v3077, %v3580
      %v3582 = vand.u32 %v3581, 4294901760
      %v3583 = vsub.f32 %v3581, %v3582
      %v3584 = vand.u32 %v3583, 4294901760
      %3585 = vmatpush1.msra.mxu0 %v3584
      %v3586 = vand.u32 %v3080, 4294901760
      %v3587 = vsub.f32 %v3080, %v3586
      %v3588 = vand.u32 %v3587, 4294901760
      %v3589 = vsub.f32 %v3587, %v3588
      %v3590 = vand.u32 %v3589, 4294901760
      %3591 = vmatprep.subr.mxu0 %v3590
      %v3592 = vand.u32 %v3079, 4294901760
      %v3593 = vsub.f32 %v3079, %v3592
      %v3594 = vand.u32 %v3593, 4294901760
      %v3595 = vsub.f32 %v3593, %v3594
      %v3596 = vand.u32 %v3595, 4294901760
      %3597 = vmatpush1.msra.mxu0 %v3596
      %v3598 = vand.u32 %v3082, 4294901760
      %v3599 = vsub.f32 %v3082, %v3598
      %v3600 = vand.u32 %v3599, 4294901760
      %v3601 = vsub.f32 %v3599, %v3600
      %v3602 = vand.u32 %v3601, 4294901760
      %3603 = vmatprep.subr.mxu0 %v3602
      %v3604 = vand.u32 %v3081, 4294901760
      %v3605 = vsub.f32 %v3081, %v3604
      %v3606 = vand.u32 %v3605, 4294901760
      %v3607 = vsub.f32 %v3605, %v3606
      %v3608 = vand.u32 %v3607, 4294901760
      %3609 = vmatpush1.msra.mxu0 %v3608
      %v3610 = vand.u32 %v3084, 4294901760
      %v3611 = vsub.f32 %v3084, %v3610
      %v3612 = vand.u32 %v3611, 4294901760
      %v3613 = vsub.f32 %v3611, %v3612
      %v3614 = vand.u32 %v3613, 4294901760
      %3615 = vmatprep.subr.mxu0 %v3614
      %v3616 = vand.u32 %v3083, 4294901760
      %v3617 = vsub.f32 %v3083, %v3616
      %v3618 = vand.u32 %v3617, 4294901760
      %v3619 = vsub.f32 %v3617, %v3618
      %v3620 = vand.u32 %v3619, 4294901760
      %3621 = vmatpush1.msra.mxu0 %v3620
      %v3622 = vand.u32 %v3086, 4294901760
      %v3623 = vsub.f32 %v3086, %v3622
      %v3624 = vand.u32 %v3623, 4294901760
      %v3625 = vsub.f32 %v3623, %v3624
      %v3626 = vand.u32 %v3625, 4294901760
      %3627 = vmatprep.subr.mxu0 %v3626
      %v3628 = vand.u32 %v3085, 4294901760
      %v3629 = vsub.f32 %v3085, %v3628
      %v3630 = vand.u32 %v3629, 4294901760
      %v3631 = vsub.f32 %v3629, %v3630
      %v3632 = vand.u32 %v3631, 4294901760
      %3633 = vmatpush1.msra.mxu0 %v3632
      %v3634 = vand.u32 %v3088, 4294901760
      %v3635 = vsub.f32 %v3088, %v3634
      %v3636 = vand.u32 %v3635, 4294901760
      %v3637 = vsub.f32 %v3635, %v3636
      %v3638 = vand.u32 %v3637, 4294901760
      %3639 = vmatprep.subr.mxu0 %v3638
      %v3640 = vand.u32 %v3087, 4294901760
      %v3641 = vsub.f32 %v3087, %v3640
      %v3642 = vand.u32 %v3641, 4294901760
      %v3643 = vsub.f32 %v3641, %v3642
      %v3644 = vand.u32 %v3643, 4294901760
      %3645 = vmatpush1.msra.mxu0 %v3644
      %v3646 = vand.u32 %v3090, 4294901760
      %v3647 = vsub.f32 %v3090, %v3646
      %v3648 = vand.u32 %v3647, 4294901760
      %v3649 = vsub.f32 %v3647, %v3648
      %v3650 = vand.u32 %v3649, 4294901760
      %3651 = vmatprep.subr.mxu0 %v3650
      %v3652 = vand.u32 %v3089, 4294901760
      %v3653 = vsub.f32 %v3089, %v3652
      %v3654 = vand.u32 %v3653, 4294901760
      %v3655 = vsub.f32 %v3653, %v3654
      %v3656 = vand.u32 %v3655, 4294901760
      %3657 = vmatpush1.msra.mxu0 %v3656
      %v3658 = vand.u32 %v3092, 4294901760
      %v3659 = vsub.f32 %v3092, %v3658
      %v3660 = vand.u32 %v3659, 4294901760
      %v3661 = vsub.f32 %v3659, %v3660
      %v3662 = vand.u32 %v3661, 4294901760
      %3663 = vmatprep.subr.mxu0 %v3662
      %v3664 = vand.u32 %v3091, 4294901760
      %v3665 = vsub.f32 %v3091, %v3664
      %v3666 = vand.u32 %v3665, 4294901760
      %v3667 = vsub.f32 %v3665, %v3666
      %v3668 = vand.u32 %v3667, 4294901760
      %3669 = vmatpush1.msra.mxu0 %v3668
      %3670 = vmatprep.subr.mxu0 0.0
      %3671 = vmatpush1.msra.mxu0 0.0
      %3672 = vmatprep.subr.mxu0 0.0
      %3673 = vmatpush1.msra.mxu0 0.0
      %3674 = vmatprep.subr.mxu0 0.0
      %3675 = vmatpush1.msra.mxu0 0.0
      %3676 = vmatprep.subr.mxu0 0.0
      %3677 = vmatpush1.msra.mxu0 0.0
      %3678 = vmatprep.subr.mxu0 0.0
      %3679 = vmatpush1.msra.mxu0 0.0
      %3680 = vmatprep.subr.mxu0 0.0
      %3681 = vmatpush1.msra.mxu0 0.0
      %3682 = vmatprep.subr.mxu0 0.0
      %3683 = vmatpush1.msra.mxu0 0.0
      %3684 = vmatprep.subr.mxu0 0.0
      %3685 = vmatpush1.msra.mxu0 0.0
      %3686 = vmatprep.subr.mxu0 0.0
      %3687 = vmatpush1.msra.mxu0 0.0
      %3688 = vmatprep.subr.mxu0 0.0
      %3689 = vmatpush1.msra.mxu0 0.0
      %3690 = vmatprep.subr.mxu0 0.0
      %3691 = vmatpush1.msra.mxu0 0.0
      %3692 = vmatprep.subr.mxu0 0.0
      %3693 = vmatpush1.msra.mxu0 0.0
      %3694 = vmatprep.subr.mxu0 0.0
      %3695 = vmatpush1.msra.mxu0 0.0
      %3696 = vmatprep.subr.mxu0 0.0
      %3697 = vmatpush1.msra.mxu0 0.0
      %3698 = vmatprep.subr.mxu0 0.0
      %3699 = vmatpush1.msra.mxu0 0.0
      %3700 = vmatprep.subr.mxu0 0.0
      %3701 = vmatpush1.msra.mxu0 0.0
      %3702 = vmatprep.mubr.f32.mxu0 0.0
      %v3703 = vand.u32 %v3093, 4294901760
      %3704 = vmatmul.mubr.f32.gmra.mrb[0].mxu0 %v3703
      %v3705 = vpop.f32.mrb[0].mxu0
      %v3706 = vadd.f32 %v3309, %v3705
      %v3707 = vpop.f32.mrb[0].mxu0
      %v3708 = vadd.f32 %v3311, %v3707
      %3709 = vmatprep.mubr.f32.mxu0 0.0
      %v3710 = vand.u32 %v3094, 4294901760
      %3711 = vmatmul.mubr.f32.gmra.mrb[0].mxu0 %v3710
      %v3712 = vpop.f32.mrb[0].mxu0
      %v3713 = vadd.f32 %v3320, %v3712
      %v3714 = vpop.f32.mrb[0].mxu0
      %v3715 = vadd.f32 %v3322, %v3714
      %3716 = vmatprep.mubr.f32.mxu0 0.0
      %v3717 = vand.u32 %v3095, 4294901760
      %3718 = vmatmul.mubr.f32.gmra.mrb[0].mxu0 %v3717
      %v3719 = vpop.f32.mrb[0].mxu0
      %v3720 = vadd.f32 %v3331, %v3719
      %v3721 = vpop.f32.mrb[0].mxu0
      %v3722 = vadd.f32 %v3333, %v3721
      %3723 = vmatprep.mubr.f32.mxu0 0.0
      %v3724 = vand.u32 %v3096, 4294901760
      %3725 = vmatmul.mubr.f32.gmra.mrb[0].mxu0 %v3724
      %v3726 = vpop.f32.mrb[0].mxu0
      %v3727 = vadd.f32 %v3342, %v3726
      %v3728 = vpop.f32.mrb[0].mxu0
      %v3729 = vadd.f32 %v3344, %v3728
      %3730 = vmatprep.mubr.f32.mxu0 0.0
      %v3731 = vand.u32 %v3097, 4294901760
      %3732 = vmatmul.mubr.f32.gmra.mrb[0].mxu0 %v3731
      %v3733 = vpop.f32.mrb[0].mxu0
      %v3734 = vadd.f32 %v3353, %v3733
      %v3735 = vpop.f32.mrb[0].mxu0
      %v3736 = vadd.f32 %v3355, %v3735
      %3737 = vmatprep.mubr.f32.mxu0 0.0
      %v3738 = vand.u32 %v3098, 4294901760
      %3739 = vmatmul.mubr.f32.gmra.mrb[0].mxu0 %v3738
      %v3740 = vpop.f32.mrb[0].mxu0
      %v3741 = vadd.f32 %v3364, %v3740
      %v3742 = vpop.f32.mrb[0].mxu0
      %v3743 = vadd.f32 %v3366, %v3742
      %3744 = vmatprep.mubr.f32.mxu0 0.0
      %v3745 = vand.u32 %v3099, 4294901760
      %3746 = vmatmul.mubr.f32.gmra.mrb[0].mxu0 %v3745
      %v3747 = vpop.f32.mrb[0].mxu0
      %v3748 = vadd.f32 %v3375, %v3747
      %v3749 = vpop.f32.mrb[0].mxu0
      %v3750 = vadd.f32 %v3377, %v3749
      %3751 = vmatprep.mubr.f32.mxu0 0.0
      %v3752 = vand.u32 %v3100, 4294901760
      %3753 = vmatmul.mubr.f32.gmra.mrb[0].mxu0 %v3752
      %v3754 = vpop.f32.mrb[0].mxu0
      %v3755 = vadd.f32 %v3386, %v3754
      %v3756 = vpop.f32.mrb[0].mxu0
      %v3757 = vadd.f32 %v3388, %v3756
      %3758 = vmatprep.mubr.f32.mxu0 0.0
      %v3759 = vand.u32 %v3101, 4294901760
      %3760 = vmatmul.mubr.f32.gmra.mrb[0].mxu0 %v3759
      %v3761 = vpop.f32.mrb[0].mxu0
      %v3762 = vadd.f32 %v3397, %v3761
      %v3763 = vpop.f32.mrb[0].mxu0
      %v3764 = vadd.f32 %v3399, %v3763
      %3765 = vmatprep.mubr.f32.mxu0 0.0
      %v3766 = vand.u32 %v3102, 4294901760
      %3767 = vmatmul.mubr.f32.gmra.mrb[0].mxu0 %v3766
      %v3768 = vpop.f32.mrb[0].mxu0
      %v3769 = vadd.f32 %v3408, %v3768
      %v3770 = vpop.f32.mrb[0].mxu0
      %v3771 = vadd.f32 %v3410, %v3770
      %3772 = vmatprep.mubr.f32.mxu0 0.0
      %v3773 = vand.u32 %v3103, 4294901760
      %3774 = vmatmul.mubr.f32.gmra.mrb[0].mxu0 %v3773
      %v3775 = vpop.f32.mrb[0].mxu0
      %v3776 = vadd.f32 %v3419, %v3775
      %v3777 = vpop.f32.mrb[0].mxu0
      %v3778 = vadd.f32 %v3421, %v3777
      %3779 = vmatprep.mubr.f32.mxu0 0.0
      %v3780 = vand.u32 %v3104, 4294901760
      %3781 = vmatmul.mubr.f32.gmra.mrb[0].mxu0 %v3780
      %v3782 = vpop.f32.mrb[0].mxu0
      %v3783 = vadd.f32 %v3430, %v3782
      %v3784 = vpop.f32.mrb[0].mxu0
      %v3785 = vadd.f32 %v3432, %v3784
      %3786 = vmatprep.mubr.f32.mxu0 0.0
      %v3787 = vand.u32 %v3105, 4294901760
      %3788 = vmatmul.mubr.f32.gmra.mrb[0].mxu0 %v3787
      %v3789 = vpop.f32.mrb[0].mxu0
      %v3790 = vadd.f32 %v3441, %v3789
      %v3791 = vpop.f32.mrb[0].mxu0
      %v3792 = vadd.f32 %v3443, %v3791
      %3793 = vmatprep.mubr.f32.mxu0 0.0
      %v3794 = vand.u32 %v3106, 4294901760
      %3795 = vmatmul.mubr.f32.gmra.mrb[0].mxu0 %v3794
      %v3796 = vpop.f32.mrb[0].mxu0
      %v3797 = vadd.f32 %v3452, %v3796
      %v3798 = vpop.f32.mrb[0].mxu0
      %v3799 = vadd.f32 %v3454, %v3798
      %3800 = vmatprep.mubr.f32.mxu0 0.0
      %v3801 = vand.u32 %v3107, 4294901760
      %3802 = vmatmul.mubr.f32.gmra.mrb[0].mxu0 %v3801
      %v3803 = vpop.f32.mrb[0].mxu0
      %v3804 = vadd.f32 %v3463, %v3803
      %v3805 = vpop.f32.mrb[0].mxu0
      %v3806 = vadd.f32 %v3465, %v3805
      %3807 = vmatprep.mubr.f32.mxu0 0.0
      %v3808 = vand.u32 %v3108, 4294901760
      %3809 = vmatmul.mubr.f32.gmra.mrb[0].mxu0 %v3808
      %v3810 = vpop.f32.mrb[0].mxu0
      %v3811 = vadd.f32 %v3474, %v3810
      %v3812 = vpop.f32.mrb[0].mxu0
      %v3813 = vadd.f32 %v3476, %v3812
      %3814 = vdwg.mxu0
      %v3815 = vand.u32 %v3062, 4294901760
      %v3816 = vsub.f32 %v3062, %v3815
      %3817 = vmatprep.subr.mxu0 %v3816
      %v3818 = vand.u32 %v3061, 4294901760
      %v3819 = vsub.f32 %v3061, %v3818
      %3820 = vmatpush1.msra.mxu0 %v3819
      %v3821 = vand.u32 %v3064, 4294901760
      %v3822 = vsub.f32 %v3064, %v3821
      %3823 = vmatprep.subr.mxu0 %v3822
      %v3824 = vand.u32 %v3063, 4294901760
      %v3825 = vsub.f32 %v3063, %v3824
      %3826 = vmatpush1.msra.mxu0 %v3825
      %v3827 = vand.u32 %v3066, 4294901760
      %v3828 = vsub.f32 %v3066, %v3827
      %3829 = vmatprep.subr.mxu0 %v3828
      %v3830 = vand.u32 %v3065, 4294901760
      %v3831 = vsub.f32 %v3065, %v3830
      %3832 = vmatpush1.msra.mxu0 %v3831
      %v3833 = vand.u32 %v3068, 4294901760
      %v3834 = vsub.f32 %v3068, %v3833
      %3835 = vmatprep.subr.mxu0 %v3834
      %v3836 = vand.u32 %v3067, 4294901760
      %v3837 = vsub.f32 %v3067, %v3836
      %3838 = vmatpush1.msra.mxu0 %v3837
      %v3839 = vand.u32 %v3070, 4294901760
      %v3840 = vsub.f32 %v3070, %v3839
      %3841 = vmatprep.subr.mxu0 %v3840
      %v3842 = vand.u32 %v3069, 4294901760
      %v3843 = vsub.f32 %v3069, %v3842
      %3844 = vmatpush1.msra.mxu0 %v3843
      %v3845 = vand.u32 %v3072, 4294901760
      %v3846 = vsub.f32 %v3072, %v3845
      %3847 = vmatprep.subr.mxu0 %v3846
      %v3848 = vand.u32 %v3071, 4294901760
      %v3849 = vsub.f32 %v3071, %v3848
      %3850 = vmatpush1.msra.mxu0 %v3849
      %v3851 = vand.u32 %v3074, 4294901760
      %v3852 = vsub.f32 %v3074, %v3851
      %3853 = vmatprep.subr.mxu0 %v3852
      %v3854 = vand.u32 %v3073, 4294901760
      %v3855 = vsub.f32 %v3073, %v3854
      %3856 = vmatpush1.msra.mxu0 %v3855
      %v3857 = vand.u32 %v3076, 4294901760
      %v3858 = vsub.f32 %v3076, %v3857
      %3859 = vmatprep.subr.mxu0 %v3858
      %v3860 = vand.u32 %v3075, 4294901760
      %v3861 = vsub.f32 %v3075, %v3860
      %3862 = vmatpush1.msra.mxu0 %v3861
      %v3863 = vand.u32 %v3078, 4294901760
      %v3864 = vsub.f32 %v3078, %v3863
      %3865 = vmatprep.subr.mxu0 %v3864
      %v3866 = vand.u32 %v3077, 4294901760
      %v3867 = vsub.f32 %v3077, %v3866
      %3868 = vmatpush1.msra.mxu0 %v3867
      %v3869 = vand.u32 %v3080, 4294901760
      %v3870 = vsub.f32 %v3080, %v3869
      %3871 = vmatprep.subr.mxu0 %v3870
      %v3872 = vand.u32 %v3079, 4294901760
      %v3873 = vsub.f32 %v3079, %v3872
      %3874 = vmatpush1.msra.mxu0 %v3873
      %v3875 = vand.u32 %v3082, 4294901760
      %v3876 = vsub.f32 %v3082, %v3875
      %3877 = vmatprep.subr.mxu0 %v3876
      %v3878 = vand.u32 %v3081, 4294901760
      %v3879 = vsub.f32 %v3081, %v3878
      %3880 = vmatpush1.msra.mxu0 %v3879
      %v3881 = vand.u32 %v3084, 4294901760
      %v3882 = vsub.f32 %v3084, %v3881
      %3883 = vmatprep.subr.mxu0 %v3882
      %v3884 = vand.u32 %v3083, 4294901760
      %v3885 = vsub.f32 %v3083, %v3884
      %3886 = vmatpush1.msra.mxu0 %v3885
      %v3887 = vand.u32 %v3086, 4294901760
      %v3888 = vsub.f32 %v3086, %v3887
      %3889 = vmatprep.subr.mxu0 %v3888
      %v3890 = vand.u32 %v3085, 4294901760
      %v3891 = vsub.f32 %v3085, %v3890
      %3892 = vmatpush1.msra.mxu0 %v3891
      %v3893 = vand.u32 %v3088, 4294901760
      %v3894 = vsub.f32 %v3088, %v3893
      %3895 = vmatprep.subr.mxu0 %v3894
      %v3896 = vand.u32 %v3087, 4294901760
      %v3897 = vsub.f32 %v3087, %v3896
      %3898 = vmatpush1.msra.mxu0 %v3897
      %v3899 = vand.u32 %v3090, 4294901760
      %v3900 = vsub.f32 %v3090, %v3899
      %3901 = vmatprep.subr.mxu0 %v3900
      %v3902 = vand.u32 %v3089, 4294901760
      %v3903 = vsub.f32 %v3089, %v3902
      %3904 = vmatpush1.msra.mxu0 %v3903
      %v3905 = vand.u32 %v3092, 4294901760
      %v3906 = vsub.f32 %v3092, %v3905
      %3907 = vmatprep.subr.mxu0 %v3906
      %v3908 = vand.u32 %v3091, 4294901760
      %v3909 = vsub.f32 %v3091, %v3908
      %3910 = vmatpush1.msra.mxu0 %v3909
      %3911 = vmatprep.subr.mxu0 0.0
      %3912 = vmatpush1.msra.mxu0 0.0
      %3913 = vmatprep.subr.mxu0 0.0
      %3914 = vmatpush1.msra.mxu0 0.0
      %3915 = vmatprep.subr.mxu0 0.0
      %3916 = vmatpush1.msra.mxu0 0.0
      %3917 = vmatprep.subr.mxu0 0.0
      %3918 = vmatpush1.msra.mxu0 0.0
      %3919 = vmatprep.subr.mxu0 0.0
      %3920 = vmatpush1.msra.mxu0 0.0
      %3921 = vmatprep.subr.mxu0 0.0
      %3922 = vmatpush1.msra.mxu0 0.0
      %3923 = vmatprep.subr.mxu0 0.0
      %3924 = vmatpush1.msra.mxu0 0.0
      %3925 = vmatprep.subr.mxu0 0.0
      %3926 = vmatpush1.msra.mxu0 0.0
      %3927 = vmatprep.subr.mxu0 0.0
      %3928 = vmatpush1.msra.mxu0 0.0
      %3929 = vmatprep.subr.mxu0 0.0
      %3930 = vmatpush1.msra.mxu0 0.0
      %3931 = vmatprep.subr.mxu0 0.0
      %3932 = vmatpush1.msra.mxu0 0.0
      %3933 = vmatprep.subr.mxu0 0.0
      %3934 = vmatpush1.msra.mxu0 0.0
      %3935 = vmatprep.subr.mxu0 0.0
      %3936 = vmatpush1.msra.mxu0 0.0
      %3937 = vmatprep.subr.mxu0 0.0
      %3938 = vmatpush1.msra.mxu0 0.0
      %3939 = vmatprep.subr.mxu0 0.0
      %3940 = vmatpush1.msra.mxu0 0.0
      %3941 = vmatprep.subr.mxu0 0.0
      %3942 = vmatpush1.msra.mxu0 0.0
      %3943 = vmatprep.mubr.f32.mxu0 0.0
      %v3944 = vand.u32 %v3093, 4294901760
      %v3945 = vsub.f32 %v3093, %v3944
      %3946 = vmatmul.mubr.f32.gmra.mrb[0].mxu0 %v3945
      %v3947 = vpop.f32.mrb[0].mxu0
      %v3948 = vadd.f32 %v3706, %v3947
      %v3949 = vpop.f32.mrb[0].mxu0
      %v3950 = vadd.f32 %v3708, %v3949
      %3951 = vmatprep.mubr.f32.mxu0 0.0
      %v3952 = vand.u32 %v3094, 4294901760
      %v3953 = vsub.f32 %v3094, %v3952
      %3954 = vmatmul.mubr.f32.gmra.mrb[0].mxu0 %v3953
      %v3955 = vpop.f32.mrb[0].mxu0
      %v3956 = vadd.f32 %v3713, %v3955
      %v3957 = vpop.f32.mrb[0].mxu0
      %v3958 = vadd.f32 %v3715, %v3957
      %3959 = vmatprep.mubr.f32.mxu0 0.0
      %v3960 = vand.u32 %v3095, 4294901760
      %v3961 = vsub.f32 %v3095, %v3960
      %3962 = vmatmul.mubr.f32.gmra.mrb[0].mxu0 %v3961
      %v3963 = vpop.f32.mrb[0].mxu0
      %v3964 = vadd.f32 %v3720, %v3963
      %v3965 = vpop.f32.mrb[0].mxu0
      %v3966 = vadd.f32 %v3722, %v3965
      %3967 = vmatprep.mubr.f32.mxu0 0.0
      %v3968 = vand.u32 %v3096, 4294901760
      %v3969 = vsub.f32 %v3096, %v3968
      %3970 = vmatmul.mubr.f32.gmra.mrb[0].mxu0 %v3969
      %v3971 = vpop.f32.mrb[0].mxu0
      %v3972 = vadd.f32 %v3727, %v3971
      %v3973 = vpop.f32.mrb[0].mxu0
      %v3974 = vadd.f32 %v3729, %v3973
      %3975 = vmatprep.mubr.f32.mxu0 0.0
      %v3976 = vand.u32 %v3097, 4294901760
      %v3977 = vsub.f32 %v3097, %v3976
      %3978 = vmatmul.mubr.f32.gmra.mrb[0].mxu0 %v3977
      %v3979 = vpop.f32.mrb[0].mxu0
      %v3980 = vadd.f32 %v3734, %v3979
      %v3981 = vpop.f32.mrb[0].mxu0
      %v3982 = vadd.f32 %v3736, %v3981
      %3983 = vmatprep.mubr.f32.mxu0 0.0
      %v3984 = vand.u32 %v3098, 4294901760
      %v3985 = vsub.f32 %v3098, %v3984
      %3986 = vmatmul.mubr.f32.gmra.mrb[0].mxu0 %v3985
      %v3987 = vpop.f32.mrb[0].mxu0
      %v3988 = vadd.f32 %v3741, %v3987
      %v3989 = vpop.f32.mrb[0].mxu0
      %v3990 = vadd.f32 %v3743, %v3989
      %3991 = vmatprep.mubr.f32.mxu0 0.0
      %v3992 = vand.u32 %v3099, 4294901760
      %v3993 = vsub.f32 %v3099, %v3992
      %3994 = vmatmul.mubr.f32.gmra.mrb[0].mxu0 %v3993
      %v3995 = vpop.f32.mrb[0].mxu0
      %v3996 = vadd.f32 %v3748, %v3995
      %v3997 = vpop.f32.mrb[0].mxu0
      %v3998 = vadd.f32 %v3750, %v3997
      %3999 = vmatprep.mubr.f32.mxu0 0.0
      %v4000 = vand.u32 %v3100, 4294901760
      %v4001 = vsub.f32 %v3100, %v4000
      %4002 = vmatmul.mubr.f32.gmra.mrb[0].mxu0 %v4001
      %v4003 = vpop.f32.mrb[0].mxu0
      %v4004 = vadd.f32 %v3755, %v4003
      %v4005 = vpop.f32.mrb[0].mxu0
      %v4006 = vadd.f32 %v3757, %v4005
      %4007 = vmatprep.mubr.f32.mxu0 0.0
      %v4008 = vand.u32 %v3101, 4294901760
      %v4009 = vsub.f32 %v3101, %v4008
      %4010 = vmatmul.mubr.f32.gmra.mrb[0].mxu0 %v4009
      %v4011 = vpop.f32.mrb[0].mxu0
      %v4012 = vadd.f32 %v3762, %v4011
      %v4013 = vpop.f32.mrb[0].mxu0
      %v4014 = vadd.f32 %v3764, %v4013
      %4015 = vmatprep.mubr.f32.mxu0 0.0
      %v4016 = vand.u32 %v3102, 4294901760
      %v4017 = vsub.f32 %v3102, %v4016
      %4018 = vmatmul.mubr.f32.gmra.mrb[0].mxu0 %v4017
      %v4019 = vpop.f32.mrb[0].mxu0
      %v4020 = vadd.f32 %v3769, %v4019
      %v4021 = vpop.f32.mrb[0].mxu0
      %v4022 = vadd.f32 %v3771, %v4021
      %4023 = vmatprep.mubr.f32.mxu0 0.0
      %v4024 = vand.u32 %v3103, 4294901760
      %v4025 = vsub.f32 %v3103, %v4024
      %4026 = vmatmul.mubr.f32.gmra.mrb[0].mxu0 %v4025
      %v4027 = vpop.f32.mrb[0].mxu0
      %v4028 = vadd.f32 %v3776, %v4027
      %v4029 = vpop.f32.mrb[0].mxu0
      %v4030 = vadd.f32 %v3778, %v4029
      %4031 = vmatprep.mubr.f32.mxu0 0.0
      %v4032 = vand.u32 %v3104, 4294901760
      %v4033 = vsub.f32 %v3104, %v4032
      %4034 = vmatmul.mubr.f32.gmra.mrb[0].mxu0 %v4033
      %v4035 = vpop.f32.mrb[0].mxu0
      %v4036 = vadd.f32 %v3783, %v4035
      %v4037 = vpop.f32.mrb[0].mxu0
      %v4038 = vadd.f32 %v3785, %v4037
      %4039 = vmatprep.mubr.f32.mxu0 0.0
      %v4040 = vand.u32 %v3105, 4294901760
      %v4041 = vsub.f32 %v3105, %v4040
      %4042 = vmatmul.mubr.f32.gmra.mrb[0].mxu0 %v4041
      %v4043 = vpop.f32.mrb[0].mxu0
      %v4044 = vadd.f32 %v3790, %v4043
      %v4045 = vpop.f32.mrb[0].mxu0
      %v4046 = vadd.f32 %v3792, %v4045
      %4047 = vmatprep.mubr.f32.mxu0 0.0
      %v4048 = vand.u32 %v3106, 4294901760
      %v4049 = vsub.f32 %v3106, %v4048
      %4050 = vmatmul.mubr.f32.gmra.mrb[0].mxu0 %v4049
      %v4051 = vpop.f32.mrb[0].mxu0
      %v4052 = vadd.f32 %v3797, %v4051
      %v4053 = vpop.f32.mrb[0].mxu0
      %v4054 = vadd.f32 %v3799, %v4053
      %4055 = vmatprep.mubr.f32.mxu0 0.0
      %v4056 = vand.u32 %v3107, 4294901760
      %v4057 = vsub.f32 %v3107, %v4056
      %4058 = vmatmul.mubr.f32.gmra.mrb[0].mxu0 %v4057
      %v4059 = vpop.f32.mrb[0].mxu0
      %v4060 = vadd.f32 %v3804, %v4059
      %v4061 = vpop.f32.mrb[0].mxu0
      %v4062 = vadd.f32 %v3806, %v4061
      %4063 = vmatprep.mubr.f32.mxu0 0.0
      %v4064 = vand.u32 %v3108, 4294901760
      %v4065 = vsub.f32 %v3108, %v4064
      %4066 = vmatmul.mubr.f32.gmra.mrb[0].mxu0 %v4065
      %v4067 = vpop.f32.mrb[0].mxu0
      %v4068 = vadd.f32 %v3811, %v4067
      %v4069 = vpop.f32.mrb[0].mxu0
      %v4070 = vadd.f32 %v3813, %v4069
      %4071 = vdwg.mxu0
      %v4072 = vand.u32 %v3062, 4294901760
      %4073 = vmatprep.subr.mxu0 %v4072
      %v4074 = vand.u32 %v3061, 4294901760
      %4075 = vmatpush1.msra.mxu0 %v4074
      %v4076 = vand.u32 %v3064, 4294901760
      %4077 = vmatprep.subr.mxu0 %v4076
      %v4078 = vand.u32 %v3063, 4294901760
      %4079 = vmatpush1.msra.mxu0 %v4078
      %v4080 = vand.u32 %v3066, 4294901760
      %4081 = vmatprep.subr.mxu0 %v4080
      %v4082 = vand.u32 %v3065, 4294901760
      %4083 = vmatpush1.msra.mxu0 %v4082
      %v4084 = vand.u32 %v3068, 4294901760
      %4085 = vmatprep.subr.mxu0 %v4084
      %v4086 = vand.u32 %v3067, 4294901760
      %4087 = vmatpush1.msra.mxu0 %v4086
      %v4088 = vand.u32 %v3070, 4294901760
      %4089 = vmatprep.subr.mxu0 %v4088
      %v4090 = vand.u32 %v3069, 4294901760
      %4091 = vmatpush1.msra.mxu0 %v4090
      %v4092 = vand.u32 %v3072, 4294901760
      %4093 = vmatprep.subr.mxu0 %v4092
      %v4094 = vand.u32 %v3071, 4294901760
      %4095 = vmatpush1.msra.mxu0 %v4094
      %v4096 = vand.u32 %v3074, 4294901760
      %4097 = vmatprep.subr.mxu0 %v4096
      %v4098 = vand.u32 %v3073, 4294901760
      %4099 = vmatpush1.msra.mxu0 %v4098
      %v4100 = vand.u32 %v3076, 4294901760
      %4101 = vmatprep.subr.mxu0 %v4100
      %v4102 = vand.u32 %v3075, 4294901760
      %4103 = vmatpush1.msra.mxu0 %v4102
      %v4104 = vand.u32 %v3078, 4294901760
      %4105 = vmatprep.subr.mxu0 %v4104
      %v4106 = vand.u32 %v3077, 4294901760
      %4107 = vmatpush1.msra.mxu0 %v4106
      %v4108 = vand.u32 %v3080, 4294901760
      %4109 = vmatprep.subr.mxu0 %v4108
      %v4110 = vand.u32 %v3079, 4294901760
      %4111 = vmatpush1.msra.mxu0 %v4110
      %v4112 = vand.u32 %v3082, 4294901760
      %4113 = vmatprep.subr.mxu0 %v4112
      %v4114 = vand.u32 %v3081, 4294901760
      %4115 = vmatpush1.msra.mxu0 %v4114
      %v4116 = vand.u32 %v3084, 4294901760
      %4117 = vmatprep.subr.mxu0 %v4116
      %v4118 = vand.u32 %v3083, 4294901760
      %4119 = vmatpush1.msra.mxu0 %v4118
      %v4120 = vand.u32 %v3086, 4294901760
      %4121 = vmatprep.subr.mxu0 %v4120
      %v4122 = vand.u32 %v3085, 4294901760
      %4123 = vmatpush1.msra.mxu0 %v4122
      %v4124 = vand.u32 %v3088, 4294901760
      %4125 = vmatprep.subr.mxu0 %v4124
      %v4126 = vand.u32 %v3087, 4294901760
      %4127 = vmatpush1.msra.mxu0 %v4126
      %v4128 = vand.u32 %v3090, 4294901760
      %4129 = vmatprep.subr.mxu0 %v4128
      %v4130 = vand.u32 %v3089, 4294901760
      %4131 = vmatpush1.msra.mxu0 %v4130
      %v4132 = vand.u32 %v3092, 4294901760
      %4133 = vmatprep.subr.mxu0 %v4132
      %v4134 = vand.u32 %v3091, 4294901760
      %4135 = vmatpush1.msra.mxu0 %v4134
      %4136 = vmatprep.subr.mxu0 0.0
      %4137 = vmatpush1.msra.mxu0 0.0
      %4138 = vmatprep.subr.mxu0 0.0
      %4139 = vmatpush1.msra.mxu0 0.0
      %4140 = vmatprep.subr.mxu0 0.0
      %4141 = vmatpush1.msra.mxu0 0.0
      %4142 = vmatprep.subr.mxu0 0.0
      %4143 = vmatpush1.msra.mxu0 0.0
      %4144 = vmatprep.subr.mxu0 0.0
      %4145 = vmatpush1.msra.mxu0 0.0
      %4146 = vmatprep.subr.mxu0 0.0
      %4147 = vmatpush1.msra.mxu0 0.0
      %4148 = vmatprep.subr.mxu0 0.0
      %4149 = vmatpush1.msra.mxu0 0.0
      %4150 = vmatprep.subr.mxu0 0.0
      %4151 = vmatpush1.msra.mxu0 0.0
      %4152 = vmatprep.subr.mxu0 0.0
      %4153 = vmatpush1.msra.mxu0 0.0
      %4154 = vmatprep.subr.mxu0 0.0
      %4155 = vmatpush1.msra.mxu0 0.0
      %4156 = vmatprep.subr.mxu0 0.0
      %4157 = vmatpush1.msra.mxu0 0.0
      %4158 = vmatprep.subr.mxu0 0.0
      %4159 = vmatpush1.msra.mxu0 0.0
      %4160 = vmatprep.subr.mxu0 0.0
      %4161 = vmatpush1.msra.mxu0 0.0
      %4162 = vmatprep.subr.mxu0 0.0
      %4163 = vmatpush1.msra.mxu0 0.0
      %4164 = vmatprep.subr.mxu0 0.0
      %4165 = vmatpush1.msra.mxu0 0.0
      %4166 = vmatprep.subr.mxu0 0.0
      %4167 = vmatpush1.msra.mxu0 0.0
      %4168 = vmatprep.mubr.f32.mxu0 0.0
      %v4169 = vand.u32 %v3093, 4294901760
      %v4170 = vsub.f32 %v3093, %v4169
      %v4171 = vand.u32 %v4170, 4294901760
      %4172 = vmatmul.mubr.f32.gmra.mrb[0].mxu0 %v4171
      %v4173 = vpop.f32.mrb[0].mxu0
      %v4174 = vadd.f32 %v3948, %v4173
      %v4175 = vpop.f32.mrb[0].mxu0
      %v4176 = vadd.f32 %v3950, %v4175
      %4177 = vmatprep.mubr.f32.mxu0 0.0
      %v4178 = vand.u32 %v3094, 4294901760
      %v4179 = vsub.f32 %v3094, %v4178
      %v4180 = vand.u32 %v4179, 4294901760
      %4181 = vmatmul.mubr.f32.gmra.mrb[0].mxu0 %v4180
      %v4182 = vpop.f32.mrb[0].mxu0
      %v4183 = vadd.f32 %v3956, %v4182
      %v4184 = vpop.f32.mrb[0].mxu0
      %v4185 = vadd.f32 %v3958, %v4184
      %4186 = vmatprep.mubr.f32.mxu0 0.0
      %v4187 = vand.u32 %v3095, 4294901760
      %v4188 = vsub.f32 %v3095, %v4187
      %v4189 = vand.u32 %v4188, 4294901760
      %4190 = vmatmul.mubr.f32.gmra.mrb[0].mxu0 %v4189
      %v4191 = vpop.f32.mrb[0].mxu0
      %v4192 = vadd.f32 %v3964, %v4191
      %v4193 = vpop.f32.mrb[0].mxu0
      %v4194 = vadd.f32 %v3966, %v4193
      %4195 = vmatprep.mubr.f32.mxu0 0.0
      %v4196 = vand.u32 %v3096, 4294901760
      %v4197 = vsub.f32 %v3096, %v4196
      %v4198 = vand.u32 %v4197, 4294901760
      %4199 = vmatmul.mubr.f32.gmra.mrb[0].mxu0 %v4198
      %v4200 = vpop.f32.mrb[0].mxu0
      %v4201 = vadd.f32 %v3972, %v4200
      %v4202 = vpop.f32.mrb[0].mxu0
      %v4203 = vadd.f32 %v3974, %v4202
      %4204 = vmatprep.mubr.f32.mxu0 0.0
      %v4205 = vand.u32 %v3097, 4294901760
      %v4206 = vsub.f32 %v3097, %v4205
      %v4207 = vand.u32 %v4206, 4294901760
      %4208 = vmatmul.mubr.f32.gmra.mrb[0].mxu0 %v4207
      %v4209 = vpop.f32.mrb[0].mxu0
      %v4210 = vadd.f32 %v3980, %v4209
      %v4211 = vpop.f32.mrb[0].mxu0
      %v4212 = vadd.f32 %v3982, %v4211
      %4213 = vmatprep.mubr.f32.mxu0 0.0
      %v4214 = vand.u32 %v3098, 4294901760
      %v4215 = vsub.f32 %v3098, %v4214
      %v4216 = vand.u32 %v4215, 4294901760
      %4217 = vmatmul.mubr.f32.gmra.mrb[0].mxu0 %v4216
      %v4218 = vpop.f32.mrb[0].mxu0
      %v4219 = vadd.f32 %v3988, %v4218
      %v4220 = vpop.f32.mrb[0].mxu0
      %v4221 = vadd.f32 %v3990, %v4220
      %4222 = vmatprep.mubr.f32.mxu0 0.0
      %v4223 = vand.u32 %v3099, 4294901760
      %v4224 = vsub.f32 %v3099, %v4223
      %v4225 = vand.u32 %v4224, 4294901760
      %4226 = vmatmul.mubr.f32.gmra.mrb[0].mxu0 %v4225
      %v4227 = vpop.f32.mrb[0].mxu0
      %v4228 = vadd.f32 %v3996, %v4227
      %v4229 = vpop.f32.mrb[0].mxu0
      %v4230 = vadd.f32 %v3998, %v4229
      %4231 = vmatprep.mubr.f32.mxu0 0.0
      %v4232 = vand.u32 %v3100, 4294901760
      %v4233 = vsub.f32 %v3100, %v4232
      %v4234 = vand.u32 %v4233, 4294901760
      %4235 = vmatmul.mubr.f32.gmra.mrb[0].mxu0 %v4234
      %v4236 = vpop.f32.mrb[0].mxu0
      %v4237 = vadd.f32 %v4004, %v4236
      %v4238 = vpop.f32.mrb[0].mxu0
      %v4239 = vadd.f32 %v4006, %v4238
      %4240 = vmatprep.mubr.f32.mxu0 0.0
      %v4241 = vand.u32 %v3101, 4294901760
      %v4242 = vsub.f32 %v3101, %v4241
      %v4243 = vand.u32 %v4242, 4294901760
      %4244 = vmatmul.mubr.f32.gmra.mrb[0].mxu0 %v4243
      %v4245 = vpop.f32.mrb[0].mxu0
      %v4246 = vadd.f32 %v4012, %v4245
      %v4247 = vpop.f32.mrb[0].mxu0
      %v4248 = vadd.f32 %v4014, %v4247
      %4249 = vmatprep.mubr.f32.mxu0 0.0
      %v4250 = vand.u32 %v3102, 4294901760
      %v4251 = vsub.f32 %v3102, %v4250
      %v4252 = vand.u32 %v4251, 4294901760
      %4253 = vmatmul.mubr.f32.gmra.mrb[0].mxu0 %v4252
      %v4254 = vpop.f32.mrb[0].mxu0
      %v4255 = vadd.f32 %v4020, %v4254
      %v4256 = vpop.f32.mrb[0].mxu0
      %v4257 = vadd.f32 %v4022, %v4256
      %4258 = vmatprep.mubr.f32.mxu0 0.0
      %v4259 = vand.u32 %v3103, 4294901760
      %v4260 = vsub.f32 %v3103, %v4259
      %v4261 = vand.u32 %v4260, 4294901760
      %4262 = vmatmul.mubr.f32.gmra.mrb[0].mxu0 %v4261
      %v4263 = vpop.f32.mrb[0].mxu0
      %v4264 = vadd.f32 %v4028, %v4263
      %v4265 = vpop.f32.mrb[0].mxu0
      %v4266 = vadd.f32 %v4030, %v4265
      %4267 = vmatprep.mubr.f32.mxu0 0.0
      %v4268 = vand.u32 %v3104, 4294901760
      %v4269 = vsub.f32 %v3104, %v4268
      %v4270 = vand.u32 %v4269, 4294901760
      %4271 = vmatmul.mubr.f32.gmra.mrb[0].mxu0 %v4270
      %v4272 = vpop.f32.mrb[0].mxu0
      %v4273 = vadd.f32 %v4036, %v4272
      %v4274 = vpop.f32.mrb[0].mxu0
      %v4275 = vadd.f32 %v4038, %v4274
      %4276 = vmatprep.mubr.f32.mxu0 0.0
      %v4277 = vand.u32 %v3105, 4294901760
      %v4278 = vsub.f32 %v3105, %v4277
      %v4279 = vand.u32 %v4278, 4294901760
      %4280 = vmatmul.mubr.f32.gmra.mrb[0].mxu0 %v4279
      %v4281 = vpop.f32.mrb[0].mxu0
      %v4282 = vadd.f32 %v4044, %v4281
      %v4283 = vpop.f32.mrb[0].mxu0
      %v4284 = vadd.f32 %v4046, %v4283
      %4285 = vmatprep.mubr.f32.mxu0 0.0
      %v4286 = vand.u32 %v3106, 4294901760
      %v4287 = vsub.f32 %v3106, %v4286
      %v4288 = vand.u32 %v4287, 4294901760
      %4289 = vmatmul.mubr.f32.gmra.mrb[0].mxu0 %v4288
      %v4290 = vpop.f32.mrb[0].mxu0
      %v4291 = vadd.f32 %v4052, %v4290
      %v4292 = vpop.f32.mrb[0].mxu0
      %v4293 = vadd.f32 %v4054, %v4292
      %4294 = vmatprep.mubr.f32.mxu0 0.0
      %v4295 = vand.u32 %v3107, 4294901760
      %v4296 = vsub.f32 %v3107, %v4295
      %v4297 = vand.u32 %v4296, 4294901760
      %4298 = vmatmul.mubr.f32.gmra.mrb[0].mxu0 %v4297
      %v4299 = vpop.f32.mrb[0].mxu0
      %v4300 = vadd.f32 %v4060, %v4299
      %v4301 = vpop.f32.mrb[0].mxu0
      %v4302 = vadd.f32 %v4062, %v4301
      %4303 = vmatprep.mubr.f32.mxu0 0.0
      %v4304 = vand.u32 %v3108, 4294901760
      %v4305 = vsub.f32 %v3108, %v4304
      %v4306 = vand.u32 %v4305, 4294901760
      %4307 = vmatmul.mubr.f32.gmra.mrb[0].mxu0 %v4306
      %v4308 = vpop.f32.mrb[0].mxu0
      %v4309 = vadd.f32 %v4068, %v4308
      %v4310 = vpop.f32.mrb[0].mxu0
      %v4311 = vadd.f32 %v4070, %v4310
      %4312 = vdwg.mxu0
      %v4313 = vand.u32 %v3062, 4294901760
      %v4314 = vsub.f32 %v3062, %v4313
      %v4315 = vand.u32 %v4314, 4294901760
      %4316 = vmatprep.subr.mxu0 %v4315
      %v4317 = vand.u32 %v3061, 4294901760
      %v4318 = vsub.f32 %v3061, %v4317
      %v4319 = vand.u32 %v4318, 4294901760
      %4320 = vmatpush1.msra.mxu0 %v4319
      %v4321 = vand.u32 %v3064, 4294901760
      %v4322 = vsub.f32 %v3064, %v4321
      %v4323 = vand.u32 %v4322, 4294901760
      %4324 = vmatprep.subr.mxu0 %v4323
      %v4325 = vand.u32 %v3063, 4294901760
      %v4326 = vsub.f32 %v3063, %v4325
      %v4327 = vand.u32 %v4326, 4294901760
      %4328 = vmatpush1.msra.mxu0 %v4327
      %v4329 = vand.u32 %v3066, 4294901760
      %v4330 = vsub.f32 %v3066, %v4329
      %v4331 = vand.u32 %v4330, 4294901760
      %4332 = vmatprep.subr.mxu0 %v4331
      %v4333 = vand.u32 %v3065, 4294901760
      %v4334 = vsub.f32 %v3065, %v4333
      %v4335 = vand.u32 %v4334, 4294901760
      %4336 = vmatpush1.msra.mxu0 %v4335
      %v4337 = vand.u32 %v3068, 4294901760
      %v4338 = vsub.f32 %v3068, %v4337
      %v4339 = vand.u32 %v4338, 4294901760
      %4340 = vmatprep.subr.mxu0 %v4339
      %v4341 = vand.u32 %v3067, 4294901760
      %v4342 = vsub.f32 %v3067, %v4341
      %v4343 = vand.u32 %v4342, 4294901760
      %4344 = vmatpush1.msra.mxu0 %v4343
      %v4345 = vand.u32 %v3070, 4294901760
      %v4346 = vsub.f32 %v3070, %v4345
      %v4347 = vand.u32 %v4346, 4294901760
      %4348 = vmatprep.subr.mxu0 %v4347
      %v4349 = vand.u32 %v3069, 4294901760
      %v4350 = vsub.f32 %v3069, %v4349
      %v4351 = vand.u32 %v4350, 4294901760
      %4352 = vmatpush1.msra.mxu0 %v4351
      %v4353 = vand.u32 %v3072, 4294901760
      %v4354 = vsub.f32 %v3072, %v4353
      %v4355 = vand.u32 %v4354, 4294901760
      %4356 = vmatprep.subr.mxu0 %v4355
      %v4357 = vand.u32 %v3071, 4294901760
      %v4358 = vsub.f32 %v3071, %v4357
      %v4359 = vand.u32 %v4358, 4294901760
      %4360 = vmatpush1.msra.mxu0 %v4359
      %v4361 = vand.u32 %v3074, 4294901760
      %v4362 = vsub.f32 %v3074, %v4361
      %v4363 = vand.u32 %v4362, 4294901760
      %4364 = vmatprep.subr.mxu0 %v4363
      %v4365 = vand.u32 %v3073, 4294901760
      %v4366 = vsub.f32 %v3073, %v4365
      %v4367 = vand.u32 %v4366, 4294901760
      %4368 = vmatpush1.msra.mxu0 %v4367
      %v4369 = vand.u32 %v3076, 4294901760
      %v4370 = vsub.f32 %v3076, %v4369
      %v4371 = vand.u32 %v4370, 4294901760
      %4372 = vmatprep.subr.mxu0 %v4371
      %v4373 = vand.u32 %v3075, 4294901760
      %v4374 = vsub.f32 %v3075, %v4373
      %v4375 = vand.u32 %v4374, 4294901760
      %4376 = vmatpush1.msra.mxu0 %v4375
      %v4377 = vand.u32 %v3078, 4294901760
      %v4378 = vsub.f32 %v3078, %v4377
      %v4379 = vand.u32 %v4378, 4294901760
      %4380 = vmatprep.subr.mxu0 %v4379
      %v4381 = vand.u32 %v3077, 4294901760
      %v4382 = vsub.f32 %v3077, %v4381
      %v4383 = vand.u32 %v4382, 4294901760
      %4384 = vmatpush1.msra.mxu0 %v4383
      %v4385 = vand.u32 %v3080, 4294901760
      %v4386 = vsub.f32 %v3080, %v4385
      %v4387 = vand.u32 %v4386, 4294901760
      %4388 = vmatprep.subr.mxu0 %v4387
      %v4389 = vand.u32 %v3079, 4294901760
      %v4390 = vsub.f32 %v3079, %v4389
      %v4391 = vand.u32 %v4390, 4294901760
      %4392 = vmatpush1.msra.mxu0 %v4391
      %v4393 = vand.u32 %v3082, 4294901760
      %v4394 = vsub.f32 %v3082, %v4393
      %v4395 = vand.u32 %v4394, 4294901760
      %4396 = vmatprep.subr.mxu0 %v4395
      %v4397 = vand.u32 %v3081, 4294901760
      %v4398 = vsub.f32 %v3081, %v4397
      %v4399 = vand.u32 %v4398, 4294901760
      %4400 = vmatpush1.msra.mxu0 %v4399
      %v4401 = vand.u32 %v3084, 4294901760
      %v4402 = vsub.f32 %v3084, %v4401
      %v4403 = vand.u32 %v4402, 4294901760
      %4404 = vmatprep.subr.mxu0 %v4403
      %v4405 = vand.u32 %v3083, 4294901760
      %v4406 = vsub.f32 %v3083, %v4405
      %v4407 = vand.u32 %v4406, 4294901760
      %4408 = vmatpush1.msra.mxu0 %v4407
      %v4409 = vand.u32 %v3086, 4294901760
      %v4410 = vsub.f32 %v3086, %v4409
      %v4411 = vand.u32 %v4410, 4294901760
      %4412 = vmatprep.subr.mxu0 %v4411
      %v4413 = vand.u32 %v3085, 4294901760
      %v4414 = vsub.f32 %v3085, %v4413
      %v4415 = vand.u32 %v4414, 4294901760
      %4416 = vmatpush1.msra.mxu0 %v4415
      %v4417 = vand.u32 %v3088, 4294901760
      %v4418 = vsub.f32 %v3088, %v4417
      %v4419 = vand.u32 %v4418, 4294901760
      %4420 = vmatprep.subr.mxu0 %v4419
      %v4421 = vand.u32 %v3087, 4294901760
      %v4422 = vsub.f32 %v3087, %v4421
      %v4423 = vand.u32 %v4422, 4294901760
      %4424 = vmatpush1.msra.mxu0 %v4423
      %v4425 = vand.u32 %v3090, 4294901760
      %v4426 = vsub.f32 %v3090, %v4425
      %v4427 = vand.u32 %v4426, 4294901760
      %4428 = vmatprep.subr.mxu0 %v4427
      %v4429 = vand.u32 %v3089, 4294901760
      %v4430 = vsub.f32 %v3089, %v4429
      %v4431 = vand.u32 %v4430, 4294901760
      %4432 = vmatpush1.msra.mxu0 %v4431
      %v4433 = vand.u32 %v3092, 4294901760
      %v4434 = vsub.f32 %v3092, %v4433
      %v4435 = vand.u32 %v4434, 4294901760
      %4436 = vmatprep.subr.mxu0 %v4435
      %v4437 = vand.u32 %v3091, 4294901760
      %v4438 = vsub.f32 %v3091, %v4437
      %v4439 = vand.u32 %v4438, 4294901760
      %4440 = vmatpush1.msra.mxu0 %v4439
      %4441 = vmatprep.subr.mxu0 0.0
      %4442 = vmatpush1.msra.mxu0 0.0
      %4443 = vmatprep.subr.mxu0 0.0
      %4444 = vmatpush1.msra.mxu0 0.0
      %4445 = vmatprep.subr.mxu0 0.0
      %4446 = vmatpush1.msra.mxu0 0.0
      %4447 = vmatprep.subr.mxu0 0.0
      %4448 = vmatpush1.msra.mxu0 0.0
      %4449 = vmatprep.subr.mxu0 0.0
      %4450 = vmatpush1.msra.mxu0 0.0
      %4451 = vmatprep.subr.mxu0 0.0
      %4452 = vmatpush1.msra.mxu0 0.0
      %4453 = vmatprep.subr.mxu0 0.0
      %4454 = vmatpush1.msra.mxu0 0.0
      %4455 = vmatprep.subr.mxu0 0.0
      %4456 = vmatpush1.msra.mxu0 0.0
      %4457 = vmatprep.subr.mxu0 0.0
      %4458 = vmatpush1.msra.mxu0 0.0
      %4459 = vmatprep.subr.mxu0 0.0
      %4460 = vmatpush1.msra.mxu0 0.0
      %4461 = vmatprep.subr.mxu0 0.0
      %4462 = vmatpush1.msra.mxu0 0.0
      %4463 = vmatprep.subr.mxu0 0.0
      %4464 = vmatpush1.msra.mxu0 0.0
      %4465 = vmatprep.subr.mxu0 0.0
      %4466 = vmatpush1.msra.mxu0 0.0
      %4467 = vmatprep.subr.mxu0 0.0
      %4468 = vmatpush1.msra.mxu0 0.0
      %4469 = vmatprep.subr.mxu0 0.0
      %4470 = vmatpush1.msra.mxu0 0.0
      %4471 = vmatprep.subr.mxu0 0.0
      %4472 = vmatpush1.msra.mxu0 0.0
      %4473 = vmatprep.mubr.f32.mxu0 0.0
      %v4474 = vand.u32 %v3093, 4294901760
      %4475 = vmatmul.mubr.f32.gmra.mrb[0].mxu0 %v4474
      %v4476 = vpop.f32.mrb[0].mxu0
      %v4477 = vadd.f32 %v4174, %v4476
      %v4478 = vpop.f32.mrb[0].mxu0
      %v4479 = vadd.f32 %v4176, %v4478
      %4480 = vmatprep.mubr.f32.mxu0 0.0
      %v4481 = vand.u32 %v3094, 4294901760
      %4482 = vmatmul.mubr.f32.gmra.mrb[0].mxu0 %v4481
      %v4483 = vpop.f32.mrb[0].mxu0
      %v4484 = vadd.f32 %v4183, %v4483
      %v4485 = vpop.f32.mrb[0].mxu0
      %v4486 = vadd.f32 %v4185, %v4485
      %4487 = vmatprep.mubr.f32.mxu0 0.0
      %v4488 = vand.u32 %v3095, 4294901760
      %4489 = vmatmul.mubr.f32.gmra.mrb[0].mxu0 %v4488
      %v4490 = vpop.f32.mrb[0].mxu0
      %v4491 = vadd.f32 %v4192, %v4490
      %v4492 = vpop.f32.mrb[0].mxu0
      %v4493 = vadd.f32 %v4194, %v4492
      %4494 = vmatprep.mubr.f32.mxu0 0.0
      %v4495 = vand.u32 %v3096, 4294901760
      %4496 = vmatmul.mubr.f32.gmra.mrb[0].mxu0 %v4495
      %v4497 = vpop.f32.mrb[0].mxu0
      %v4498 = vadd.f32 %v4201, %v4497
      %v4499 = vpop.f32.mrb[0].mxu0
      %v4500 = vadd.f32 %v4203, %v4499
      %4501 = vmatprep.mubr.f32.mxu0 0.0
      %v4502 = vand.u32 %v3097, 4294901760
      %4503 = vmatmul.mubr.f32.gmra.mrb[0].mxu0 %v4502
      %v4504 = vpop.f32.mrb[0].mxu0
      %v4505 = vadd.f32 %v4210, %v4504
      %v4506 = vpop.f32.mrb[0].mxu0
      %v4507 = vadd.f32 %v4212, %v4506
      %4508 = vmatprep.mubr.f32.mxu0 0.0
      %v4509 = vand.u32 %v3098, 4294901760
      %4510 = vmatmul.mubr.f32.gmra.mrb[0].mxu0 %v4509
      %v4511 = vpop.f32.mrb[0].mxu0
      %v4512 = vadd.f32 %v4219, %v4511
      %v4513 = vpop.f32.mrb[0].mxu0
      %v4514 = vadd.f32 %v4221, %v4513
      %4515 = vmatprep.mubr.f32.mxu0 0.0
      %v4516 = vand.u32 %v3099, 4294901760
      %4517 = vmatmul.mubr.f32.gmra.mrb[0].mxu0 %v4516
      %v4518 = vpop.f32.mrb[0].mxu0
      %v4519 = vadd.f32 %v4228, %v4518
      %v4520 = vpop.f32.mrb[0].mxu0
      %v4521 = vadd.f32 %v4230, %v4520
      %4522 = vmatprep.mubr.f32.mxu0 0.0
      %v4523 = vand.u32 %v3100, 4294901760
      %4524 = vmatmul.mubr.f32.gmra.mrb[0].mxu0 %v4523
      %v4525 = vpop.f32.mrb[0].mxu0
      %v4526 = vadd.f32 %v4237, %v4525
      %v4527 = vpop.f32.mrb[0].mxu0
      %v4528 = vadd.f32 %v4239, %v4527
      %4529 = vmatprep.mubr.f32.mxu0 0.0
      %v4530 = vand.u32 %v3101, 4294901760
      %4531 = vmatmul.mubr.f32.gmra.mrb[0].mxu0 %v4530
      %v4532 = vpop.f32.mrb[0].mxu0
      %v4533 = vadd.f32 %v4246, %v4532
      %v4534 = vpop.f32.mrb[0].mxu0
      %v4535 = vadd.f32 %v4248, %v4534
      %4536 = vmatprep.mubr.f32.mxu0 0.0
      %v4537 = vand.u32 %v3102, 4294901760
      %4538 = vmatmul.mubr.f32.gmra.mrb[0].mxu0 %v4537
      %v4539 = vpop.f32.mrb[0].mxu0
      %v4540 = vadd.f32 %v4255, %v4539
      %v4541 = vpop.f32.mrb[0].mxu0
      %v4542 = vadd.f32 %v4257, %v4541
      %4543 = vmatprep.mubr.f32.mxu0 0.0
      %v4544 = vand.u32 %v3103, 4294901760
      %4545 = vmatmul.mubr.f32.gmra.mrb[0].mxu0 %v4544
      %v4546 = vpop.f32.mrb[0].mxu0
      %v4547 = vadd.f32 %v4264, %v4546
      %v4548 = vpop.f32.mrb[0].mxu0
      %v4549 = vadd.f32 %v4266, %v4548
      %4550 = vmatprep.mubr.f32.mxu0 0.0
      %v4551 = vand.u32 %v3104, 4294901760
      %4552 = vmatmul.mubr.f32.gmra.mrb[0].mxu0 %v4551
      %v4553 = vpop.f32.mrb[0].mxu0
      %v4554 = vadd.f32 %v4273, %v4553
      %v4555 = vpop.f32.mrb[0].mxu0
      %v4556 = vadd.f32 %v4275, %v4555
      %4557 = vmatprep.mubr.f32.mxu0 0.0
      %v4558 = vand.u32 %v3105, 4294901760
      %4559 = vmatmul.mubr.f32.gmra.mrb[0].mxu0 %v4558
      %v4560 = vpop.f32.mrb[0].mxu0
      %v4561 = vadd.f32 %v4282, %v4560
      %v4562 = vpop.f32.mrb[0].mxu0
      %v4563 = vadd.f32 %v4284, %v4562
      %4564 = vmatprep.mubr.f32.mxu0 0.0
      %v4565 = vand.u32 %v3106, 4294901760
      %4566 = vmatmul.mubr.f32.gmra.mrb[0].mxu0 %v4565
      %v4567 = vpop.f32.mrb[0].mxu0
      %v4568 = vadd.f32 %v4291, %v4567
      %v4569 = vpop.f32.mrb[0].mxu0
      %v4570 = vadd.f32 %v4293, %v4569
      %4571 = vmatprep.mubr.f32.mxu0 0.0
      %v4572 = vand.u32 %v3107, 4294901760
      %4573 = vmatmul.mubr.f32.gmra.mrb[0].mxu0 %v4572
      %v4574 = vpop.f32.mrb[0].mxu0
      %v4575 = vadd.f32 %v4300, %v4574
      %v4576 = vpop.f32.mrb[0].mxu0
      %v4577 = vadd.f32 %v4302, %v4576
      %4578 = vmatprep.mubr.f32.mxu0 0.0
      %v4579 = vand.u32 %v3108, 4294901760
      %4580 = vmatmul.mubr.f32.gmra.mrb[0].mxu0 %v4579
      %v4581 = vpop.f32.mrb[0].mxu0
      %v4582 = vadd.f32 %v4309, %v4581
      %v4583 = vpop.f32.mrb[0].mxu0
      %v4584 = vadd.f32 %v4311, %v4583
      %4585 = vdwg.mxu0
      %v4586 = vand.u32 %v3062, 4294901760
      %4587 = vmatprep.subr.mxu0 %v4586
      %v4588 = vand.u32 %v3061, 4294901760
      %4589 = vmatpush1.msra.mxu0 %v4588
      %v4590 = vand.u32 %v3064, 4294901760
      %4591 = vmatprep.subr.mxu0 %v4590
      %v4592 = vand.u32 %v3063, 4294901760
      %4593 = vmatpush1.msra.mxu0 %v4592
      %v4594 = vand.u32 %v3066, 4294901760
      %4595 = vmatprep.subr.mxu0 %v4594
      %v4596 = vand.u32 %v3065, 4294901760
      %4597 = vmatpush1.msra.mxu0 %v4596
      %v4598 = vand.u32 %v3068, 4294901760
      %4599 = vmatprep.subr.mxu0 %v4598
      %v4600 = vand.u32 %v3067, 4294901760
      %4601 = vmatpush1.msra.mxu0 %v4600
      %v4602 = vand.u32 %v3070, 4294901760
      %4603 = vmatprep.subr.mxu0 %v4602
      %v4604 = vand.u32 %v3069, 4294901760
      %4605 = vmatpush1.msra.mxu0 %v4604
      %v4606 = vand.u32 %v3072, 4294901760
      %4607 = vmatprep.subr.mxu0 %v4606
      %v4608 = vand.u32 %v3071, 4294901760
      %4609 = vmatpush1.msra.mxu0 %v4608
      %v4610 = vand.u32 %v3074, 4294901760
      %4611 = vmatprep.subr.mxu0 %v4610
      %v4612 = vand.u32 %v3073, 4294901760
      %4613 = vmatpush1.msra.mxu0 %v4612
      %v4614 = vand.u32 %v3076, 4294901760
      %4615 = vmatprep.subr.mxu0 %v4614
      %v4616 = vand.u32 %v3075, 4294901760
      %4617 = vmatpush1.msra.mxu0 %v4616
      %v4618 = vand.u32 %v3078, 4294901760
      %4619 = vmatprep.subr.mxu0 %v4618
      %v4620 = vand.u32 %v3077, 4294901760
      %4621 = vmatpush1.msra.mxu0 %v4620
      %v4622 = vand.u32 %v3080, 4294901760
      %4623 = vmatprep.subr.mxu0 %v4622
      %v4624 = vand.u32 %v3079, 4294901760
      %4625 = vmatpush1.msra.mxu0 %v4624
      %v4626 = vand.u32 %v3082, 4294901760
      %4627 = vmatprep.subr.mxu0 %v4626
      %v4628 = vand.u32 %v3081, 4294901760
      %4629 = vmatpush1.msra.mxu0 %v4628
      %v4630 = vand.u32 %v3084, 4294901760
      %4631 = vmatprep.subr.mxu0 %v4630
      %v4632 = vand.u32 %v3083, 4294901760
      %4633 = vmatpush1.msra.mxu0 %v4632
      %v4634 = vand.u32 %v3086, 4294901760
      %4635 = vmatprep.subr.mxu0 %v4634
      %v4636 = vand.u32 %v3085, 4294901760
      %4637 = vmatpush1.msra.mxu0 %v4636
      %v4638 = vand.u32 %v3088, 4294901760
      %4639 = vmatprep.subr.mxu0 %v4638
      %v4640 = vand.u32 %v3087, 4294901760
      %4641 = vmatpush1.msra.mxu0 %v4640
      %v4642 = vand.u32 %v3090, 4294901760
      %4643 = vmatprep.subr.mxu0 %v4642
      %v4644 = vand.u32 %v3089, 4294901760
      %4645 = vmatpush1.msra.mxu0 %v4644
      %v4646 = vand.u32 %v3092, 4294901760
      %4647 = vmatprep.subr.mxu0 %v4646
      %v4648 = vand.u32 %v3091, 4294901760
      %4649 = vmatpush1.msra.mxu0 %v4648
      %4650 = vmatprep.subr.mxu0 0.0
      %4651 = vmatpush1.msra.mxu0 0.0
      %4652 = vmatprep.subr.mxu0 0.0
      %4653 = vmatpush1.msra.mxu0 0.0
      %4654 = vmatprep.subr.mxu0 0.0
      %4655 = vmatpush1.msra.mxu0 0.0
      %4656 = vmatprep.subr.mxu0 0.0
      %4657 = vmatpush1.msra.mxu0 0.0
      %4658 = vmatprep.subr.mxu0 0.0
      %4659 = vmatpush1.msra.mxu0 0.0
      %4660 = vmatprep.subr.mxu0 0.0
      %4661 = vmatpush1.msra.mxu0 0.0
      %4662 = vmatprep.subr.mxu0 0.0
      %4663 = vmatpush1.msra.mxu0 0.0
      %4664 = vmatprep.subr.mxu0 0.0
      %4665 = vmatpush1.msra.mxu0 0.0
      %4666 = vmatprep.subr.mxu0 0.0
      %4667 = vmatpush1.msra.mxu0 0.0
      %4668 = vmatprep.subr.mxu0 0.0
      %4669 = vmatpush1.msra.mxu0 0.0
      %4670 = vmatprep.subr.mxu0 0.0
      %4671 = vmatpush1.msra.mxu0 0.0
      %4672 = vmatprep.subr.mxu0 0.0
      %4673 = vmatpush1.msra.mxu0 0.0
      %4674 = vmatprep.subr.mxu0 0.0
      %4675 = vmatpush1.msra.mxu0 0.0
      %4676 = vmatprep.subr.mxu0 0.0
      %4677 = vmatpush1.msra.mxu0 0.0
      %4678 = vmatprep.subr.mxu0 0.0
      %4679 = vmatpush1.msra.mxu0 0.0
      %4680 = vmatprep.subr.mxu0 0.0
      %4681 = vmatpush1.msra.mxu0 0.0
      %4682 = vmatprep.mubr.f32.mxu0 0.0
      %v4683 = vand.u32 %v3093, 4294901760
      %4684 = vmatmul.mubr.f32.gmra.mrb[0].mxu0 %v4683
      %v4685 = vpop.f32.mrb[0].mxu0
      %v4686 = vadd.f32 %v4477, %v4685
      %v4687 = vpop.f32.mrb[0].mxu0
      %v4688 = vadd.f32 %v4479, %v4687
      %4689 = vmatprep.mubr.f32.mxu0 0.0
      %v4690 = vand.u32 %v3094, 4294901760
      %4691 = vmatmul.mubr.f32.gmra.mrb[0].mxu0 %v4690
      %v4692 = vpop.f32.mrb[0].mxu0
      %v4693 = vadd.f32 %v4484, %v4692
      %v4694 = vpop.f32.mrb[0].mxu0
      %v4695 = vadd.f32 %v4486, %v4694
      %4696 = vmatprep.mubr.f32.mxu0 0.0
      %v4697 = vand.u32 %v3095, 4294901760
      %4698 = vmatmul.mubr.f32.gmra.mrb[0].mxu0 %v4697
      %v4699 = vpop.f32.mrb[0].mxu0
      %v4700 = vadd.f32 %v4491, %v4699
      %v4701 = vpop.f32.mrb[0].mxu0
      %v4702 = vadd.f32 %v4493, %v4701
      %4703 = vmatprep.mubr.f32.mxu0 0.0
      %v4704 = vand.u32 %v3096, 4294901760
      %4705 = vmatmul.mubr.f32.gmra.mrb[0].mxu0 %v4704
      %v4706 = vpop.f32.mrb[0].mxu0
      %v4707 = vadd.f32 %v4498, %v4706
      %v4708 = vpop.f32.mrb[0].mxu0
      %v4709 = vadd.f32 %v4500, %v4708
      %4710 = vmatprep.mubr.f32.mxu0 0.0
      %v4711 = vand.u32 %v3097, 4294901760
      %4712 = vmatmul.mubr.f32.gmra.mrb[0].mxu0 %v4711
      %v4713 = vpop.f32.mrb[0].mxu0
      %v4714 = vadd.f32 %v4505, %v4713
      %v4715 = vpop.f32.mrb[0].mxu0
      %v4716 = vadd.f32 %v4507, %v4715
      %4717 = vmatprep.mubr.f32.mxu0 0.0
      %v4718 = vand.u32 %v3098, 4294901760
      %4719 = vmatmul.mubr.f32.gmra.mrb[0].mxu0 %v4718
      %v4720 = vpop.f32.mrb[0].mxu0
      %v4721 = vadd.f32 %v4512, %v4720
      %v4722 = vpop.f32.mrb[0].mxu0
      %v4723 = vadd.f32 %v4514, %v4722
      %4724 = vmatprep.mubr.f32.mxu0 0.0
      %v4725 = vand.u32 %v3099, 4294901760
      %4726 = vmatmul.mubr.f32.gmra.mrb[0].mxu0 %v4725
      %v4727 = vpop.f32.mrb[0].mxu0
      %v4728 = vadd.f32 %v4519, %v4727
      %v4729 = vpop.f32.mrb[0].mxu0
      %v4730 = vadd.f32 %v4521, %v4729
      %4731 = vmatprep.mubr.f32.mxu0 0.0
      %v4732 = vand.u32 %v3100, 4294901760
      %4733 = vmatmul.mubr.f32.gmra.mrb[0].mxu0 %v4732
      %v4734 = vpop.f32.mrb[0].mxu0
      %v4735 = vadd.f32 %v4526, %v4734
      %v4736 = vpop.f32.mrb[0].mxu0
      %v4737 = vadd.f32 %v4528, %v4736
      %4738 = vmatprep.mubr.f32.mxu0 0.0
      %v4739 = vand.u32 %v3101, 4294901760
      %4740 = vmatmul.mubr.f32.gmra.mrb[0].mxu0 %v4739
      %v4741 = vpop.f32.mrb[0].mxu0
      %v4742 = vadd.f32 %v4533, %v4741
      %v4743 = vpop.f32.mrb[0].mxu0
      %v4744 = vadd.f32 %v4535, %v4743
      %4745 = vmatprep.mubr.f32.mxu0 0.0
      %v4746 = vand.u32 %v3102, 4294901760
      %4747 = vmatmul.mubr.f32.gmra.mrb[0].mxu0 %v4746
      %v4748 = vpop.f32.mrb[0].mxu0
      %v4749 = vadd.f32 %v4540, %v4748
      %v4750 = vpop.f32.mrb[0].mxu0
      %v4751 = vadd.f32 %v4542, %v4750
      %4752 = vmatprep.mubr.f32.mxu0 0.0
      %v4753 = vand.u32 %v3103, 4294901760
      %4754 = vmatmul.mubr.f32.gmra.mrb[0].mxu0 %v4753
      %v4755 = vpop.f32.mrb[0].mxu0
      %v4756 = vadd.f32 %v4547, %v4755
      %v4757 = vpop.f32.mrb[0].mxu0
      %v4758 = vadd.f32 %v4549, %v4757
      %4759 = vmatprep.mubr.f32.mxu0 0.0
      %v4760 = vand.u32 %v3104, 4294901760
      %4761 = vmatmul.mubr.f32.gmra.mrb[0].mxu0 %v4760
      %v4762 = vpop.f32.mrb[0].mxu0
      %v4763 = vadd.f32 %v4554, %v4762
      %v4764 = vpop.f32.mrb[0].mxu0
      %v4765 = vadd.f32 %v4556, %v4764
      %4766 = vmatprep.mubr.f32.mxu0 0.0
      %v4767 = vand.u32 %v3105, 4294901760
      %4768 = vmatmul.mubr.f32.gmra.mrb[0].mxu0 %v4767
      %v4769 = vpop.f32.mrb[0].mxu0
      %v4770 = vadd.f32 %v4561, %v4769
      %v4771 = vpop.f32.mrb[0].mxu0
      %v4772 = vadd.f32 %v4563, %v4771
      %4773 = vmatprep.mubr.f32.mxu0 0.0
      %v4774 = vand.u32 %v3106, 4294901760
      %4775 = vmatmul.mubr.f32.gmra.mrb[0].mxu0 %v4774
      %v4776 = vpop.f32.mrb[0].mxu0
      %v4777 = vadd.f32 %v4568, %v4776
      %v4778 = vpop.f32.mrb[0].mxu0
      %v4779 = vadd.f32 %v4570, %v4778
      %4780 = vmatprep.mubr.f32.mxu0 0.0
      %v4781 = vand.u32 %v3107, 4294901760
      %4782 = vmatmul.mubr.f32.gmra.mrb[0].mxu0 %v4781
      %v4783 = vpop.f32.mrb[0].mxu0
      %v4784 = vadd.f32 %v4575, %v4783
      %v4785 = vpop.f32.mrb[0].mxu0
      %v4786 = vadd.f32 %v4577, %v4785
      %4787 = vmatprep.mubr.f32.mxu0 0.0
      %v4788 = vand.u32 %v3108, 4294901760
      %4789 = vmatmul.mubr.f32.gmra.mrb[0].mxu0 %v4788
      %v4790 = vpop.f32.mrb[0].mxu0
      %v4791 = vadd.f32 %v4582, %v4790
      %v4792 = vpop.f32.mrb[0].mxu0
      %v4793 = vadd.f32 %v4584, %v4792
      %4794 = vdwg.mxu0
      %v4795 = vmul.f32 %v4686, 100.0
      %v4796 = vmul.f32 %v4688, 100.0
      %v4797 = vmul.f32 %v4693, 100.0
      %v4798 = vmul.f32 %v4695, 100.0
      %v4799 = vmul.f32 %v4700, 100.0
      %v4800 = vmul.f32 %v4702, 100.0
      %v4801 = vmul.f32 %v4707, 100.0
      %v4802 = vmul.f32 %v4709, 100.0
      %v4803 = vmul.f32 %v4714, 100.0
      %v4804 = vmul.f32 %v4716, 100.0
      %v4805 = vmul.f32 %v4721, 100.0
      %v4806 = vmul.f32 %v4723, 100.0
      %v4807 = vmul.f32 %v4728, 100.0
      %v4808 = vmul.f32 %v4730, 100.0
      %v4809 = vmul.f32 %v4735, 100.0
      %v4810 = vmul.f32 %v4737, 100.0
      %v4811 = vmul.f32 %v4742, 100.0
      %v4812 = vmul.f32 %v4744, 100.0
      %v4813 = vmul.f32 %v4749, 100.0
      %v4814 = vmul.f32 %v4751, 100.0
      %v4815 = vmul.f32 %v4756, 100.0
      %v4816 = vmul.f32 %v4758, 100.0
      %v4817 = vmul.f32 %v4763, 100.0
      %v4818 = vmul.f32 %v4765, 100.0
      %v4819 = vmul.f32 %v4770, 100.0
      %v4820 = vmul.f32 %v4772, 100.0
      %v4821 = vmul.f32 %v4777, 100.0
      %v4822 = vmul.f32 %v4779, 100.0
      %v4823 = vmul.f32 %v4784, 100.0
      %v4824 = vmul.f32 %v4786, 100.0
      %v4825 = vmul.f32 %v4791, 100.0
      %v4826 = vmul.f32 %v4793, 100.0
      %v4827 = vmin.f32 %v4795, 20.0
      %v4828 = vmin.f32 %v4796, 20.0
      %v4829 = vmin.f32 %v4797, 20.0
      %v4830 = vmin.f32 %v4798, 20.0
      %v4831 = vmin.f32 %v4799, 20.0
      %v4832 = vmin.f32 %v4800, 20.0
      %v4833 = vmin.f32 %v4801, 20.0
      %v4834 = vmin.f32 %v4802, 20.0
      %v4835 = vmin.f32 %v4803, 20.0
      %v4836 = vmin.f32 %v4804, 20.0
      %v4837 = vmin.f32 %v4805, 20.0
      %v4838 = vmin.f32 %v4806, 20.0
      %v4839 = vmin.f32 %v4807, 20.0
      %v4840 = vmin.f32 %v4808, 20.0
      %v4841 = vmin.f32 %v4809, 20.0
      %v4842 = vmin.f32 %v4810, 20.0
      %v4843 = vmin.f32 %v4811, 20.0
      %v4844 = vmin.f32 %v4812, 20.0
      %v4845 = vmin.f32 %v4813, 20.0
      %v4846 = vmin.f32 %v4814, 20.0
      %v4847 = vmin.f32 %v4815, 20.0
      %v4848 = vmin.f32 %v4816, 20.0
      %v4849 = vmin.f32 %v4817, 20.0
      %v4850 = vmin.f32 %v4818, 20.0
      %v4851 = vmin.f32 %v4819, 20.0
      %v4852 = vmin.f32 %v4820, 20.0
      %v4853 = vmin.f32 %v4821, 20.0
      %v4854 = vmin.f32 %v4822, 20.0
      %v4855 = vmin.f32 %v4823, 20.0
      %v4856 = vmin.f32 %v4824, 20.0
      %v4857 = vmin.f32 %v4825, 20.0
      %v4858 = vmin.f32 %v4826, 20.0
      %v4859 = vmul.f32 %v4827, 1.442695
      %v4860 = vpow.pop %v4859
      %v4861 = vmul.f32 %v4828, 1.442695
      %v4862 = vpow.pop %v4861
      %v4863 = vmul.f32 %v4829, 1.442695
      %v4864 = vpow.pop %v4863
      %v4865 = vmul.f32 %v4830, 1.442695
      %v4866 = vpow.pop %v4865
      %v4867 = vmul.f32 %v4831, 1.442695
      %v4868 = vpow.pop %v4867
      %v4869 = vmul.f32 %v4832, 1.442695
      %v4870 = vpow.pop %v4869
      %v4871 = vmul.f32 %v4833, 1.442695
      %v4872 = vpow.pop %v4871
      %v4873 = vmul.f32 %v4834, 1.442695
      %v4874 = vpow.pop %v4873
      %v4875 = vmul.f32 %v4835, 1.442695
      %v4876 = vpow.pop %v4875
      %v4877 = vmul.f32 %v4836, 1.442695
      %v4878 = vpow.pop %v4877
      %v4879 = vmul.f32 %v4837, 1.442695
      %v4880 = vpow.pop %v4879
      %v4881 = vmul.f32 %v4838, 1.442695
      %v4882 = vpow.pop %v4881
      %v4883 = vmul.f32 %v4839, 1.442695
      %v4884 = vpow.pop %v4883
      %v4885 = vmul.f32 %v4840, 1.442695
      %v4886 = vpow.pop %v4885
      %v4887 = vmul.f32 %v4841, 1.442695
      %v4888 = vpow.pop %v4887
      %v4889 = vmul.f32 %v4842, 1.442695
      %v4890 = vpow.pop %v4889
      %v4891 = vmul.f32 %v4843, 1.442695
      %v4892 = vpow.pop %v4891
      %v4893 = vmul.f32 %v4844, 1.442695
      %v4894 = vpow.pop %v4893
      %v4895 = vmul.f32 %v4845, 1.442695
      %v4896 = vpow.pop %v4895
      %v4897 = vmul.f32 %v4846, 1.442695
      %v4898 = vpow.pop %v4897
      %v4899 = vmul.f32 %v4847, 1.442695
      %v4900 = vpow.pop %v4899
      %v4901 = vmul.f32 %v4848, 1.442695
      %v4902 = vpow.pop %v4901
      %v4903 = vmul.f32 %v4849, 1.442695
      %v4904 = vpow.pop %v4903
      %v4905 = vmul.f32 %v4850, 1.442695
      %v4906 = vpow.pop %v4905
      %v4907 = vmul.f32 %v4851, 1.442695
      %v4908 = vpow.pop %v4907
      %v4909 = vmul.f32 %v4852, 1.442695
      %v4910 = vpow.pop %v4909
      %v4911 = vmul.f32 %v4853, 1.442695
      %v4912 = vpow.pop %v4911
      %v4913 = vmul.f32 %v4854, 1.442695
      %v4914 = vpow.pop %v4913
      %v4915 = vmul.f32 %v4855, 1.442695
      %v4916 = vpow.pop %v4915
      %v4917 = vmul.f32 %v4856, 1.442695
      %v4918 = vpow.pop %v4917
      %v4919 = vmul.f32 %v4857, 1.442695
      %v4920 = vpow.pop %v4919
      %v4921 = vmul.f32 %v4858, 1.442695
      %v4922 = vpow.pop %v4921
      %v4923 = vadd.f32 %v4860, 1.0
      %v4924 = vadd.f32 %v4862, 1.0
      %v4925 = vadd.f32 %v4864, 1.0
      %v4926 = vadd.f32 %v4866, 1.0
      %v4927 = vadd.f32 %v4868, 1.0
      %v4928 = vadd.f32 %v4870, 1.0
      %v4929 = vadd.f32 %v4872, 1.0
      %v4930 = vadd.f32 %v4874, 1.0
      %v4931 = vadd.f32 %v4876, 1.0
      %v4932 = vadd.f32 %v4878, 1.0
      %v4933 = vadd.f32 %v4880, 1.0
      %v4934 = vadd.f32 %v4882, 1.0
      %v4935 = vadd.f32 %v4884, 1.0
      %v4936 = vadd.f32 %v4886, 1.0
      %v4937 = vadd.f32 %v4888, 1.0
      %v4938 = vadd.f32 %v4890, 1.0
      %v4939 = vadd.f32 %v4892, 1.0
      %v4940 = vadd.f32 %v4894, 1.0
      %v4941 = vadd.f32 %v4896, 1.0
      %v4942 = vadd.f32 %v4898, 1.0
      %v4943 = vadd.f32 %v4900, 1.0
      %v4944 = vadd.f32 %v4902, 1.0
      %v4945 = vadd.f32 %v4904, 1.0
      %v4946 = vadd.f32 %v4906, 1.0
      %v4947 = vadd.f32 %v4908, 1.0
      %v4948 = vadd.f32 %v4910, 1.0
      %v4949 = vadd.f32 %v4912, 1.0
      %v4950 = vadd.f32 %v4914, 1.0
      %v4951 = vadd.f32 %v4916, 1.0
      %v4952 = vadd.f32 %v4918, 1.0
      %v4953 = vadd.f32 %v4920, 1.0
      %v4954 = vadd.f32 %v4922, 1.0
      %v4955 = vlog2.pop %v4923
      %v4956 = vmul.f32 %v4955, 0.6931472
      %v4957 = vlog2.pop %v4924
      %v4958 = vmul.f32 %v4957, 0.6931472
      %v4959 = vlog2.pop %v4925
      %v4960 = vmul.f32 %v4959, 0.6931472
      %v4961 = vlog2.pop %v4926
      %v4962 = vmul.f32 %v4961, 0.6931472
      %v4963 = vlog2.pop %v4927
      %v4964 = vmul.f32 %v4963, 0.6931472
      %v4965 = vlog2.pop %v4928
      %v4966 = vmul.f32 %v4965, 0.6931472
      %v4967 = vlog2.pop %v4929
      %v4968 = vmul.f32 %v4967, 0.6931472
      %v4969 = vlog2.pop %v4930
      %v4970 = vmul.f32 %v4969, 0.6931472
      %v4971 = vlog2.pop %v4931
      %v4972 = vmul.f32 %v4971, 0.6931472
      %v4973 = vlog2.pop %v4932
      %v4974 = vmul.f32 %v4973, 0.6931472
      %v4975 = vlog2.pop %v4933
      %v4976 = vmul.f32 %v4975, 0.6931472
      %v4977 = vlog2.pop %v4934
      %v4978 = vmul.f32 %v4977, 0.6931472
      %v4979 = vlog2.pop %v4935
      %v4980 = vmul.f32 %v4979, 0.6931472
      %v4981 = vlog2.pop %v4936
      %v4982 = vmul.f32 %v4981, 0.6931472
      %v4983 = vlog2.pop %v4937
      %v4984 = vmul.f32 %v4983, 0.6931472
      %v4985 = vlog2.pop %v4938
      %v4986 = vmul.f32 %v4985, 0.6931472
      %v4987 = vlog2.pop %v4939
      %v4988 = vmul.f32 %v4987, 0.6931472
      %v4989 = vlog2.pop %v4940
      %v4990 = vmul.f32 %v4989, 0.6931472
      %v4991 = vlog2.pop %v4941
      %v4992 = vmul.f32 %v4991, 0.6931472
      %v4993 = vlog2.pop %v4942
      %v4994 = vmul.f32 %v4993, 0.6931472
      %v4995 = vlog2.pop %v4943
      %v4996 = vmul.f32 %v4995, 0.6931472
      %v4997 = vlog2.pop %v4944
      %v4998 = vmul.f32 %v4997, 0.6931472
      %v4999 = vlog2.pop %v4945
      %v5000 = vmul.f32 %v4999, 0.6931472
      %v5001 = vlog2.pop %v4946
      %v5002 = vmul.f32 %v5001, 0.6931472
      %v5003 = vlog2.pop %v4947
      %v5004 = vmul.f32 %v5003, 0.6931472
      %v5005 = vlog2.pop %v4948
      %v5006 = vmul.f32 %v5005, 0.6931472
      %v5007 = vlog2.pop %v4949
      %v5008 = vmul.f32 %v5007, 0.6931472
      %v5009 = vlog2.pop %v4950
      %v5010 = vmul.f32 %v5009, 0.6931472
      %v5011 = vlog2.pop %v4951
      %v5012 = vmul.f32 %v5011, 0.6931472
      %v5013 = vlog2.pop %v4952
      %v5014 = vmul.f32 %v5013, 0.6931472
      %v5015 = vlog2.pop %v4953
      %v5016 = vmul.f32 %v5015, 0.6931472
      %v5017 = vlog2.pop %v4954
      %v5018 = vmul.f32 %v5017, 0.6931472
      %v5019 = vmul.f32 %v4956, 0.01
      %v5020 = vmul.f32 %v4958, 0.01
      %v5021 = vmul.f32 %v4960, 0.01
      %v5022 = vmul.f32 %v4962, 0.01
      %v5023 = vmul.f32 %v4964, 0.01
      %v5024 = vmul.f32 %v4966, 0.01
      %v5025 = vmul.f32 %v4968, 0.01
      %v5026 = vmul.f32 %v4970, 0.01
      %v5027 = vmul.f32 %v4972, 0.01
      %v5028 = vmul.f32 %v4974, 0.01
      %v5029 = vmul.f32 %v4976, 0.01
      %v5030 = vmul.f32 %v4978, 0.01
      %v5031 = vmul.f32 %v4980, 0.01
      %v5032 = vmul.f32 %v4982, 0.01
      %v5033 = vmul.f32 %v4984, 0.01
      %v5034 = vmul.f32 %v4986, 0.01
      %v5035 = vmul.f32 %v4988, 0.01
      %v5036 = vmul.f32 %v4990, 0.01
      %v5037 = vmul.f32 %v4992, 0.01
      %v5038 = vmul.f32 %v4994, 0.01
      %v5039 = vmul.f32 %v4996, 0.01
      %v5040 = vmul.f32 %v4998, 0.01
      %v5041 = vmul.f32 %v5000, 0.01
      %v5042 = vmul.f32 %v5002, 0.01
      %v5043 = vmul.f32 %v5004, 0.01
      %v5044 = vmul.f32 %v5006, 0.01
      %v5045 = vmul.f32 %v5008, 0.01
      %v5046 = vmul.f32 %v5010, 0.01
      %v5047 = vmul.f32 %v5012, 0.01
      %v5048 = vmul.f32 %v5014, 0.01
      %v5049 = vmul.f32 %v5016, 0.01
      %v5050 = vmul.f32 %v5018, 0.01
      %vm5051 = vcmp.gt.f32.partialorder %v4795, 20.0
      %vm5052 = vcmp.gt.f32.partialorder %v4796, 20.0
      %vm5053 = vcmp.gt.f32.partialorder %v4797, 20.0
      %vm5054 = vcmp.gt.f32.partialorder %v4798, 20.0
      %vm5055 = vcmp.gt.f32.partialorder %v4799, 20.0
      %vm5056 = vcmp.gt.f32.partialorder %v4800, 20.0
      %vm5057 = vcmp.gt.f32.partialorder %v4801, 20.0
      %vm5058 = vcmp.gt.f32.partialorder %v4802, 20.0
      %vm5059 = vcmp.gt.f32.partialorder %v4803, 20.0
      %vm5060 = vcmp.gt.f32.partialorder %v4804, 20.0
      %vm5061 = vcmp.gt.f32.partialorder %v4805, 20.0
      %vm5062 = vcmp.gt.f32.partialorder %v4806, 20.0
      %vm5063 = vcmp.gt.f32.partialorder %v4807, 20.0
      %vm5064 = vcmp.gt.f32.partialorder %v4808, 20.0
      %vm5065 = vcmp.gt.f32.partialorder %v4809, 20.0
      %vm5066 = vcmp.gt.f32.partialorder %v4810, 20.0
      %vm5067 = vcmp.gt.f32.partialorder %v4811, 20.0
      %vm5068 = vcmp.gt.f32.partialorder %v4812, 20.0
      %vm5069 = vcmp.gt.f32.partialorder %v4813, 20.0
      %vm5070 = vcmp.gt.f32.partialorder %v4814, 20.0
      %vm5071 = vcmp.gt.f32.partialorder %v4815, 20.0
      %vm5072 = vcmp.gt.f32.partialorder %v4816, 20.0
      %vm5073 = vcmp.gt.f32.partialorder %v4817, 20.0
      %vm5074 = vcmp.gt.f32.partialorder %v4818, 20.0
      %vm5075 = vcmp.gt.f32.partialorder %v4819, 20.0
      %vm5076 = vcmp.gt.f32.partialorder %v4820, 20.0
      %vm5077 = vcmp.gt.f32.partialorder %v4821, 20.0
      %vm5078 = vcmp.gt.f32.partialorder %v4822, 20.0
      %vm5079 = vcmp.gt.f32.partialorder %v4823, 20.0
      %vm5080 = vcmp.gt.f32.partialorder %v4824, 20.0
      %vm5081 = vcmp.gt.f32.partialorder %v4825, 20.0
      %vm5082 = vcmp.gt.f32.partialorder %v4826, 20.0
      %v5083 = vsel %vm5051, %v4686, %v5019
      %v5084 = vsel %vm5052, %v4688, %v5020
      %v5085 = vsel %vm5053, %v4693, %v5021
      %v5086 = vsel %vm5054, %v4695, %v5022
      %v5087 = vsel %vm5055, %v4700, %v5023
      %v5088 = vsel %vm5056, %v4702, %v5024
      %v5089 = vsel %vm5057, %v4707, %v5025
      %v5090 = vsel %vm5058, %v4709, %v5026
      %v5091 = vsel %vm5059, %v4714, %v5027
      %v5092 = vsel %vm5060, %v4716, %v5028
      %v5093 = vsel %vm5061, %v4721, %v5029
      %v5094 = vsel %vm5062, %v4723, %v5030
      %v5095 = vsel %vm5063, %v4728, %v5031
      %v5096 = vsel %vm5064, %v4730, %v5032
      %v5097 = vsel %vm5065, %v4735, %v5033
      %v5098 = vsel %vm5066, %v4737, %v5034
      %v5099 = vsel %vm5067, %v4742, %v5035
      %v5100 = vsel %vm5068, %v4744, %v5036
      %v5101 = vsel %vm5069, %v4749, %v5037
      %v5102 = vsel %vm5070, %v4751, %v5038
      %v5103 = vsel %vm5071, %v4756, %v5039
      %v5104 = vsel %vm5072, %v4758, %v5040
      %v5105 = vsel %vm5073, %v4763, %v5041
      %v5106 = vsel %vm5074, %v4765, %v5042
      %v5107 = vsel %vm5075, %v4770, %v5043
      %v5108 = vsel %vm5076, %v4772, %v5044
      %v5109 = vsel %vm5077, %v4777, %v5045
      %v5110 = vsel %vm5078, %v4779, %v5046
      %v5111 = vsel %vm5079, %v4784, %v5047
      %v5112 = vsel %vm5080, %v4786, %v5048
      %v5113 = vsel %vm5081, %v4791, %v5049
      %v5114 = vsel %vm5082, %v4793, %v5050
      %v5115 = vld [vmem:[%s7] sm:$0x1]
      %v5116 = vld [vmem:[#allocation2] sm:$0x1]
      %5118 = vset.pattern.permute.xlu0 0
      %5119 = vperm.xlu0 %5118, %v5116
      %v5120 = vpop.permute.xlu0 %5119
      %v5122 = vlaneseq
      %v5123 = vshrl.u32 %v5122, 7
      %v5124 = vsub.s32 0, %v5123
      %v5125 = vrot.slane %v5120, %v5124
      %v5126 = vand.u32 %v5084, 4294901760
      %5127 = vmatprep.subr.mxu0 %v5126
      %v5128 = vand.u32 %v5083, 4294901760
      %5129 = vmatpush1.msra.mxu0 %v5128
      %v5130 = vand.u32 %v5086, 4294901760
      %5131 = vmatprep.subr.mxu0 %v5130
      %v5132 = vand.u32 %v5085, 4294901760
      %5133 = vmatpush1.msra.mxu0 %v5132
      %v5134 = vand.u32 %v5088, 4294901760
      %5135 = vmatprep.subr.mxu0 %v5134
      %v5136 = vand.u32 %v5087, 4294901760
      %5137 = vmatpush1.msra.mxu0 %v5136
      %v5138 = vand.u32 %v5090, 4294901760
      %5139 = vmatprep.subr.mxu0 %v5138
      %v5140 = vand.u32 %v5089, 4294901760
      %5141 = vmatpush1.msra.mxu0 %v5140
      %v5142 = vand.u32 %v5092, 4294901760
      %5143 = vmatprep.subr.mxu0 %v5142
      %v5144 = vand.u32 %v5091, 4294901760
      %5145 = vmatpush1.msra.mxu0 %v5144
      %v5146 = vand.u32 %v5094, 4294901760
      %5147 = vmatprep.subr.mxu0 %v5146
      %v5148 = vand.u32 %v5093, 4294901760
      %5149 = vmatpush1.msra.mxu0 %v5148
      %v5150 = vand.u32 %v5096, 4294901760
      %5151 = vmatprep.subr.mxu0 %v5150
      %v5152 = vand.u32 %v5095, 4294901760
      %5153 = vmatpush1.msra.mxu0 %v5152
      %v5154 = vand.u32 %v5098, 4294901760
      %5155 = vmatprep.subr.mxu0 %v5154
      %v5156 = vand.u32 %v5097, 4294901760
      %5157 = vmatpush1.msra.mxu0 %v5156
      %v5158 = vand.u32 %v5100, 4294901760
      %5159 = vmatprep.subr.mxu0 %v5158
      %v5160 = vand.u32 %v5099, 4294901760
      %5161 = vmatpush1.msra.mxu0 %v5160
      %v5162 = vand.u32 %v5102, 4294901760
      %5163 = vmatprep.subr.mxu0 %v5162
      %v5164 = vand.u32 %v5101, 4294901760
      %5165 = vmatpush1.msra.mxu0 %v5164
      %v5166 = vand.u32 %v5104, 4294901760
      %5167 = vmatprep.subr.mxu0 %v5166
      %v5168 = vand.u32 %v5103, 4294901760
      %5169 = vmatpush1.msra.mxu0 %v5168
      %v5170 = vand.u32 %v5106, 4294901760
      %5171 = vmatprep.subr.mxu0 %v5170
      %v5172 = vand.u32 %v5105, 4294901760
      %5173 = vmatpush1.msra.mxu0 %v5172
      %v5174 = vand.u32 %v5108, 4294901760
      %5175 = vmatprep.subr.mxu0 %v5174
      %v5176 = vand.u32 %v5107, 4294901760
      %5177 = vmatpush1.msra.mxu0 %v5176
      %v5178 = vand.u32 %v5110, 4294901760
      %5179 = vmatprep.subr.mxu0 %v5178
      %v5180 = vand.u32 %v5109, 4294901760
      %5181 = vmatpush1.msra.mxu0 %v5180
      %v5182 = vand.u32 %v5112, 4294901760
      %5183 = vmatprep.subr.mxu0 %v5182
      %v5184 = vand.u32 %v5111, 4294901760
      %5185 = vmatpush1.msra.mxu0 %v5184
      %v5186 = vand.u32 %v5114, 4294901760
      %5187 = vmatprep.subr.mxu0 %v5186
      %v5188 = vand.u32 %v5113, 4294901760
      %5189 = vmatpush1.msra.mxu0 %v5188
      %5190 = vmatprep.subr.mxu0 0.0
      %5191 = vmatpush1.msra.mxu0 0.0
      %5192 = vmatprep.subr.mxu0 0.0
      %5193 = vmatpush1.msra.mxu0 0.0
      %5194 = vmatprep.subr.mxu0 0.0
      %5195 = vmatpush1.msra.mxu0 0.0
      %5196 = vmatprep.subr.mxu0 0.0
      %5197 = vmatpush1.msra.mxu0 0.0
      %5198 = vmatprep.subr.mxu0 0.0
      %5199 = vmatpush1.msra.mxu0 0.0
      %5200 = vmatprep.subr.mxu0 0.0
      %5201 = vmatpush1.msra.mxu0 0.0
      %5202 = vmatprep.subr.mxu0 0.0
      %5203 = vmatpush1.msra.mxu0 0.0
      %5204 = vmatprep.subr.mxu0 0.0
      %5205 = vmatpush1.msra.mxu0 0.0
      %5206 = vmatprep.subr.mxu0 0.0
      %5207 = vmatpush1.msra.mxu0 0.0
      %5208 = vmatprep.subr.mxu0 0.0
      %5209 = vmatpush1.msra.mxu0 0.0
      %5210 = vmatprep.subr.mxu0 0.0
      %5211 = vmatpush1.msra.mxu0 0.0
      %5212 = vmatprep.subr.mxu0 0.0
      %5213 = vmatpush1.msra.mxu0 0.0
      %5214 = vmatprep.subr.mxu0 0.0
      %5215 = vmatpush1.msra.mxu0 0.0
      %5216 = vmatprep.subr.mxu0 0.0
      %5217 = vmatpush1.msra.mxu0 0.0
      %5218 = vmatprep.subr.mxu0 0.0
      %5219 = vmatpush1.msra.mxu0 0.0
      %5220 = vmatprep.subr.mxu0 0.0
      %5221 = vmatpush1.msra.mxu0 0.0
      %5222 = vmatprep.mubr.f32.mxu0 0.0
      %v5223 = vand.u32 %v5115, 4294901760
      %v5224 = vsub.f32 %v5115, %v5223
      %v5225 = vand.u32 %v5224, 4294901760
      %v5226 = vsub.f32 %v5224, %v5225
      %v5227 = vand.u32 %v5226, 4294901760
      %5228 = vmatmul.mubr.f32.gmra.mrb[0].mxu0 %v5227
      %v5229 = vpop.f32.mrb[0].mxu0
      %v5230 = vadd.f32 %v5125, %v5229
      %v5231 = vpop.f32.mrb[0].mxu0
      %v5232 = vadd.f32 %v5125, %v5231
      %5233 = vdwg.mxu0
      %v5234 = vand.u32 %v5084, 4294901760
      %v5235 = vsub.f32 %v5084, %v5234
      %v5236 = vand.u32 %v5235, 4294901760
      %v5237 = vsub.f32 %v5235, %v5236
      %v5238 = vand.u32 %v5237, 4294901760
      %5239 = vmatprep.subr.mxu0 %v5238
      %v5240 = vand.u32 %v5083, 4294901760
      %v5241 = vsub.f32 %v5083, %v5240
      %v5242 = vand.u32 %v5241, 4294901760
      %v5243 = vsub.f32 %v5241, %v5242
      %v5244 = vand.u32 %v5243, 4294901760
      %5245 = vmatpush1.msra.mxu0 %v5244
      %v5246 = vand.u32 %v5086, 4294901760
      %v5247 = vsub.f32 %v5086, %v5246
      %v5248 = vand.u32 %v5247, 4294901760
      %v5249 = vsub.f32 %v5247, %v5248
      %v5250 = vand.u32 %v5249, 4294901760
      %5251 = vmatprep.subr.mxu0 %v5250
      %v5252 = vand.u32 %v5085, 4294901760
      %v5253 = vsub.f32 %v5085, %v5252
      %v5254 = vand.u32 %v5253, 4294901760
      %v5255 = vsub.f32 %v5253, %v5254
      %v5256 = vand.u32 %v5255, 4294901760
      %5257 = vmatpush1.msra.mxu0 %v5256
      %v5258 = vand.u32 %v5088, 4294901760
      %v5259 = vsub.f32 %v5088, %v5258
      %v5260 = vand.u32 %v5259, 4294901760
      %v5261 = vsub.f32 %v5259, %v5260
      %v5262 = vand.u32 %v5261, 4294901760
      %5263 = vmatprep.subr.mxu0 %v5262
      %v5264 = vand.u32 %v5087, 4294901760
      %v5265 = vsub.f32 %v5087, %v5264
      %v5266 = vand.u32 %v5265, 4294901760
      %v5267 = vsub.f32 %v5265, %v5266
      %v5268 = vand.u32 %v5267, 4294901760
      %5269 = vmatpush1.msra.mxu0 %v5268
      %v5270 = vand.u32 %v5090, 4294901760
      %v5271 = vsub.f32 %v5090, %v5270
      %v5272 = vand.u32 %v5271, 4294901760
      %v5273 = vsub.f32 %v5271, %v5272
      %v5274 = vand.u32 %v5273, 4294901760
      %5275 = vmatprep.subr.mxu0 %v5274
      %v5276 = vand.u32 %v5089, 4294901760
      %v5277 = vsub.f32 %v5089, %v5276
      %v5278 = vand.u32 %v5277, 4294901760
      %v5279 = vsub.f32 %v5277, %v5278
      %v5280 = vand.u32 %v5279, 4294901760
      %5281 = vmatpush1.msra.mxu0 %v5280
      %v5282 = vand.u32 %v5092, 4294901760
      %v5283 = vsub.f32 %v5092, %v5282
      %v5284 = vand.u32 %v5283, 4294901760
      %v5285 = vsub.f32 %v5283, %v5284
      %v5286 = vand.u32 %v5285, 4294901760
      %5287 = vmatprep.subr.mxu0 %v5286
      %v5288 = vand.u32 %v5091, 4294901760
      %v5289 = vsub.f32 %v5091, %v5288
      %v5290 = vand.u32 %v5289, 4294901760
      %v5291 = vsub.f32 %v5289, %v5290
      %v5292 = vand.u32 %v5291, 4294901760
      %5293 = vmatpush1.msra.mxu0 %v5292
      %v5294 = vand.u32 %v5094, 4294901760
      %v5295 = vsub.f32 %v5094, %v5294
      %v5296 = vand.u32 %v5295, 4294901760
      %v5297 = vsub.f32 %v5295, %v5296
      %v5298 = vand.u32 %v5297, 4294901760
      %5299 = vmatprep.subr.mxu0 %v5298
      %v5300 = vand.u32 %v5093, 4294901760
      %v5301 = vsub.f32 %v5093, %v5300
      %v5302 = vand.u32 %v5301, 4294901760
      %v5303 = vsub.f32 %v5301, %v5302
      %v5304 = vand.u32 %v5303, 4294901760
      %5305 = vmatpush1.msra.mxu0 %v5304
      %v5306 = vand.u32 %v5096, 4294901760
      %v5307 = vsub.f32 %v5096, %v5306
      %v5308 = vand.u32 %v5307, 4294901760
      %v5309 = vsub.f32 %v5307, %v5308
      %v5310 = vand.u32 %v5309, 4294901760
      %5311 = vmatprep.subr.mxu0 %v5310
      %v5312 = vand.u32 %v5095, 4294901760
      %v5313 = vsub.f32 %v5095, %v5312
      %v5314 = vand.u32 %v5313, 4294901760
      %v5315 = vsub.f32 %v5313, %v5314
      %v5316 = vand.u32 %v5315, 4294901760
      %5317 = vmatpush1.msra.mxu0 %v5316
      %v5318 = vand.u32 %v5098, 4294901760
      %v5319 = vsub.f32 %v5098, %v5318
      %v5320 = vand.u32 %v5319, 4294901760
      %v5321 = vsub.f32 %v5319, %v5320
      %v5322 = vand.u32 %v5321, 4294901760
      %5323 = vmatprep.subr.mxu0 %v5322
      %v5324 = vand.u32 %v5097, 4294901760
      %v5325 = vsub.f32 %v5097, %v5324
      %v5326 = vand.u32 %v5325, 4294901760
      %v5327 = vsub.f32 %v5325, %v5326
      %v5328 = vand.u32 %v5327, 4294901760
      %5329 = vmatpush1.msra.mxu0 %v5328
      %v5330 = vand.u32 %v5100, 4294901760
      %v5331 = vsub.f32 %v5100, %v5330
      %v5332 = vand.u32 %v5331, 4294901760
      %v5333 = vsub.f32 %v5331, %v5332
      %v5334 = vand.u32 %v5333, 4294901760
      %5335 = vmatprep.subr.mxu0 %v5334
      %v5336 = vand.u32 %v5099, 4294901760
      %v5337 = vsub.f32 %v5099, %v5336
      %v5338 = vand.u32 %v5337, 4294901760
      %v5339 = vsub.f32 %v5337, %v5338
      %v5340 = vand.u32 %v5339, 4294901760
      %5341 = vmatpush1.msra.mxu0 %v5340
      %v5342 = vand.u32 %v5102, 4294901760
      %v5343 = vsub.f32 %v5102, %v5342
      %v5344 = vand.u32 %v5343, 4294901760
      %v5345 = vsub.f32 %v5343, %v5344
      %v5346 = vand.u32 %v5345, 4294901760
      %5347 = vmatprep.subr.mxu0 %v5346
      %v5348 = vand.u32 %v5101, 4294901760
      %v5349 = vsub.f32 %v5101, %v5348
      %v5350 = vand.u32 %v5349, 4294901760
      %v5351 = vsub.f32 %v5349, %v5350
      %v5352 = vand.u32 %v5351, 4294901760
      %5353 = vmatpush1.msra.mxu0 %v5352
      %v5354 = vand.u32 %v5104, 4294901760
      %v5355 = vsub.f32 %v5104, %v5354
      %v5356 = vand.u32 %v5355, 4294901760
      %v5357 = vsub.f32 %v5355, %v5356
      %v5358 = vand.u32 %v5357, 4294901760
      %5359 = vmatprep.subr.mxu0 %v5358
      %v5360 = vand.u32 %v5103, 4294901760
      %v5361 = vsub.f32 %v5103, %v5360
      %v5362 = vand.u32 %v5361, 4294901760
      %v5363 = vsub.f32 %v5361, %v5362
      %v5364 = vand.u32 %v5363, 4294901760
      %5365 = vmatpush1.msra.mxu0 %v5364
      %v5366 = vand.u32 %v5106, 4294901760
      %v5367 = vsub.f32 %v5106, %v5366
      %v5368 = vand.u32 %v5367, 4294901760
      %v5369 = vsub.f32 %v5367, %v5368
      %v5370 = vand.u32 %v5369, 4294901760
      %5371 = vmatprep.subr.mxu0 %v5370
      %v5372 = vand.u32 %v5105, 4294901760
      %v5373 = vsub.f32 %v5105, %v5372
      %v5374 = vand.u32 %v5373, 4294901760
      %v5375 = vsub.f32 %v5373, %v5374
      %v5376 = vand.u32 %v5375, 4294901760
      %5377 = vmatpush1.msra.mxu0 %v5376
      %v5378 = vand.u32 %v5108, 4294901760
      %v5379 = vsub.f32 %v5108, %v5378
      %v5380 = vand.u32 %v5379, 4294901760
      %v5381 = vsub.f32 %v5379, %v5380
      %v5382 = vand.u32 %v5381, 4294901760
      %5383 = vmatprep.subr.mxu0 %v5382
      %v5384 = vand.u32 %v5107, 4294901760
      %v5385 = vsub.f32 %v5107, %v5384
      %v5386 = vand.u32 %v5385, 4294901760
      %v5387 = vsub.f32 %v5385, %v5386
      %v5388 = vand.u32 %v5387, 4294901760
      %5389 = vmatpush1.msra.mxu0 %v5388
      %v5390 = vand.u32 %v5110, 4294901760
      %v5391 = vsub.f32 %v5110, %v5390
      %v5392 = vand.u32 %v5391, 4294901760
      %v5393 = vsub.f32 %v5391, %v5392
      %v5394 = vand.u32 %v5393, 4294901760
      %5395 = vmatprep.subr.mxu0 %v5394
      %v5396 = vand.u32 %v5109, 4294901760
      %v5397 = vsub.f32 %v5109, %v5396
      %v5398 = vand.u32 %v5397, 4294901760
      %v5399 = vsub.f32 %v5397, %v5398
      %v5400 = vand.u32 %v5399, 4294901760
      %5401 = vmatpush1.msra.mxu0 %v5400
      %v5402 = vand.u32 %v5112, 4294901760
      %v5403 = vsub.f32 %v5112, %v5402
      %v5404 = vand.u32 %v5403, 4294901760
      %v5405 = vsub.f32 %v5403, %v5404
      %v5406 = vand.u32 %v5405, 4294901760
      %5407 = vmatprep.subr.mxu0 %v5406
      %v5408 = vand.u32 %v5111, 4294901760
      %v5409 = vsub.f32 %v5111, %v5408
      %v5410 = vand.u32 %v5409, 4294901760
      %v5411 = vsub.f32 %v5409, %v5410
      %v5412 = vand.u32 %v5411, 4294901760
      %5413 = vmatpush1.msra.mxu0 %v5412
      %v5414 = vand.u32 %v5114, 4294901760
      %v5415 = vsub.f32 %v5114, %v5414
      %v5416 = vand.u32 %v5415, 4294901760
      %v5417 = vsub.f32 %v5415, %v5416
      %v5418 = vand.u32 %v5417, 4294901760
      %5419 = vmatprep.subr.mxu0 %v5418
      %v5420 = vand.u32 %v5113, 4294901760
      %v5421 = vsub.f32 %v5113, %v5420
      %v5422 = vand.u32 %v5421, 4294901760
      %v5423 = vsub.f32 %v5421, %v5422
      %v5424 = vand.u32 %v5423, 4294901760
      %5425 = vmatpush1.msra.mxu0 %v5424
      %5426 = vmatprep.subr.mxu0 0.0
      %5427 = vmatpush1.msra.mxu0 0.0
      %5428 = vmatprep.subr.mxu0 0.0
      %5429 = vmatpush1.msra.mxu0 0.0
      %5430 = vmatprep.subr.mxu0 0.0
      %5431 = vmatpush1.msra.mxu0 0.0
      %5432 = vmatprep.subr.mxu0 0.0
      %5433 = vmatpush1.msra.mxu0 0.0
      %5434 = vmatprep.subr.mxu0 0.0
      %5435 = vmatpush1.msra.mxu0 0.0
      %5436 = vmatprep.subr.mxu0 0.0
      %5437 = vmatpush1.msra.mxu0 0.0
      %5438 = vmatprep.subr.mxu0 0.0
      %5439 = vmatpush1.msra.mxu0 0.0
      %5440 = vmatprep.subr.mxu0 0.0
      %5441 = vmatpush1.msra.mxu0 0.0
      %5442 = vmatprep.subr.mxu0 0.0
      %5443 = vmatpush1.msra.mxu0 0.0
      %5444 = vmatprep.subr.mxu0 0.0
      %5445 = vmatpush1.msra.mxu0 0.0
      %5446 = vmatprep.subr.mxu0 0.0
      %5447 = vmatpush1.msra.mxu0 0.0
      %5448 = vmatprep.subr.mxu0 0.0
      %5449 = vmatpush1.msra.mxu0 0.0
      %5450 = vmatprep.subr.mxu0 0.0
      %5451 = vmatpush1.msra.mxu0 0.0
      %5452 = vmatprep.subr.mxu0 0.0
      %5453 = vmatpush1.msra.mxu0 0.0
      %5454 = vmatprep.subr.mxu0 0.0
      %5455 = vmatpush1.msra.mxu0 0.0
      %5456 = vmatprep.subr.mxu0 0.0
      %5457 = vmatpush1.msra.mxu0 0.0
      %5458 = vmatprep.mubr.f32.mxu0 0.0
      %v5459 = vand.u32 %v5115, 4294901760
      %5460 = vmatmul.mubr.f32.gmra.mrb[0].mxu0 %v5459
      %v5461 = vpop.f32.mrb[0].mxu0
      %v5462 = vadd.f32 %v5230, %v5461
      %v5463 = vpop.f32.mrb[0].mxu0
      %v5464 = vadd.f32 %v5232, %v5463
      %5465 = vdwg.mxu0
      %v5466 = vand.u32 %v5084, 4294901760
      %v5467 = vsub.f32 %v5084, %v5466
      %5468 = vmatprep.subr.mxu0 %v5467
      %v5469 = vand.u32 %v5083, 4294901760
      %v5470 = vsub.f32 %v5083, %v5469
      %5471 = vmatpush1.msra.mxu0 %v5470
      %v5472 = vand.u32 %v5086, 4294901760
      %v5473 = vsub.f32 %v5086, %v5472
      %5474 = vmatprep.subr.mxu0 %v5473
      %v5475 = vand.u32 %v5085, 4294901760
      %v5476 = vsub.f32 %v5085, %v5475
      %5477 = vmatpush1.msra.mxu0 %v5476
      %v5478 = vand.u32 %v5088, 4294901760
      %v5479 = vsub.f32 %v5088, %v5478
      %5480 = vmatprep.subr.mxu0 %v5479
      %v5481 = vand.u32 %v5087, 4294901760
      %v5482 = vsub.f32 %v5087, %v5481
      %5483 = vmatpush1.msra.mxu0 %v5482
      %v5484 = vand.u32 %v5090, 4294901760
      %v5485 = vsub.f32 %v5090, %v5484
      %5486 = vmatprep.subr.mxu0 %v5485
      %v5487 = vand.u32 %v5089, 4294901760
      %v5488 = vsub.f32 %v5089, %v5487
      %5489 = vmatpush1.msra.mxu0 %v5488
      %v5490 = vand.u32 %v5092, 4294901760
      %v5491 = vsub.f32 %v5092, %v5490
      %5492 = vmatprep.subr.mxu0 %v5491
      %v5493 = vand.u32 %v5091, 4294901760
      %v5494 = vsub.f32 %v5091, %v5493
      %5495 = vmatpush1.msra.mxu0 %v5494
      %v5496 = vand.u32 %v5094, 4294901760
      %v5497 = vsub.f32 %v5094, %v5496
      %5498 = vmatprep.subr.mxu0 %v5497
      %v5499 = vand.u32 %v5093, 4294901760
      %v5500 = vsub.f32 %v5093, %v5499
      %5501 = vmatpush1.msra.mxu0 %v5500
      %v5502 = vand.u32 %v5096, 4294901760
      %v5503 = vsub.f32 %v5096, %v5502
      %5504 = vmatprep.subr.mxu0 %v5503
      %v5505 = vand.u32 %v5095, 4294901760
      %v5506 = vsub.f32 %v5095, %v5505
      %5507 = vmatpush1.msra.mxu0 %v5506
      %v5508 = vand.u32 %v5098, 4294901760
      %v5509 = vsub.f32 %v5098, %v5508
      %5510 = vmatprep.subr.mxu0 %v5509
      %v5511 = vand.u32 %v5097, 4294901760
      %v5512 = vsub.f32 %v5097, %v5511
      %5513 = vmatpush1.msra.mxu0 %v5512
      %v5514 = vand.u32 %v5100, 4294901760
      %v5515 = vsub.f32 %v5100, %v5514
      %5516 = vmatprep.subr.mxu0 %v5515
      %v5517 = vand.u32 %v5099, 4294901760
      %v5518 = vsub.f32 %v5099, %v5517
      %5519 = vmatpush1.msra.mxu0 %v5518
      %v5520 = vand.u32 %v5102, 4294901760
      %v5521 = vsub.f32 %v5102, %v5520
      %5522 = vmatprep.subr.mxu0 %v5521
      %v5523 = vand.u32 %v5101, 4294901760
      %v5524 = vsub.f32 %v5101, %v5523
      %5525 = vmatpush1.msra.mxu0 %v5524
      %v5526 = vand.u32 %v5104, 4294901760
      %v5527 = vsub.f32 %v5104, %v5526
      %5528 = vmatprep.subr.mxu0 %v5527
      %v5529 = vand.u32 %v5103, 4294901760
      %v5530 = vsub.f32 %v5103, %v5529
      %5531 = vmatpush1.msra.mxu0 %v5530
      %v5532 = vand.u32 %v5106, 4294901760
      %v5533 = vsub.f32 %v5106, %v5532
      %5534 = vmatprep.subr.mxu0 %v5533
      %v5535 = vand.u32 %v5105, 4294901760
      %v5536 = vsub.f32 %v5105, %v5535
      %5537 = vmatpush1.msra.mxu0 %v5536
      %v5538 = vand.u32 %v5108, 4294901760
      %v5539 = vsub.f32 %v5108, %v5538
      %5540 = vmatprep.subr.mxu0 %v5539
      %v5541 = vand.u32 %v5107, 4294901760
      %v5542 = vsub.f32 %v5107, %v5541
      %5543 = vmatpush1.msra.mxu0 %v5542
      %v5544 = vand.u32 %v5110, 4294901760
      %v5545 = vsub.f32 %v5110, %v5544
      %5546 = vmatprep.subr.mxu0 %v5545
      %v5547 = vand.u32 %v5109, 4294901760
      %v5548 = vsub.f32 %v5109, %v5547
      %5549 = vmatpush1.msra.mxu0 %v5548
      %v5550 = vand.u32 %v5112, 4294901760
      %v5551 = vsub.f32 %v5112, %v5550
      %5552 = vmatprep.subr.mxu0 %v5551
      %v5553 = vand.u32 %v5111, 4294901760
      %v5554 = vsub.f32 %v5111, %v5553
      %5555 = vmatpush1.msra.mxu0 %v5554
      %v5556 = vand.u32 %v5114, 4294901760
      %v5557 = vsub.f32 %v5114, %v5556
      %5558 = vmatprep.subr.mxu0 %v5557
      %v5559 = vand.u32 %v5113, 4294901760
      %v5560 = vsub.f32 %v5113, %v5559
      %5561 = vmatpush1.msra.mxu0 %v5560
      %5562 = vmatprep.subr.mxu0 0.0
      %5563 = vmatpush1.msra.mxu0 0.0
      %5564 = vmatprep.subr.mxu0 0.0
      %5565 = vmatpush1.msra.mxu0 0.0
      %5566 = vmatprep.subr.mxu0 0.0
      %5567 = vmatpush1.msra.mxu0 0.0
      %5568 = vmatprep.subr.mxu0 0.0
      %5569 = vmatpush1.msra.mxu0 0.0
      %5570 = vmatprep.subr.mxu0 0.0
      %5571 = vmatpush1.msra.mxu0 0.0
      %5572 = vmatprep.subr.mxu0 0.0
      %5573 = vmatpush1.msra.mxu0 0.0
      %5574 = vmatprep.subr.mxu0 0.0
      %5575 = vmatpush1.msra.mxu0 0.0
      %5576 = vmatprep.subr.mxu0 0.0
      %5577 = vmatpush1.msra.mxu0 0.0
      %5578 = vmatprep.subr.mxu0 0.0
      %5579 = vmatpush1.msra.mxu0 0.0
      %5580 = vmatprep.subr.mxu0 0.0
      %5581 = vmatpush1.msra.mxu0 0.0
      %5582 = vmatprep.subr.mxu0 0.0
      %5583 = vmatpush1.msra.mxu0 0.0
      %5584 = vmatprep.subr.mxu0 0.0
      %5585 = vmatpush1.msra.mxu0 0.0
      %5586 = vmatprep.subr.mxu0 0.0
      %5587 = vmatpush1.msra.mxu0 0.0
      %5588 = vmatprep.subr.mxu0 0.0
      %5589 = vmatpush1.msra.mxu0 0.0
      %5590 = vmatprep.subr.mxu0 0.0
      %5591 = vmatpush1.msra.mxu0 0.0
      %5592 = vmatprep.subr.mxu0 0.0
      %5593 = vmatpush1.msra.mxu0 0.0
      %5594 = vmatprep.mubr.f32.mxu0 0.0
      %v5595 = vand.u32 %v5115, 4294901760
      %v5596 = vsub.f32 %v5115, %v5595
      %5597 = vmatmul.mubr.f32.gmra.mrb[0].mxu0 %v5596
      %v5598 = vpop.f32.mrb[0].mxu0
      %v5599 = vadd.f32 %v5462, %v5598
      %v5600 = vpop.f32.mrb[0].mxu0
      %v5601 = vadd.f32 %v5464, %v5600
      %5602 = vdwg.mxu0
      %v5603 = vand.u32 %v5084, 4294901760
      %5604 = vmatprep.subr.mxu0 %v5603
      %v5605 = vand.u32 %v5083, 4294901760
      %5606 = vmatpush1.msra.mxu0 %v5605
      %v5607 = vand.u32 %v5086, 4294901760
      %5608 = vmatprep.subr.mxu0 %v5607
      %v5609 = vand.u32 %v5085, 4294901760
      %5610 = vmatpush1.msra.mxu0 %v5609
      %v5611 = vand.u32 %v5088, 4294901760
      %5612 = vmatprep.subr.mxu0 %v5611
      %v5613 = vand.u32 %v5087, 4294901760
      %5614 = vmatpush1.msra.mxu0 %v5613
      %v5615 = vand.u32 %v5090, 4294901760
      %5616 = vmatprep.subr.mxu0 %v5615
      %v5617 = vand.u32 %v5089, 4294901760
      %5618 = vmatpush1.msra.mxu0 %v5617
      %v5619 = vand.u32 %v5092, 4294901760
      %5620 = vmatprep.subr.mxu0 %v5619
      %v5621 = vand.u32 %v5091, 4294901760
      %5622 = vmatpush1.msra.mxu0 %v5621
      %v5623 = vand.u32 %v5094, 4294901760
      %5624 = vmatprep.subr.mxu0 %v5623
      %v5625 = vand.u32 %v5093, 4294901760
      %5626 = vmatpush1.msra.mxu0 %v5625
      %v5627 = vand.u32 %v5096, 4294901760
      %5628 = vmatprep.subr.mxu0 %v5627
      %v5629 = vand.u32 %v5095, 4294901760
      %5630 = vmatpush1.msra.mxu0 %v5629
      %v5631 = vand.u32 %v5098, 4294901760
      %5632 = vmatprep.subr.mxu0 %v5631
      %v5633 = vand.u32 %v5097, 4294901760
      %5634 = vmatpush1.msra.mxu0 %v5633
      %v5635 = vand.u32 %v5100, 4294901760
      %5636 = vmatprep.subr.mxu0 %v5635
      %v5637 = vand.u32 %v5099, 4294901760
      %5638 = vmatpush1.msra.mxu0 %v5637
      %v5639 = vand.u32 %v5102, 4294901760
      %5640 = vmatprep.subr.mxu0 %v5639
      %v5641 = vand.u32 %v5101, 4294901760
      %5642 = vmatpush1.msra.mxu0 %v5641
      %v5643 = vand.u32 %v5104, 4294901760
      %5644 = vmatprep.subr.mxu0 %v5643
      %v5645 = vand.u32 %v5103, 4294901760
      %5646 = vmatpush1.msra.mxu0 %v5645
      %v5647 = vand.u32 %v5106, 4294901760
      %5648 = vmatprep.subr.mxu0 %v5647
      %v5649 = vand.u32 %v5105, 4294901760
      %5650 = vmatpush1.msra.mxu0 %v5649
      %v5651 = vand.u32 %v5108, 4294901760
      %5652 = vmatprep.subr.mxu0 %v5651
      %v5653 = vand.u32 %v5107, 4294901760
      %5654 = vmatpush1.msra.mxu0 %v5653
      %v5655 = vand.u32 %v5110, 4294901760
      %5656 = vmatprep.subr.mxu0 %v5655
      %v5657 = vand.u32 %v5109, 4294901760
      %5658 = vmatpush1.msra.mxu0 %v5657
      %v5659 = vand.u32 %v5112, 4294901760
      %5660 = vmatprep.subr.mxu0 %v5659
      %v5661 = vand.u32 %v5111, 4294901760
      %5662 = vmatpush1.msra.mxu0 %v5661
      %v5663 = vand.u32 %v5114, 4294901760
      %5664 = vmatprep.subr.mxu0 %v5663
      %v5665 = vand.u32 %v5113, 4294901760
      %5666 = vmatpush1.msra.mxu0 %v5665
      %5667 = vmatprep.subr.mxu0 0.0
      %5668 = vmatpush1.msra.mxu0 0.0
      %5669 = vmatprep.subr.mxu0 0.0
      %5670 = vmatpush1.msra.mxu0 0.0
      %5671 = vmatprep.subr.mxu0 0.0
      %5672 = vmatpush1.msra.mxu0 0.0
      %5673 = vmatprep.subr.mxu0 0.0
      %5674 = vmatpush1.msra.mxu0 0.0
      %5675 = vmatprep.subr.mxu0 0.0
      %5676 = vmatpush1.msra.mxu0 0.0
      %5677 = vmatprep.subr.mxu0 0.0
      %5678 = vmatpush1.msra.mxu0 0.0
      %5679 = vmatprep.subr.mxu0 0.0
      %5680 = vmatpush1.msra.mxu0 0.0
      %5681 = vmatprep.subr.mxu0 0.0
      %5682 = vmatpush1.msra.mxu0 0.0
      %5683 = vmatprep.subr.mxu0 0.0
      %5684 = vmatpush1.msra.mxu0 0.0
      %5685 = vmatprep.subr.mxu0 0.0
      %5686 = vmatpush1.msra.mxu0 0.0
      %5687 = vmatprep.subr.mxu0 0.0
      %5688 = vmatpush1.msra.mxu0 0.0
      %5689 = vmatprep.subr.mxu0 0.0
      %5690 = vmatpush1.msra.mxu0 0.0
      %5691 = vmatprep.subr.mxu0 0.0
      %5692 = vmatpush1.msra.mxu0 0.0
      %5693 = vmatprep.subr.mxu0 0.0
      %5694 = vmatpush1.msra.mxu0 0.0
      %5695 = vmatprep.subr.mxu0 0.0
      %5696 = vmatpush1.msra.mxu0 0.0
      %5697 = vmatprep.subr.mxu0 0.0
      %5698 = vmatpush1.msra.mxu0 0.0
      %5699 = vmatprep.mubr.f32.mxu0 0.0
      %v5700 = vand.u32 %v5115, 4294901760
      %v5701 = vsub.f32 %v5115, %v5700
      %v5702 = vand.u32 %v5701, 4294901760
      %5703 = vmatmul.mubr.f32.gmra.mrb[0].mxu0 %v5702
      %v5704 = vpop.f32.mrb[0].mxu0
      %v5705 = vadd.f32 %v5599, %v5704
      %v5706 = vpop.f32.mrb[0].mxu0
      %v5707 = vadd.f32 %v5601, %v5706
      %5708 = vdwg.mxu0
      %v5709 = vand.u32 %v5084, 4294901760
      %v5710 = vsub.f32 %v5084, %v5709
      %v5711 = vand.u32 %v5710, 4294901760
      %5712 = vmatprep.subr.mxu0 %v5711
      %v5713 = vand.u32 %v5083, 4294901760
      %v5714 = vsub.f32 %v5083, %v5713
      %v5715 = vand.u32 %v5714, 4294901760
      %5716 = vmatpush1.msra.mxu0 %v5715
      %v5717 = vand.u32 %v5086, 4294901760
      %v5718 = vsub.f32 %v5086, %v5717
      %v5719 = vand.u32 %v5718, 4294901760
      %5720 = vmatprep.subr.mxu0 %v5719
      %v5721 = vand.u32 %v5085, 4294901760
      %v5722 = vsub.f32 %v5085, %v5721
      %v5723 = vand.u32 %v5722, 4294901760
      %5724 = vmatpush1.msra.mxu0 %v5723
      %v5725 = vand.u32 %v5088, 4294901760
      %v5726 = vsub.f32 %v5088, %v5725
      %v5727 = vand.u32 %v5726, 4294901760
      %5728 = vmatprep.subr.mxu0 %v5727
      %v5729 = vand.u32 %v5087, 4294901760
      %v5730 = vsub.f32 %v5087, %v5729
      %v5731 = vand.u32 %v5730, 4294901760
      %5732 = vmatpush1.msra.mxu0 %v5731
      %v5733 = vand.u32 %v5090, 4294901760
      %v5734 = vsub.f32 %v5090, %v5733
      %v5735 = vand.u32 %v5734, 4294901760
      %5736 = vmatprep.subr.mxu0 %v5735
      %v5737 = vand.u32 %v5089, 4294901760
      %v5738 = vsub.f32 %v5089, %v5737
      %v5739 = vand.u32 %v5738, 4294901760
      %5740 = vmatpush1.msra.mxu0 %v5739
      %v5741 = vand.u32 %v5092, 4294901760
      %v5742 = vsub.f32 %v5092, %v5741
      %v5743 = vand.u32 %v5742, 4294901760
      %5744 = vmatprep.subr.mxu0 %v5743
      %v5745 = vand.u32 %v5091, 4294901760
      %v5746 = vsub.f32 %v5091, %v5745
      %v5747 = vand.u32 %v5746, 4294901760
      %5748 = vmatpush1.msra.mxu0 %v5747
      %v5749 = vand.u32 %v5094, 4294901760
      %v5750 = vsub.f32 %v5094, %v5749
      %v5751 = vand.u32 %v5750, 4294901760
      %5752 = vmatprep.subr.mxu0 %v5751
      %v5753 = vand.u32 %v5093, 4294901760
      %v5754 = vsub.f32 %v5093, %v5753
      %v5755 = vand.u32 %v5754, 4294901760
      %5756 = vmatpush1.msra.mxu0 %v5755
      %v5757 = vand.u32 %v5096, 4294901760
      %v5758 = vsub.f32 %v5096, %v5757
      %v5759 = vand.u32 %v5758, 4294901760
      %5760 = vmatprep.subr.mxu0 %v5759
      %v5761 = vand.u32 %v5095, 4294901760
      %v5762 = vsub.f32 %v5095, %v5761
      %v5763 = vand.u32 %v5762, 4294901760
      %5764 = vmatpush1.msra.mxu0 %v5763
      %v5765 = vand.u32 %v5098, 4294901760
      %v5766 = vsub.f32 %v5098, %v5765
      %v5767 = vand.u32 %v5766, 4294901760
      %5768 = vmatprep.subr.mxu0 %v5767
      %v5769 = vand.u32 %v5097, 4294901760
      %v5770 = vsub.f32 %v5097, %v5769
      %v5771 = vand.u32 %v5770, 4294901760
      %5772 = vmatpush1.msra.mxu0 %v5771
      %v5773 = vand.u32 %v5100, 4294901760
      %v5774 = vsub.f32 %v5100, %v5773
      %v5775 = vand.u32 %v5774, 4294901760
      %5776 = vmatprep.subr.mxu0 %v5775
      %v5777 = vand.u32 %v5099, 4294901760
      %v5778 = vsub.f32 %v5099, %v5777
      %v5779 = vand.u32 %v5778, 4294901760
      %5780 = vmatpush1.msra.mxu0 %v5779
      %v5781 = vand.u32 %v5102, 4294901760
      %v5782 = vsub.f32 %v5102, %v5781
      %v5783 = vand.u32 %v5782, 4294901760
      %5784 = vmatprep.subr.mxu0 %v5783
      %v5785 = vand.u32 %v5101, 4294901760
      %v5786 = vsub.f32 %v5101, %v5785
      %v5787 = vand.u32 %v5786, 4294901760
      %5788 = vmatpush1.msra.mxu0 %v5787
      %v5789 = vand.u32 %v5104, 4294901760
      %v5790 = vsub.f32 %v5104, %v5789
      %v5791 = vand.u32 %v5790, 4294901760
      %5792 = vmatprep.subr.mxu0 %v5791
      %v5793 = vand.u32 %v5103, 4294901760
      %v5794 = vsub.f32 %v5103, %v5793
      %v5795 = vand.u32 %v5794, 4294901760
      %5796 = vmatpush1.msra.mxu0 %v5795
      %v5797 = vand.u32 %v5106, 4294901760
      %v5798 = vsub.f32 %v5106, %v5797
      %v5799 = vand.u32 %v5798, 4294901760
      %5800 = vmatprep.subr.mxu0 %v5799
      %v5801 = vand.u32 %v5105, 4294901760
      %v5802 = vsub.f32 %v5105, %v5801
      %v5803 = vand.u32 %v5802, 4294901760
      %5804 = vmatpush1.msra.mxu0 %v5803
      %v5805 = vand.u32 %v5108, 4294901760
      %v5806 = vsub.f32 %v5108, %v5805
      %v5807 = vand.u32 %v5806, 4294901760
      %5808 = vmatprep.subr.mxu0 %v5807
      %v5809 = vand.u32 %v5107, 4294901760
      %v5810 = vsub.f32 %v5107, %v5809
      %v5811 = vand.u32 %v5810, 4294901760
      %5812 = vmatpush1.msra.mxu0 %v5811
      %v5813 = vand.u32 %v5110, 4294901760
      %v5814 = vsub.f32 %v5110, %v5813
      %v5815 = vand.u32 %v5814, 4294901760
      %5816 = vmatprep.subr.mxu0 %v5815
      %v5817 = vand.u32 %v5109, 4294901760
      %v5818 = vsub.f32 %v5109, %v5817
      %v5819 = vand.u32 %v5818, 4294901760
      %5820 = vmatpush1.msra.mxu0 %v5819
      %v5821 = vand.u32 %v5112, 4294901760
      %v5822 = vsub.f32 %v5112, %v5821
      %v5823 = vand.u32 %v5822, 4294901760
      %5824 = vmatprep.subr.mxu0 %v5823
      %v5825 = vand.u32 %v5111, 4294901760
      %v5826 = vsub.f32 %v5111, %v5825
      %v5827 = vand.u32 %v5826, 4294901760
      %5828 = vmatpush1.msra.mxu0 %v5827
      %v5829 = vand.u32 %v5114, 4294901760
      %v5830 = vsub.f32 %v5114, %v5829
      %v5831 = vand.u32 %v5830, 4294901760
      %5832 = vmatprep.subr.mxu0 %v5831
      %v5833 = vand.u32 %v5113, 4294901760
      %v5834 = vsub.f32 %v5113, %v5833
      %v5835 = vand.u32 %v5834, 4294901760
      %5836 = vmatpush1.msra.mxu0 %v5835
      %5837 = vmatprep.subr.mxu0 0.0
      %5838 = vmatpush1.msra.mxu0 0.0
      %5839 = vmatprep.subr.mxu0 0.0
      %5840 = vmatpush1.msra.mxu0 0.0
      %5841 = vmatprep.subr.mxu0 0.0
      %5842 = vmatpush1.msra.mxu0 0.0
      %5843 = vmatprep.subr.mxu0 0.0
      %5844 = vmatpush1.msra.mxu0 0.0
      %5845 = vmatprep.subr.mxu0 0.0
      %5846 = vmatpush1.msra.mxu0 0.0
      %5847 = vmatprep.subr.mxu0 0.0
      %5848 = vmatpush1.msra.mxu0 0.0
      %5849 = vmatprep.subr.mxu0 0.0
      %5850 = vmatpush1.msra.mxu0 0.0
      %5851 = vmatprep.subr.mxu0 0.0
      %5852 = vmatpush1.msra.mxu0 0.0
      %5853 = vmatprep.subr.mxu0 0.0
      %5854 = vmatpush1.msra.mxu0 0.0
      %5855 = vmatprep.subr.mxu0 0.0
      %5856 = vmatpush1.msra.mxu0 0.0
      %5857 = vmatprep.subr.mxu0 0.0
      %5858 = vmatpush1.msra.mxu0 0.0
      %5859 = vmatprep.subr.mxu0 0.0
      %5860 = vmatpush1.msra.mxu0 0.0
      %5861 = vmatprep.subr.mxu0 0.0
      %5862 = vmatpush1.msra.mxu0 0.0
      %5863 = vmatprep.subr.mxu0 0.0
      %5864 = vmatpush1.msra.mxu0 0.0
      %5865 = vmatprep.subr.mxu0 0.0
      %5866 = vmatpush1.msra.mxu0 0.0
      %5867 = vmatprep.subr.mxu0 0.0
      %5868 = vmatpush1.msra.mxu0 0.0
      %5869 = vmatprep.mubr.f32.mxu0 0.0
      %v5870 = vand.u32 %v5115, 4294901760
      %5871 = vmatmul.mubr.f32.gmra.mrb[0].mxu0 %v5870
      %v5872 = vpop.f32.mrb[0].mxu0
      %v5873 = vadd.f32 %v5705, %v5872
      %v5874 = vpop.f32.mrb[0].mxu0
      %v5875 = vadd.f32 %v5707, %v5874
      %5876 = vdwg.mxu0
      %v5877 = vand.u32 %v5084, 4294901760
      %5878 = vmatprep.subr.mxu0 %v5877
      %v5879 = vand.u32 %v5083, 4294901760
      %5880 = vmatpush1.msra.mxu0 %v5879
      %v5881 = vand.u32 %v5086, 4294901760
      %5882 = vmatprep.subr.mxu0 %v5881
      %v5883 = vand.u32 %v5085, 4294901760
      %5884 = vmatpush1.msra.mxu0 %v5883
      %v5885 = vand.u32 %v5088, 4294901760
      %5886 = vmatprep.subr.mxu0 %v5885
      %v5887 = vand.u32 %v5087, 4294901760
      %5888 = vmatpush1.msra.mxu0 %v5887
      %v5889 = vand.u32 %v5090, 4294901760
      %5890 = vmatprep.subr.mxu0 %v5889
      %v5891 = vand.u32 %v5089, 4294901760
      %5892 = vmatpush1.msra.mxu0 %v5891
      %v5893 = vand.u32 %v5092, 4294901760
      %5894 = vmatprep.subr.mxu0 %v5893
      %v5895 = vand.u32 %v5091, 4294901760
      %5896 = vmatpush1.msra.mxu0 %v5895
      %v5897 = vand.u32 %v5094, 4294901760
      %5898 = vmatprep.subr.mxu0 %v5897
      %v5899 = vand.u32 %v5093, 4294901760
      %5900 = vmatpush1.msra.mxu0 %v5899
      %v5901 = vand.u32 %v5096, 4294901760
      %5902 = vmatprep.subr.mxu0 %v5901
      %v5903 = vand.u32 %v5095, 4294901760
      %5904 = vmatpush1.msra.mxu0 %v5903
      %v5905 = vand.u32 %v5098, 4294901760
      %5906 = vmatprep.subr.mxu0 %v5905
      %v5907 = vand.u32 %v5097, 4294901760
      %5908 = vmatpush1.msra.mxu0 %v5907
      %v5909 = vand.u32 %v5100, 4294901760
      %5910 = vmatprep.subr.mxu0 %v5909
      %v5911 = vand.u32 %v5099, 4294901760
      %5912 = vmatpush1.msra.mxu0 %v5911
      %v5913 = vand.u32 %v5102, 4294901760
      %5914 = vmatprep.subr.mxu0 %v5913
      %v5915 = vand.u32 %v5101, 4294901760
      %5916 = vmatpush1.msra.mxu0 %v5915
      %v5917 = vand.u32 %v5104, 4294901760
      %5918 = vmatprep.subr.mxu0 %v5917
      %v5919 = vand.u32 %v5103, 4294901760
      %5920 = vmatpush1.msra.mxu0 %v5919
      %v5921 = vand.u32 %v5106, 4294901760
      %5922 = vmatprep.subr.mxu0 %v5921
      %v5923 = vand.u32 %v5105, 4294901760
      %5924 = vmatpush1.msra.mxu0 %v5923
      %v5925 = vand.u32 %v5108, 4294901760
      %5926 = vmatprep.subr.mxu0 %v5925
      %v5927 = vand.u32 %v5107, 4294901760
      %5928 = vmatpush1.msra.mxu0 %v5927
      %v5929 = vand.u32 %v5110, 4294901760
      %5930 = vmatprep.subr.mxu0 %v5929
      %v5931 = vand.u32 %v5109, 4294901760
      %5932 = vmatpush1.msra.mxu0 %v5931
      %v5933 = vand.u32 %v5112, 4294901760
      %5934 = vmatprep.subr.mxu0 %v5933
      %v5935 = vand.u32 %v5111, 4294901760
      %5936 = vmatpush1.msra.mxu0 %v5935
      %v5937 = vand.u32 %v5114, 4294901760
      %5938 = vmatprep.subr.mxu0 %v5937
      %v5939 = vand.u32 %v5113, 4294901760
      %5940 = vmatpush1.msra.mxu0 %v5939
      %5941 = vmatprep.subr.mxu0 0.0
      %5942 = vmatpush1.msra.mxu0 0.0
      %5943 = vmatprep.subr.mxu0 0.0
      %5944 = vmatpush1.msra.mxu0 0.0
      %5945 = vmatprep.subr.mxu0 0.0
      %5946 = vmatpush1.msra.mxu0 0.0
      %5947 = vmatprep.subr.mxu0 0.0
      %5948 = vmatpush1.msra.mxu0 0.0
      %5949 = vmatprep.subr.mxu0 0.0
      %5950 = vmatpush1.msra.mxu0 0.0
      %5951 = vmatprep.subr.mxu0 0.0
      %5952 = vmatpush1.msra.mxu0 0.0
      %5953 = vmatprep.subr.mxu0 0.0
      %5954 = vmatpush1.msra.mxu0 0.0
      %5955 = vmatprep.subr.mxu0 0.0
      %5956 = vmatpush1.msra.mxu0 0.0
      %5957 = vmatprep.subr.mxu0 0.0
      %5958 = vmatpush1.msra.mxu0 0.0
      %5959 = vmatprep.subr.mxu0 0.0
      %5960 = vmatpush1.msra.mxu0 0.0
      %5961 = vmatprep.subr.mxu0 0.0
      %5962 = vmatpush1.msra.mxu0 0.0
      %5963 = vmatprep.subr.mxu0 0.0
      %5964 = vmatpush1.msra.mxu0 0.0
      %5965 = vmatprep.subr.mxu0 0.0
      %5966 = vmatpush1.msra.mxu0 0.0
      %5967 = vmatprep.subr.mxu0 0.0
      %5968 = vmatpush1.msra.mxu0 0.0
      %5969 = vmatprep.subr.mxu0 0.0
      %5970 = vmatpush1.msra.mxu0 0.0
      %5971 = vmatprep.subr.mxu0 0.0
      %5972 = vmatpush1.msra.mxu0 0.0
      %5973 = vmatprep.mubr.f32.mxu0 0.0
      %v5974 = vand.u32 %v5115, 4294901760
      %5975 = vmatmul.mubr.f32.gmra.mrb[0].mxu0 %v5974
      %v5976 = vpop.f32.mrb[0].mxu0
      %v5977 = vadd.f32 %v5873, %v5976
      %v5978 = vpop.f32.mrb[0].mxu0
      %v5979 = vadd.f32 %v5875, %v5978
      %5980 = vdwg.mxu0
      %v5983 = vcombine.low %v5977, %v5979
      %v5985 = vunpack.c.l.s4 1966171168
      %v5986 = vunpack.c.0.s8 %v5985
      %v5987 = vlaneseq
      %v5988 = vshrl.u32 %v5987, 7
      %v5989 = vsub.s32 %v5986, %v5988
      %v5990 = vrot.slane %v5983, %v5989
      %v5992 = vunpack.c.l.s4 1966171168
      %v5993 = vunpack.c.0.s8 %v5992
      %v5994 = vlaneseq
      %v5995 = vshrl.u32 %v5994, 7
      %v5996 = vsub.s32 %v5993, %v5995
      %v5997 = vrot.slane %v5990, %v5996
      %v5999 = vlaneseq
      %vm6000 = vcmp.ge.s32.totalorder %v5999, 0
      %vm6001 = vcmp.lt.s32.totalorder %v5999, 256
      %vm6002 = vmand %vm6000, %vm6001
      %6003 = vst.msk [vmem:[%s334] sm:$0x3] %vm6002, %v5997
      %s6004 = smul.u32 2, %s22
      %p6005 = scmp.lt.s32.totalorder %s6004, 7
      %s6006 = scalar_select %p6005, %s6004, 7
      %s6007 = scalar_lea.vmem %s9, %s6006
      // Predicated region
      $region57: #{distance_model_forward.1} parent=55 // pred_check
        %p6008 = pneg %p234
      $region58: #{distance_model_forward.1} parent=55 // pred_check_branch
        %6010 = sbr.rel (%p6008) target = $region60
      $region59: #{distance_model_forward.1} parent=55 // pred_region
        %s6011 = smul.u32 2, %s22
      $region60: #{distance_model_forward.1} parent=55 // pred_fallthru
        _
    $region56: #{distance_model_forward.1} parent=5 // pred_fallthru
      _
    %p6012 = scmp.le.s32.totalorder 2, %s17
    // Predicated region
    $region61: #{distance_model_forward.1} parent=5 // pred_check
      %p6013 = pneg %p6012
    $region62: #{distance_model_forward.1} parent=5 // pred_check_branch
      %6015 = sbr.rel (%p6013) target = $region64
    $region63: #{distance_model_forward.1} parent=5 // pred_region
      %s6016 = ssub.s32 %s17, 2
      // Predicated region
      $region65: #{distance_model_forward.1} parent=63 // pred_check
        %p6017 = pneg %p240
      $region66: #{distance_model_forward.1} parent=63 // pred_check_branch
        %6019 = sbr.rel (%p6017) target = $region68
      $region67: #{distance_model_forward.1} parent=63 // pred_region
        %s6020 = smul.u32 2, %s23
        %p6021 = scmp.lt.s32.totalorder %s6020, 7
        %s6022 = scalar_select %p6021, %s6020, 7
        %s6023 = scalar_lea.vmem %s9, %s6022
      $region68: #{distance_model_forward.1} parent=63 // pred_fallthru
        _
    $region64: #{distance_model_forward.1} parent=5 // pred_fallthru
      _
  $region6: #{distance_model_forward.1} parent=0 // loop_footer
    %s21 = sadd.s32 1, %s17
  $region7: #{distance_model_forward.1} parent=0 // loop_footer_branch
    %16 = sbr.rel target = $region3
  $region8: #{distance_model_forward.1} parent=0 // loop_exit
    _

</llo_original>
